<compile_context>
chip_gen: v6e
topology: v6e:2x2x1
jax: 0.10.0
libtpu: 0.0.40
codegen_flags: <defaults>
</compile_context>

<pallas_src>
import jax
import jax.numpy as jnp
from jax import lax
from jax.experimental import pallas as pl
from jax.experimental.pallas import tpu as pltpu

EPS = 1e-5
K1PAD = 16   # conv1 contraction (9 taps) zero-padded to 16 for the MXU


def _round_up(n, m):
    return ((n + m - 1) // m) * m


def _make_sel1(B, H, W):
    """Block-diagonal 0/1 row-selection matrix for max-pool #1 (batch-stacked)."""
    H2, W2 = H // 2, W // 2
    S1, S2 = H * W, H2 * W2
    i = jnp.arange(B * S2)
    b, q = i // S2, i % S2
    py, px = q // W2, q % W2
    src = b * S1 + 2 * py * W + 2 * px
    return (jnp.arange(B * S1)[None, :] == src[:, None]).astype(jnp.float32)


def _make_sel2(B, H2, W2):
    """Selection matrix for max-pool #2; output rows are TIME-MAJOR (t*B + b)."""
    H4, W4 = H2 // 2, W2 // 2
    S2, L = H2 * W2, H4 * W4
    i = jnp.arange(L * B)
    t, b = i // B, i % B
    py, px = t // W4, t % W4
    src = b * S2 + 2 * py * W2 + 2 * px
    return (jnp.arange(B * S2)[None, :] == src[:, None]).astype(jnp.float32)


def _make_fused_kernel(B, H, W, C1, F, C):
    H2, W2 = H // 2, W // 2
    H4, W4 = H2 // 2, W2 // 2
    S1, S2, L = H * W, H2 * W2, H4 * W4
    BS1, BS2 = B * S1, B * S2

    assert H % 4 == 0 and W % 4 == 0, "pooling assumes H, W divisible by 4"
    assert W2 & (W2 - 1) == 0 and H2 & (H2 - 1) == 0, "mask math assumes pow2 half-res dims"
    lg_w2 = W2.bit_length() - 1

    PAD1 = _round_up(W + 2, 8)       # tail pad so pool-1 shifted reads stay in-bounds
    OFF2 = _round_up(W2 + 2, 8)      # zero rows around p1 for conv2 tap reads
    PAD2 = _round_up(W2 + 2, 8)      # tail pad for pool-2 shifted reads

    taps = [(dy, dx) for dy in range(3) for dx in range(3)]   # matches weight layout

    def kernel(xcol_ref, w1_ref, s1_ref, b1_ref, w2_ref, s2_ref, b2_ref,
               wem_ref, bem_ref, start_ref, transT_ref, end_ref,
               wfc_ref, bfc_ref, sel1_ref, sel2_ref,
               logits_ref, emis_ref, a1buf, p1buf, a2buf, bp_ref):
        f32 = jnp.float32

        # ---- conv1 + folded BN + ReLU: ONE MXU matmul on the wrapper im2col ----
        a1 = jnp.dot(xcol_ref[...], w1_ref[...], preferred_element_type=f32)
        a1 = jnp.maximum(a1 * s1_ref[...] + b1_ref[...], 0.0)            # (B*S1, C1)

        # ---- max-pool #1 (2x2/2): shifted ref reads from a padded scratch ----
        a1buf[pl.ds(0, BS1), :] = a1
        a1buf[pl.ds(BS1, PAD1), :] = jnp.zeros((PAD1, C1), f32)
        mx = jnp.maximum(
            jnp.maximum(a1, a1buf[pl.ds(1, BS1), :]),
            jnp.maximum(a1buf[pl.ds(W, BS1), :], a1buf[pl.ds(W + 1, BS1), :]))
        p1 = jnp.dot(sel1_ref[...], mx, preferred_element_type=f32)      # (B*S2, C1)

        # ---- conv2 + folded BN + ReLU: in-VMEM im2col patch, one K=9*C1 matmul ----
        p1buf[pl.ds(0, OFF2), :] = jnp.zeros((OFF2, C1), f32)
        p1buf[pl.ds(OFF2, BS2), :] = p1
        p1buf[pl.ds(OFF2 + BS2, OFF2), :] = jnp.zeros((OFF2, C1), f32)

        # Boundary masks (hoisted, lane-dense): kill taps that cross the image
        # edge (and, since batches are stacked contiguously, the batch boundary).
        q = lax.broadcasted_iota(jnp.int32, (BS2, C1), 0)
        xq = jnp.bitwise_and(q, W2 - 1)
        yq = jnp.bitwise_and(jnp.right_shift(q, lg_w2), H2 - 1)
        m_l = (xq != 0).astype(f32)
        m_r = (xq != (W2 - 1)).astype(f32)
        m_t = (yq != 0).astype(f32)
        m_b = (yq != (H2 - 1)).astype(f32)
        tap_mask = {(0, 0): m_t * m_l, (0, 1): m_t, (0, 2): m_t * m_r,
                    (1, 0): m_l, (1, 1): None, (1, 2): m_r,
                    (2, 0): m_b * m_l, (2, 1): m_b, (2, 2): m_b * m_r}

        cols = []
        for (dy, dx) in taps:
            s = (dy - 1) * W2 + (dx - 1)
            tp = p1buf[pl.ds(OFF2 + s, BS2), :]
            msk = tap_mask[(dy, dx)]
            if msk is not None:
                tp = tp * msk
            cols.append(tp)
        patch = jnp.concatenate(cols, axis=-1)                           # (B*S2, 9*C1)
        a2 = jnp.dot(patch, w2_ref[...], preferred_element_type=f32)
        a2 = jnp.maximum(a2 * s2_ref[...] + b2_ref[...], 0.0)            # (B*S2, F)

        # ---- max-pool #2 ----
        a2buf[pl.ds(0, BS2), :] = a2
        a2buf[pl.ds(BS2, PAD2), :] = jnp.zeros((PAD2, F), f32)
        mx2 = jnp.maximum(
            jnp.maximum(a2, a2buf[pl.ds(1, BS2), :]),
            jnp.maximum(a2buf[pl.ds(W2, BS2), :], a2buf[pl.ds(W2 + 1, BS2), :]))
        feats = jnp.dot(sel2_ref[...], mx2, preferred_element_type=f32)  # (L*B, F) time-major

        # ---- emission Linear (time-major, single block store) ----
        emis = jnp.dot(feats, wem_ref[...], preferred_element_type=f32) + bem_ref[...]
        emis_ref[...] = emis                                             # (L*B, C)

        # ---- CRF Viterbi decode, batched over B (B on sublanes, C on lanes) ----
        start = start_ref[...]
        transT = transT_ref[...]
        end = end_ref[...]
        lane = lax.broadcasted_iota(jnp.int32, (B, C), 1)
        lane3 = lax.broadcasted_iota(jnp.int32, (B, C, C), 2)

        score = start + emis[0:B, :]                                     # (B, C)
        for t in range(1, L):
            # nxt[b, j, i] = trans[i, j] + score[b, i]  (trans passed pre-transposed)
            nxt = transT[None, :, :] + score[:, None, :]                 # (B, C, C)
            m = jnp.max(nxt, axis=-1)                                    # single cross-lane max
            bp_ref[t] = jnp.min(jnp.where(nxt == m[:, :, None], lane3, C), axis=-1)
            score = m + emis[t * B:(t + 1) * B, :]                       # single static slice
        score = score + end

        # Backtrack + one-hot histogram (== mean of decoded one-hots).
        mk = jnp.max(score, axis=-1, keepdims=True)
        tag = jnp.min(jnp.where(score == mk, lane, C), axis=-1, keepdims=True)   # (B, 1)
        counts = (lane == tag).astype(f32)
        for t in range(L - 1, 0, -1):
            bpt = bp_ref[t]                                              # (B, C) int32
            tag = jnp.sum(jnp.where(lane == tag, bpt, 0), axis=-1, keepdims=True)
            counts = counts + (lane == tag).astype(f32)
        agg = counts * (1.0 / L)                                         # (B, C)

        logits_ref[...] = jnp.dot(agg, wfc_ref[...], preferred_element_type=f32) + bfc_ref[...]

    scratch_shapes = [
        pltpu.VMEM((BS1 + PAD1, C1), jnp.float32),          # padded a1 for pool-1 shifts
        pltpu.VMEM((OFF2 + BS2 + OFF2, C1), jnp.float32),   # padded p1 for conv2 taps
        pltpu.VMEM((BS2 + PAD2, F), jnp.float32),           # padded a2 for pool-2 shifts
        pltpu.VMEM((L, B, C), jnp.int32),                   # Viterbi backpointers
    ]
    return kernel, scratch_shapes, L


def crf_model_forward(x, params):
    # x: (B, 1, H, W) NCHW, matching the PyTorch module
    B, cin, H, W = x.shape
    assert cin == 1
    C1 = params["w1p"].shape[1]
    F = params["w2r"].shape[1]
    C = params["wem"].shape[1]
    H2, W2 = H // 2, W // 2
    S1 = H * W

    # Wrapper-side layout glue only: the tiny conv1 im2col (B*S1, 16) and the
    # constant 0/1 pool-downsample selection matrices.
    xf = x.astype(jnp.float32)
    xp = jnp.pad(xf, ((0, 0), (0, 0), (1, 1), (1, 1)))
    cols = [xp[:, 0, dy:dy + H, dx:dx + W] for dy in range(3) for dx in range(3)]
    xcol = jnp.stack(cols, axis=-1).reshape(B * S1, 9)
    xcol = jnp.pad(xcol, ((0, 0), (0, K1PAD - 9)))

    sel1 = _make_sel1(B, H, W)
    sel2 = _make_sel2(B, H2, W2)

    kernel, scratch_shapes, L = _make_fused_kernel(B, H, W, C1, F, C)

    logits, emis_tm = pl.pallas_call(
        kernel,
        out_shape=(jax.ShapeDtypeStruct((B, C), jnp.float32),
                   jax.ShapeDtypeStruct((L * B, C), jnp.float32)),
        scratch_shapes=scratch_shapes,
    )(xcol, params["w1p"], params["scale1"], params["bias1"],
      params["w2r"], params["scale2"], params["bias2"],
      params["wem"], params["bem"], params["start"], params["transT"],
      params["end"], params["wfc"], params["bfc"], sel1, sel2)

    emissions = emis_tm.reshape(L, B, C).transpose(1, 0, 2)   # time-major -> (B, L, C)
    return logits, emissions


# --------------------------------------------------------------------------
# Deterministic parameter initialization (BatchNorm folded into scale/bias)
# --------------------------------------------------------------------------
def init_params(key, num_classes=4, feature_dim=16):
    ks = jax.random.split(key, 19)
    C1, C, F = 32, num_classes, feature_dim

    def bn_fold(conv_b, gamma, beta, mean, var):
        scale = gamma / jnp.sqrt(var + EPS)
        bias = (conv_b - mean) * scale + beta
        return scale.reshape(1, -1), bias.reshape(1, -1)

    w1 = 0.1 * jax.random.normal(ks[0], (9, C1), jnp.float32)      # conv1 (3*3*1, 32)
    b1 = 0.05 * jax.random.normal(ks[1], (C1,), jnp.float32)
    scale1, bias1 = bn_fold(
        b1,
        1.0 + 0.1 * jax.random.normal(ks[2], (C1,), jnp.float32),
        0.05 * jax.random.normal(ks[3], (C1,), jnp.float32),
        0.05 * jax.random.normal(ks[4], (C1,), jnp.float32),
        0.5 + jax.random.uniform(ks[5], (C1,), jnp.float32))

    w2 = 0.05 * jax.random.normal(ks[6], (9, C1, F), jnp.float32)  # conv2 (3*3, 32, F)
    b2 = 0.05 * jax.random.normal(ks[7], (F,), jnp.float32)
    scale2, bias2 = bn_fold(
        b2,
        1.0 + 0.1 * jax.random.normal(ks[8], (F,), jnp.float32),
        0.05 * jax.random.normal(ks[9], (F,), jnp.float32),
        0.05 * jax.random.normal(ks[10], (F,), jnp.float32),
        0.5 + jax.random.uniform(ks[11], (F,), jnp.float32))

    wem = 0.1 * jax.random.normal(ks[12], (F, C), jnp.float32)     # emission Linear
    bem = 0.05 * jax.random.normal(ks[13], (1, C), jnp.float32)

    start = jax.random.uniform(ks[14], (1, C), jnp.float32, -0.1, 0.1)  # CRF params
    end = jax.random.uniform(ks[15], (1, C), jnp.float32, -0.1, 0.1)
    trans = jax.random.uniform(ks[16], (C, C), jnp.float32, -0.1, 0.1)

    wfc = 0.3 * jax.random.normal(ks[17], (C, C), jnp.float32)     # final classifier
    bfc = 0.05 * jax.random.normal(ks[18], (1, C), jnp.float32)

    return dict(
        w1p=jnp.pad(w1, ((0, K1PAD - 9), (0, 0))),   # conv1 weight, K padded 9 -> 16
        scale1=scale1, bias1=bias1,
        w2r=w2.reshape(9 * C1, F),                   # conv2 weight pre-flattened to K=288
        scale2=scale2, bias2=bias2,
        wem=wem, bem=bem,
        start=start, transT=trans.T, end=end,        # trans pre-transposed for Viterbi
        wfc=wfc, bfc=bfc)


if __name__ == "__main__":
    B, H, W = 2, 16, 16              # input_size=(16,16) -> num_parts = 16
    num_classes, feature_dim = 4, 16

    key = jax.random.PRNGKey(0)
    pkey, xkey = jax.random.split(key)
    params = init_params(pkey, num_classes=num_classes, feature_dim=feature_dim)
    x = jax.random.normal(xkey, (B, 1, H, W), jnp.float32)

    fwd = jax.jit(crf_model_forward)
    final_logits, emissions = fwd(x, params)
    jax.block_until_ready((final_logits, emissions))

    assert final_logits.shape == (B, num_classes)
    assert emissions.shape == (B, (H // 4) * (W // 4), num_classes)
    print("KERNEL_OK")
</pallas_src>

<mosaic_0001>
module attributes {stable_mosaic.version = 11 : i64} {
  func.func @kernel(%arg0: memref<512x16xf32, #tpu.memory_space<vmem>>, %arg1: memref<16x32xf32, #tpu.memory_space<vmem>>, %arg2: memref<1x32xf32, #tpu.memory_space<vmem>>, %arg3: memref<1x32xf32, #tpu.memory_space<vmem>>, %arg4: memref<288x16xf32, #tpu.memory_space<vmem>>, %arg5: memref<1x16xf32, #tpu.memory_space<vmem>>, %arg6: memref<1x16xf32, #tpu.memory_space<vmem>>, %arg7: memref<16x4xf32, #tpu.memory_space<vmem>>, %arg8: memref<1x4xf32, #tpu.memory_space<vmem>>, %arg9: memref<1x4xf32, #tpu.memory_space<vmem>>, %arg10: memref<4x4xf32, #tpu.memory_space<vmem>>, %arg11: memref<1x4xf32, #tpu.memory_space<vmem>>, %arg12: memref<4x4xf32, #tpu.memory_space<vmem>>, %arg13: memref<1x4xf32, #tpu.memory_space<vmem>>, %arg14: memref<128x512xf32, #tpu.memory_space<vmem>>, %arg15: memref<32x128xf32, #tpu.memory_space<vmem>>, %arg16: memref<2x4xf32, #tpu.memory_space<vmem>>, %arg17: memref<32x4xf32, #tpu.memory_space<vmem>>, %arg18: memref<536x32xf32, #tpu.memory_space<vmem>>, %arg19: memref<160x32xf32, #tpu.memory_space<vmem>>, %arg20: memref<144x16xf32, #tpu.memory_space<vmem>>, %arg21: memref<16x2x4xi32, #tpu.memory_space<vmem>>) attributes {dimension_semantics = [], scalar_prefetch = 0 : i64, scratch_operands = 4 : i64, tpu.core_type = #tpu.core_type<tc>} {
    %c0 = arith.constant 0 : index
    %c0_0 = arith.constant 0 : index
    %0 = vector.load %arg0[%c0, %c0_0] : memref<512x16xf32, #tpu.memory_space<vmem>>, vector<512x16xf32>
    %c0_1 = arith.constant 0 : index
    %c0_2 = arith.constant 0 : index
    %1 = vector.load %arg1[%c0_1, %c0_2] : memref<16x32xf32, #tpu.memory_space<vmem>>, vector<16x32xf32>
    %cst = arith.constant dense<0.000000e+00> : vector<512x32xf32>
    %2 = tpu.matmul %0, %1, %cst {dimension_numbers = #tpu.dot_dimension_numbers<[1], [0], [0], [1], [0, 0, 1, 1], [], []>} : vector<512x16xf32>, vector<16x32xf32>, vector<512x32xf32> -> vector<512x32xf32>
    %c0_3 = arith.constant 0 : index
    %c0_4 = arith.constant 0 : index
    %3 = vector.load %arg2[%c0_3, %c0_4] : memref<1x32xf32, #tpu.memory_space<vmem>>, vector<1x32xf32>
    %4 = vector.broadcast %3 : vector<1x32xf32> to vector<512x32xf32>
    %5 = arith.mulf %2, %4 : vector<512x32xf32>
    %c0_5 = arith.constant 0 : index
    %c0_6 = arith.constant 0 : index
    %6 = vector.load %arg3[%c0_5, %c0_6] : memref<1x32xf32, #tpu.memory_space<vmem>>, vector<1x32xf32>
    %7 = vector.broadcast %6 : vector<1x32xf32> to vector<512x32xf32>
    %8 = arith.addf %5, %7 : vector<512x32xf32>
    %cst_7 = arith.constant 0.000000e+00 : f32
    %9 = vector.broadcast %cst_7 : f32 to vector<512x32xf32>
    %10 = arith.maximumf %8, %9 : vector<512x32xf32>
    %c0_8 = arith.constant 0 : index
    %c0_9 = arith.constant 0 : index
    %11 = vector.load %arg18[%c0_8, %c0_9] : memref<536x32xf32, #tpu.memory_space<vmem>>, vector<512x32xf32>
    tpu.vector_store %arg18[%c0_8, %c0_9], %10 {strides = array<i32>} : memref<536x32xf32, #tpu.memory_space<vmem>>, vector<512x32xf32>,
    %cst_10 = arith.constant 0.000000e+00 : f32
    %12 = vector.broadcast %cst_10 : f32 to vector<24x32xf32>
    %c512 = arith.constant 512 : index
    %c0_11 = arith.constant 0 : index
    %13 = vector.load %arg18[%c512, %c0_11] : memref<536x32xf32, #tpu.memory_space<vmem>>, vector<24x32xf32>
    tpu.vector_store %arg18[%c512, %c0_11], %12 {strides = array<i32>} : memref<536x32xf32, #tpu.memory_space<vmem>>, vector<24x32xf32>,
    %c1 = arith.constant 1 : index
    %c0_12 = arith.constant 0 : index
    %14 = vector.load %arg18[%c1, %c0_12] : memref<536x32xf32, #tpu.memory_space<vmem>>, vector<512x32xf32>
    %15 = arith.maximumf %10, %14 : vector<512x32xf32>
    %c16 = arith.constant 16 : index
    %c0_13 = arith.constant 0 : index
    %16 = vector.load %arg18[%c16, %c0_13] : memref<536x32xf32, #tpu.memory_space<vmem>>, vector<512x32xf32>
    %c17 = arith.constant 17 : index
    %c0_14 = arith.constant 0 : index
    %17 = vector.load %arg18[%c17, %c0_14] : memref<536x32xf32, #tpu.memory_space<vmem>>, vector<512x32xf32>
    %18 = arith.maximumf %16, %17 : vector<512x32xf32>
    %19 = arith.maximumf %15, %18 : vector<512x32xf32>
    %c0_15 = arith.constant 0 : index
    %c0_16 = arith.constant 0 : index
    %20 = vector.load %arg14[%c0_15, %c0_16] : memref<128x512xf32, #tpu.memory_space<vmem>>, vector<128x512xf32>
    %cst_17 = arith.constant dense<0.000000e+00> : vector<128x32xf32>
    %21 = tpu.matmul %20, %19, %cst_17 {dimension_numbers = #tpu.dot_dimension_numbers<[1], [0], [0], [1], [0, 0, 1, 1], [], []>} : vector<128x512xf32>, vector<512x32xf32>, vector<128x32xf32> -> vector<128x32xf32>
    %cst_18 = arith.constant 0.000000e+00 : f32
    %22 = vector.broadcast %cst_18 : f32 to vector<16x32xf32>
    %c0_19 = arith.constant 0 : index
    %c0_20 = arith.constant 0 : index
    %23 = vector.load %arg19[%c0_19, %c0_20] : memref<160x32xf32, #tpu.memory_space<vmem>>, vector<16x32xf32>
    tpu.vector_store %arg19[%c0_19, %c0_20], %22 {strides = array<i32>} : memref<160x32xf32, #tpu.memory_space<vmem>>, vector<16x32xf32>,
    %c16_21 = arith.constant 16 : index
    %c0_22 = arith.constant 0 : index
    %24 = vector.load %arg19[%c16_21, %c0_22] : memref<160x32xf32, #tpu.memory_space<vmem>>, vector<128x32xf32>
    tpu.vector_store %arg19[%c16_21, %c0_22], %21 {strides = array<i32>} : memref<160x32xf32, #tpu.memory_space<vmem>>, vector<128x32xf32>,
    %cst_23 = arith.constant 0.000000e+00 : f32
    %25 = vector.broadcast %cst_23 : f32 to vector<16x32xf32>
    %c144 = arith.constant 144 : index
    %c0_24 = arith.constant 0 : index
    %26 = vector.load %arg19[%c144, %c0_24] : memref<160x32xf32, #tpu.memory_space<vmem>>, vector<16x32xf32>
    tpu.vector_store %arg19[%c144, %c0_24], %25 {strides = array<i32>} : memref<160x32xf32, #tpu.memory_space<vmem>>, vector<16x32xf32>,
    %27 = tpu.iota {dimensions = array<i32: 0>} : vector<128x32xi32>
    %c7_i32 = arith.constant 7 : i32
    %28 = vector.broadcast %c7_i32 : i32 to vector<128x32xi32>
    %29 = arith.andi %27, %28 : vector<128x32xi32>
    %c3_i32 = arith.constant 3 : i32
    %30 = vector.broadcast %c3_i32 : i32 to vector<128x32xi32>
    %31 = arith.shrsi %27, %30 : vector<128x32xi32>
    %c7_i32_25 = arith.constant 7 : i32
    %32 = vector.broadcast %c7_i32_25 : i32 to vector<128x32xi32>
    %33 = arith.andi %31, %32 : vector<128x32xi32>
    %c0_i32 = arith.constant 0 : i32
    %34 = vector.broadcast %c0_i32 : i32 to vector<128x32xi32>
    %35 = arith.cmpi ne, %29, %34 : vector<128x32xi32>
    %36 = arith.extui %35 : vector<128x32xi1> to vector<128x32xi32>
    %37 = arith.sitofp %36 : vector<128x32xi32> to vector<128x32xf32>
    %c7_i32_26 = arith.constant 7 : i32
    %38 = vector.broadcast %c7_i32_26 : i32 to vector<128x32xi32>
    %39 = arith.cmpi ne, %29, %38 : vector<128x32xi32>
    %40 = arith.extui %39 : vector<128x32xi1> to vector<128x32xi32>
    %41 = arith.sitofp %40 : vector<128x32xi32> to vector<128x32xf32>
    %c0_i32_27 = arith.constant 0 : i32
    %42 = vector.broadcast %c0_i32_27 : i32 to vector<128x32xi32>
    %43 = arith.cmpi ne, %33, %42 : vector<128x32xi32>
    %44 = arith.extui %43 : vector<128x32xi1> to vector<128x32xi32>
    %45 = arith.sitofp %44 : vector<128x32xi32> to vector<128x32xf32>
    %c7_i32_28 = arith.constant 7 : i32
    %46 = vector.broadcast %c7_i32_28 : i32 to vector<128x32xi32>
    %47 = arith.cmpi ne, %33, %46 : vector<128x32xi32>
    %48 = arith.extui %47 : vector<128x32xi1> to vector<128x32xi32>
    %49 = arith.sitofp %48 : vector<128x32xi32> to vector<128x32xf32>
    %50 = arith.mulf %45, %37 : vector<128x32xf32>
    %51 = arith.mulf %45, %41 : vector<128x32xf32>
    %52 = arith.mulf %49, %37 : vector<128x32xf32>
    %53 = arith.mulf %49, %41 : vector<128x32xf32>
    %c7 = arith.constant 7 : index
    %c0_29 = arith.constant 0 : index
    %54 = vector.load %arg19[%c7, %c0_29] : memref<160x32xf32, #tpu.memory_space<vmem>>, vector<128x32xf32>
    %55 = arith.mulf %54, %50 : vector<128x32xf32>
    %c8 = arith.constant 8 : index
    %c0_30 = arith.constant 0 : index
    %56 = vector.load %arg19[%c8, %c0_30] : memref<160x32xf32, #tpu.memory_space<vmem>>, vector<128x32xf32>
    %57 = arith.mulf %56, %45 : vector<128x32xf32>
    %c9 = arith.constant 9 : index
    %c0_31 = arith.constant 0 : index
    %58 = vector.load %arg19[%c9, %c0_31] : memref<160x32xf32, #tpu.memory_space<vmem>>, vector<128x32xf32>
    %59 = arith.mulf %58, %51 : vector<128x32xf32>
    %c15 = arith.constant 15 : index
    %c0_32 = arith.constant 0 : index
    %60 = vector.load %arg19[%c15, %c0_32] : memref<160x32xf32, #tpu.memory_space<vmem>>, vector<128x32xf32>
    %61 = arith.mulf %60, %37 : vector<128x32xf32>
    %c16_33 = arith.constant 16 : index
    %c0_34 = arith.constant 0 : index
    %62 = vector.load %arg19[%c16_33, %c0_34] : memref<160x32xf32, #tpu.memory_space<vmem>>, vector<128x32xf32>
    %c17_35 = arith.constant 17 : index
    %c0_36 = arith.constant 0 : index
    %63 = vector.load %arg19[%c17_35, %c0_36] : memref<160x32xf32, #tpu.memory_space<vmem>>, vector<128x32xf32>
    %64 = arith.mulf %63, %41 : vector<128x32xf32>
    %c23 = arith.constant 23 : index
    %c0_37 = arith.constant 0 : index
    %65 = vector.load %arg19[%c23, %c0_37] : memref<160x32xf32, #tpu.memory_space<vmem>>, vector<128x32xf32>
    %66 = arith.mulf %65, %52 : vector<128x32xf32>
    %c24 = arith.constant 24 : index
    %c0_38 = arith.constant 0 : index
    %67 = vector.load %arg19[%c24, %c0_38] : memref<160x32xf32, #tpu.memory_space<vmem>>, vector<128x32xf32>
    %68 = arith.mulf %67, %49 : vector<128x32xf32>
    %c25 = arith.constant 25 : index
    %c0_39 = arith.constant 0 : index
    %69 = vector.load %arg19[%c25, %c0_39] : memref<160x32xf32, #tpu.memory_space<vmem>>, vector<128x32xf32>
    %70 = arith.mulf %69, %53 : vector<128x32xf32>
    %71 = tpu.concatenate %55, %57, %59, %61, %62, %64, %66, %68, %70 in 1 : vector<128x32xf32>, vector<128x32xf32>, vector<128x32xf32>, vector<128x32xf32>, vector<128x32xf32>, vector<128x32xf32>, vector<128x32xf32>, vector<128x32xf32>, vector<128x32xf32> -> vector<128x288xf32>
    %c0_40 = arith.constant 0 : index
    %c0_41 = arith.constant 0 : index
    %72 = vector.load %arg4[%c0_40, %c0_41] : memref<288x16xf32, #tpu.memory_space<vmem>>, vector<288x16xf32>
    %cst_42 = arith.constant dense<0.000000e+00> : vector<128x16xf32>
    %73 = tpu.matmul %71, %72, %cst_42 {dimension_numbers = #tpu.dot_dimension_numbers<[1], [0], [0], [1], [0, 0, 1, 1], [], []>} : vector<128x288xf32>, vector<288x16xf32>, vector<128x16xf32> -> vector<128x16xf32>
    %c0_43 = arith.constant 0 : index
    %c0_44 = arith.constant 0 : index
    %74 = vector.load %arg5[%c0_43, %c0_44] : memref<1x16xf32, #tpu.memory_space<vmem>>, vector<1x16xf32>
    %75 = vector.broadcast %74 : vector<1x16xf32> to vector<128x16xf32>
    %76 = arith.mulf %73, %75 : vector<128x16xf32>
    %c0_45 = arith.constant 0 : index
    %c0_46 = arith.constant 0 : index
    %77 = vector.load %arg6[%c0_45, %c0_46] : memref<1x16xf32, #tpu.memory_space<vmem>>, vector<1x16xf32>
    %78 = vector.broadcast %77 : vector<1x16xf32> to vector<128x16xf32>
    %79 = arith.addf %76, %78 : vector<128x16xf32>
    %cst_47 = arith.constant 0.000000e+00 : f32
    %80 = vector.broadcast %cst_47 : f32 to vector<128x16xf32>
    %81 = arith.maximumf %79, %80 : vector<128x16xf32>
    %c0_48 = arith.constant 0 : index
    %c0_49 = arith.constant 0 : index
    %82 = vector.load %arg20[%c0_48, %c0_49] : memref<144x16xf32, #tpu.memory_space<vmem>>, vector<128x16xf32>
    tpu.vector_store %arg20[%c0_48, %c0_49], %81 {strides = array<i32>} : memref<144x16xf32, #tpu.memory_space<vmem>>, vector<128x16xf32>,
    %cst_50 = arith.constant 0.000000e+00 : f32
    %83 = vector.broadcast %cst_50 : f32 to vector<16x16xf32>
    %c128 = arith.constant 128 : index
    %c0_51 = arith.constant 0 : index
    %84 = vector.load %arg20[%c128, %c0_51] : memref<144x16xf32, #tpu.memory_space<vmem>>, vector<16x16xf32>
    tpu.vector_store %arg20[%c128, %c0_51], %83 {strides = array<i32>} : memref<144x16xf32, #tpu.memory_space<vmem>>, vector<16x16xf32>,
    %c1_52 = arith.constant 1 : index
    %c0_53 = arith.constant 0 : index
    %85 = vector.load %arg20[%c1_52, %c0_53] : memref<144x16xf32, #tpu.memory_space<vmem>>, vector<128x16xf32>
    %86 = arith.maximumf %81, %85 : vector<128x16xf32>
    %c8_54 = arith.constant 8 : index
    %c0_55 = arith.constant 0 : index
    %87 = vector.load %arg20[%c8_54, %c0_55] : memref<144x16xf32, #tpu.memory_space<vmem>>, vector<128x16xf32>
    %c9_56 = arith.constant 9 : index
    %c0_57 = arith.constant 0 : index
    %88 = vector.load %arg20[%c9_56, %c0_57] : memref<144x16xf32, #tpu.memory_space<vmem>>, vector<128x16xf32>
    %89 = arith.maximumf %87, %88 : vector<128x16xf32>
    %90 = arith.maximumf %86, %89 : vector<128x16xf32>
    %c0_58 = arith.constant 0 : index
    %c0_59 = arith.constant 0 : index
    %91 = vector.load %arg15[%c0_58, %c0_59] : memref<32x128xf32, #tpu.memory_space<vmem>>, vector<32x128xf32>
    %cst_60 = arith.constant dense<0.000000e+00> : vector<32x16xf32>
    %92 = tpu.matmul %91, %90, %cst_60 {dimension_numbers = #tpu.dot_dimension_numbers<[1], [0], [0], [1], [0, 0, 1, 1], [], []>} : vector<32x128xf32>, vector<128x16xf32>, vector<32x16xf32> -> vector<32x16xf32>
    %c0_61 = arith.constant 0 : index
    %c0_62 = arith.constant 0 : index
    %93 = vector.load %arg7[%c0_61, %c0_62] : memref<16x4xf32, #tpu.memory_space<vmem>>, vector<16x4xf32>
    %cst_63 = arith.constant dense<0.000000e+00> : vector<32x4xf32>
    %94 = tpu.matmul %92, %93, %cst_63 {dimension_numbers = #tpu.dot_dimension_numbers<[1], [0], [0], [1], [0, 0, 1, 1], [], []>} : vector<32x16xf32>, vector<16x4xf32>, vector<32x4xf32> -> vector<32x4xf32>
    %c0_64 = arith.constant 0 : index
    %c0_65 = arith.constant 0 : index
    %95 = vector.load %arg8[%c0_64, %c0_65] : memref<1x4xf32, #tpu.memory_space<vmem>>, vector<1x4xf32>
    %96 = vector.broadcast %95 : vector<1x4xf32> to vector<32x4xf32>
    %97 = arith.addf %94, %96 : vector<32x4xf32>
    %c0_66 = arith.constant 0 : index
    %c0_67 = arith.constant 0 : index
    %98 = vector.load %arg17[%c0_66, %c0_67] : memref<32x4xf32, #tpu.memory_space<vmem>>, vector<32x4xf32>
    tpu.vector_store %arg17[%c0_66, %c0_67], %97 {strides = array<i32>} : memref<32x4xf32, #tpu.memory_space<vmem>>, vector<32x4xf32>,
    %c0_68 = arith.constant 0 : index
    %c0_69 = arith.constant 0 : index
    %99 = vector.load %arg9[%c0_68, %c0_69] : memref<1x4xf32, #tpu.memory_space<vmem>>, vector<1x4xf32>
    %c0_70 = arith.constant 0 : index
    %c0_71 = arith.constant 0 : index
    %100 = vector.load %arg10[%c0_70, %c0_71] : memref<4x4xf32, #tpu.memory_space<vmem>>, vector<4x4xf32>
    %c0_72 = arith.constant 0 : index
    %c0_73 = arith.constant 0 : index
    %101 = vector.load %arg11[%c0_72, %c0_73] : memref<1x4xf32, #tpu.memory_space<vmem>>, vector<1x4xf32>
    %102 = tpu.iota {dimensions = array<i32: 1>} : vector<2x4xi32>
    %103 = tpu.iota {dimensions = array<i32: 2>} : vector<2x4x4xi32>
    %104 = vector.extract_strided_slice %97 {offsets = [0, 0], sizes = [2, 4], strides = [1, 1]} : vector<32x4xf32> to vector<2x4xf32>
    %105 = vector.broadcast %99 : vector<1x4xf32> to vector<2x4xf32>
    %106 = arith.addf %105, %104 : vector<2x4xf32>
    %107 = vector.shape_cast %100 : vector<4x4xf32> to vector<1x4x4xf32>
    %108 = vector.shape_cast %106 : vector<2x4xf32> to vector<2x1x4xf32>
    %109 = vector.broadcast %107 : vector<1x4x4xf32> to vector<2x4x4xf32>
    %110 = vector.broadcast %108 : vector<2x1x4xf32> to vector<2x4x4xf32>
    %111 = arith.addf %109, %110 : vector<2x4x4xf32>
    %cst_74 = arith.constant dense<0xFF800000> : vector<2x4xf32>
    %112 = vector.multi_reduction <maximumf>, %111, %cst_74 [2] : vector<2x4x4xf32> to vector<2x4xf32>
    %113 = vector.shape_cast %112 : vector<2x4xf32> to vector<2x4x1xf32>
    %114 = vector.broadcast %113 : vector<2x4x1xf32> to vector<2x4x4xf32>
    %115 = arith.cmpf oeq, %111, %114 : vector<2x4x4xf32>
    %c4_i32 = arith.constant 4 : i32
    %116 = vector.broadcast %c4_i32 : i32 to vector<2x4x4xi32>
    %117 = arith.select %115, %103, %116 : vector<2x4x4xi1>, vector<2x4x4xi32>
    %cst_75 = arith.constant dense<2147483647> : vector<2x4xi32>
    %118 = vector.multi_reduction <minsi>, %117, %cst_75 [2] : vector<2x4x4xi32> to vector<2x4xi32>
    %c1_76 = arith.constant 1 : index
    %c0_77 = arith.constant 0 : index
    %c0_78 = arith.constant 0 : index
    %119 = vector.load %arg21[%c1_76, %c0_77, %c0_78] : memref<16x2x4xi32, #tpu.memory_space<vmem>>, vector<1x2x4xi32>
    %120 = vector.shape_cast %119 : vector<1x2x4xi32> to vector<2x4xi32>
    %121 = vector.shape_cast %118 : vector<2x4xi32> to vector<1x2x4xi32>
    tpu.vector_store %arg21[%c1_76, %c0_77, %c0_78], %121 {strides = array<i32>} : memref<16x2x4xi32, #tpu.memory_space<vmem>>, vector<1x2x4xi32>,
    %122 = vector.extract_strided_slice %97 {offsets = [2, 0], sizes = [2, 4], strides = [1, 1]} : vector<32x4xf32> to vector<2x4xf32>
    %123 = arith.addf %112, %122 : vector<2x4xf32>
    %124 = vector.shape_cast %100 : vector<4x4xf32> to vector<1x4x4xf32>
    %125 = vector.shape_cast %123 : vector<2x4xf32> to vector<2x1x4xf32>
    %126 = vector.broadcast %124 : vector<1x4x4xf32> to vector<2x4x4xf32>
    %127 = vector.broadcast %125 : vector<2x1x4xf32> to vector<2x4x4xf32>
    %128 = arith.addf %126, %127 : vector<2x4x4xf32>
    %cst_79 = arith.constant dense<0xFF800000> : vector<2x4xf32>
    %129 = vector.multi_reduction <maximumf>, %128, %cst_79 [2] : vector<2x4x4xf32> to vector<2x4xf32>
    %130 = vector.shape_cast %129 : vector<2x4xf32> to vector<2x4x1xf32>
    %131 = vector.broadcast %130 : vector<2x4x1xf32> to vector<2x4x4xf32>
    %132 = arith.cmpf oeq, %128, %131 : vector<2x4x4xf32>
    %c4_i32_80 = arith.constant 4 : i32
    %133 = vector.broadcast %c4_i32_80 : i32 to vector<2x4x4xi32>
    %134 = arith.select %132, %103, %133 : vector<2x4x4xi1>, vector<2x4x4xi32>
    %cst_81 = arith.constant dense<2147483647> : vector<2x4xi32>
    %135 = vector.multi_reduction <minsi>, %134, %cst_81 [2] : vector<2x4x4xi32> to vector<2x4xi32>
    %c2 = arith.constant 2 : index
    %c0_82 = arith.constant 0 : index
    %c0_83 = arith.constant 0 : index
    %136 = vector.load %arg21[%c2, %c0_82, %c0_83] : memref<16x2x4xi32, #tpu.memory_space<vmem>>, vector<1x2x4xi32>
    %137 = vector.shape_cast %136 : vector<1x2x4xi32> to vector<2x4xi32>
    %138 = vector.shape_cast %135 : vector<2x4xi32> to vector<1x2x4xi32>
    tpu.vector_store %arg21[%c2, %c0_82, %c0_83], %138 {strides = array<i32>} : memref<16x2x4xi32, #tpu.memory_space<vmem>>, vector<1x2x4xi32>,
    %139 = vector.extract_strided_slice %97 {offsets = [4, 0], sizes = [2, 4], strides = [1, 1]} : vector<32x4xf32> to vector<2x4xf32>
    %140 = arith.addf %129, %139 : vector<2x4xf32>
    %141 = vector.shape_cast %100 : vector<4x4xf32> to vector<1x4x4xf32>
    %142 = vector.shape_cast %140 : vector<2x4xf32> to vector<2x1x4xf32>
    %143 = vector.broadcast %141 : vector<1x4x4xf32> to vector<2x4x4xf32>
    %144 = vector.broadcast %142 : vector<2x1x4xf32> to vector<2x4x4xf32>
    %145 = arith.addf %143, %144 : vector<2x4x4xf32>
    %cst_84 = arith.constant dense<0xFF800000> : vector<2x4xf32>
    %146 = vector.multi_reduction <maximumf>, %145, %cst_84 [2] : vector<2x4x4xf32> to vector<2x4xf32>
    %147 = vector.shape_cast %146 : vector<2x4xf32> to vector<2x4x1xf32>
    %148 = vector.broadcast %147 : vector<2x4x1xf32> to vector<2x4x4xf32>
    %149 = arith.cmpf oeq, %145, %148 : vector<2x4x4xf32>
    %c4_i32_85 = arith.constant 4 : i32
    %150 = vector.broadcast %c4_i32_85 : i32 to vector<2x4x4xi32>
    %151 = arith.select %149, %103, %150 : vector<2x4x4xi1>, vector<2x4x4xi32>
    %cst_86 = arith.constant dense<2147483647> : vector<2x4xi32>
    %152 = vector.multi_reduction <minsi>, %151, %cst_86 [2] : vector<2x4x4xi32> to vector<2x4xi32>
    %c3 = arith.constant 3 : index
    %c0_87 = arith.constant 0 : index
    %c0_88 = arith.constant 0 : index
    %153 = vector.load %arg21[%c3, %c0_87, %c0_88] : memref<16x2x4xi32, #tpu.memory_space<vmem>>, vector<1x2x4xi32>
    %154 = vector.shape_cast %153 : vector<1x2x4xi32> to vector<2x4xi32>
    %155 = vector.shape_cast %152 : vector<2x4xi32> to vector<1x2x4xi32>
    tpu.vector_store %arg21[%c3, %c0_87, %c0_88], %155 {strides = array<i32>} : memref<16x2x4xi32, #tpu.memory_space<vmem>>, vector<1x2x4xi32>,
    %156 = vector.extract_strided_slice %97 {offsets = [6, 0], sizes = [2, 4], strides = [1, 1]} : vector<32x4xf32> to vector<2x4xf32>
    %157 = arith.addf %146, %156 : vector<2x4xf32>
    %158 = vector.shape_cast %100 : vector<4x4xf32> to vector<1x4x4xf32>
    %159 = vector.shape_cast %157 : vector<2x4xf32> to vector<2x1x4xf32>
    %160 = vector.broadcast %158 : vector<1x4x4xf32> to vector<2x4x4xf32>
    %161 = vector.broadcast %159 : vector<2x1x4xf32> to vector<2x4x4xf32>
    %162 = arith.addf %160, %161 : vector<2x4x4xf32>
    %cst_89 = arith.constant dense<0xFF800000> : vector<2x4xf32>
    %163 = vector.multi_reduction <maximumf>, %162, %cst_89 [2] : vector<2x4x4xf32> to vector<2x4xf32>
    %164 = vector.shape_cast %163 : vector<2x4xf32> to vector<2x4x1xf32>
    %165 = vector.broadcast %164 : vector<2x4x1xf32> to vector<2x4x4xf32>
    %166 = arith.cmpf oeq, %162, %165 : vector<2x4x4xf32>
    %c4_i32_90 = arith.constant 4 : i32
    %167 = vector.broadcast %c4_i32_90 : i32 to vector<2x4x4xi32>
    %168 = arith.select %166, %103, %167 : vector<2x4x4xi1>, vector<2x4x4xi32>
    %cst_91 = arith.constant dense<2147483647> : vector<2x4xi32>
    %169 = vector.multi_reduction <minsi>, %168, %cst_91 [2] : vector<2x4x4xi32> to vector<2x4xi32>
    %c4 = arith.constant 4 : index
    %c0_92 = arith.constant 0 : index
    %c0_93 = arith.constant 0 : index
    %170 = vector.load %arg21[%c4, %c0_92, %c0_93] : memref<16x2x4xi32, #tpu.memory_space<vmem>>, vector<1x2x4xi32>
    %171 = vector.shape_cast %170 : vector<1x2x4xi32> to vector<2x4xi32>
    %172 = vector.shape_cast %169 : vector<2x4xi32> to vector<1x2x4xi32>
    tpu.vector_store %arg21[%c4, %c0_92, %c0_93], %172 {strides = array<i32>} : memref<16x2x4xi32, #tpu.memory_space<vmem>>, vector<1x2x4xi32>,
    %173 = vector.extract_strided_slice %97 {offsets = [8, 0], sizes = [2, 4], strides = [1, 1]} : vector<32x4xf32> to vector<2x4xf32>
    %174 = arith.addf %163, %173 : vector<2x4xf32>
    %175 = vector.shape_cast %100 : vector<4x4xf32> to vector<1x4x4xf32>
    %176 = vector.shape_cast %174 : vector<2x4xf32> to vector<2x1x4xf32>
    %177 = vector.broadcast %175 : vector<1x4x4xf32> to vector<2x4x4xf32>
    %178 = vector.broadcast %176 : vector<2x1x4xf32> to vector<2x4x4xf32>
    %179 = arith.addf %177, %178 : vector<2x4x4xf32>
    %cst_94 = arith.constant dense<0xFF800000> : vector<2x4xf32>
    %180 = vector.multi_reduction <maximumf>, %179, %cst_94 [2] : vector<2x4x4xf32> to vector<2x4xf32>
    %181 = vector.shape_cast %180 : vector<2x4xf32> to vector<2x4x1xf32>
    %182 = vector.broadcast %181 : vector<2x4x1xf32> to vector<2x4x4xf32>
    %183 = arith.cmpf oeq, %179, %182 : vector<2x4x4xf32>
    %c4_i32_95 = arith.constant 4 : i32
    %184 = vector.broadcast %c4_i32_95 : i32 to vector<2x4x4xi32>
    %185 = arith.select %183, %103, %184 : vector<2x4x4xi1>, vector<2x4x4xi32>
    %cst_96 = arith.constant dense<2147483647> : vector<2x4xi32>
    %186 = vector.multi_reduction <minsi>, %185, %cst_96 [2] : vector<2x4x4xi32> to vector<2x4xi32>
    %c5 = arith.constant 5 : index
    %c0_97 = arith.constant 0 : index
    %c0_98 = arith.constant 0 : index
    %187 = vector.load %arg21[%c5, %c0_97, %c0_98] : memref<16x2x4xi32, #tpu.memory_space<vmem>>, vector<1x2x4xi32>
    %188 = vector.shape_cast %187 : vector<1x2x4xi32> to vector<2x4xi32>
    %189 = vector.shape_cast %186 : vector<2x4xi32> to vector<1x2x4xi32>
    tpu.vector_store %arg21[%c5, %c0_97, %c0_98], %189 {strides = array<i32>} : memref<16x2x4xi32, #tpu.memory_space<vmem>>, vector<1x2x4xi32>,
    %190 = vector.extract_strided_slice %97 {offsets = [10, 0], sizes = [2, 4], strides = [1, 1]} : vector<32x4xf32> to vector<2x4xf32>
    %191 = arith.addf %180, %190 : vector<2x4xf32>
    %192 = vector.shape_cast %100 : vector<4x4xf32> to vector<1x4x4xf32>
    %193 = vector.shape_cast %191 : vector<2x4xf32> to vector<2x1x4xf32>
    %194 = vector.broadcast %192 : vector<1x4x4xf32> to vector<2x4x4xf32>
    %195 = vector.broadcast %193 : vector<2x1x4xf32> to vector<2x4x4xf32>
    %196 = arith.addf %194, %195 : vector<2x4x4xf32>
    %cst_99 = arith.constant dense<0xFF800000> : vector<2x4xf32>
    %197 = vector.multi_reduction <maximumf>, %196, %cst_99 [2] : vector<2x4x4xf32> to vector<2x4xf32>
    %198 = vector.shape_cast %197 : vector<2x4xf32> to vector<2x4x1xf32>
    %199 = vector.broadcast %198 : vector<2x4x1xf32> to vector<2x4x4xf32>
    %200 = arith.cmpf oeq, %196, %199 : vector<2x4x4xf32>
    %c4_i32_100 = arith.constant 4 : i32
    %201 = vector.broadcast %c4_i32_100 : i32 to vector<2x4x4xi32>
    %202 = arith.select %200, %103, %201 : vector<2x4x4xi1>, vector<2x4x4xi32>
    %cst_101 = arith.constant dense<2147483647> : vector<2x4xi32>
    %203 = vector.multi_reduction <minsi>, %202, %cst_101 [2] : vector<2x4x4xi32> to vector<2x4xi32>
    %c6 = arith.constant 6 : index
    %c0_102 = arith.constant 0 : index
    %c0_103 = arith.constant 0 : index
    %204 = vector.load %arg21[%c6, %c0_102, %c0_103] : memref<16x2x4xi32, #tpu.memory_space<vmem>>, vector<1x2x4xi32>
    %205 = vector.shape_cast %204 : vector<1x2x4xi32> to vector<2x4xi32>
    %206 = vector.shape_cast %203 : vector<2x4xi32> to vector<1x2x4xi32>
    tpu.vector_store %arg21[%c6, %c0_102, %c0_103], %206 {strides = array<i32>} : memref<16x2x4xi32, #tpu.memory_space<vmem>>, vector<1x2x4xi32>,
    %207 = vector.extract_strided_slice %97 {offsets = [12, 0], sizes = [2, 4], strides = [1, 1]} : vector<32x4xf32> to vector<2x4xf32>
    %208 = arith.addf %197, %207 : vector<2x4xf32>
    %209 = vector.shape_cast %100 : vector<4x4xf32> to vector<1x4x4xf32>
    %210 = vector.shape_cast %208 : vector<2x4xf32> to vector<2x1x4xf32>
    %211 = vector.broadcast %209 : vector<1x4x4xf32> to vector<2x4x4xf32>
    %212 = vector.broadcast %210 : vector<2x1x4xf32> to vector<2x4x4xf32>
    %213 = arith.addf %211, %212 : vector<2x4x4xf32>
    %cst_104 = arith.constant dense<0xFF800000> : vector<2x4xf32>
    %214 = vector.multi_reduction <maximumf>, %213, %cst_104 [2] : vector<2x4x4xf32> to vector<2x4xf32>
    %215 = vector.shape_cast %214 : vector<2x4xf32> to vector<2x4x1xf32>
    %216 = vector.broadcast %215 : vector<2x4x1xf32> to vector<2x4x4xf32>
    %217 = arith.cmpf oeq, %213, %216 : vector<2x4x4xf32>
    %c4_i32_105 = arith.constant 4 : i32
    %218 = vector.broadcast %c4_i32_105 : i32 to vector<2x4x4xi32>
    %219 = arith.select %217, %103, %218 : vector<2x4x4xi1>, vector<2x4x4xi32>
    %cst_106 = arith.constant dense<2147483647> : vector<2x4xi32>
    %220 = vector.multi_reduction <minsi>, %219, %cst_106 [2] : vector<2x4x4xi32> to vector<2x4xi32>
    %c7_107 = arith.constant 7 : index
    %c0_108 = arith.constant 0 : index
    %c0_109 = arith.constant 0 : index
    %221 = vector.load %arg21[%c7_107, %c0_108, %c0_109] : memref<16x2x4xi32, #tpu.memory_space<vmem>>, vector<1x2x4xi32>
    %222 = vector.shape_cast %221 : vector<1x2x4xi32> to vector<2x4xi32>
    %223 = vector.shape_cast %220 : vector<2x4xi32> to vector<1x2x4xi32>
    tpu.vector_store %arg21[%c7_107, %c0_108, %c0_109], %223 {strides = array<i32>} : memref<16x2x4xi32, #tpu.memory_space<vmem>>, vector<1x2x4xi32>,
    %224 = vector.extract_strided_slice %97 {offsets = [14, 0], sizes = [2, 4], strides = [1, 1]} : vector<32x4xf32> to vector<2x4xf32>
    %225 = arith.addf %214, %224 : vector<2x4xf32>
    %226 = vector.shape_cast %100 : vector<4x4xf32> to vector<1x4x4xf32>
    %227 = vector.shape_cast %225 : vector<2x4xf32> to vector<2x1x4xf32>
    %228 = vector.broadcast %226 : vector<1x4x4xf32> to vector<2x4x4xf32>
    %229 = vector.broadcast %227 : vector<2x1x4xf32> to vector<2x4x4xf32>
    %230 = arith.addf %228, %229 : vector<2x4x4xf32>
    %cst_110 = arith.constant dense<0xFF800000> : vector<2x4xf32>
    %231 = vector.multi_reduction <maximumf>, %230, %cst_110 [2] : vector<2x4x4xf32> to vector<2x4xf32>
    %232 = vector.shape_cast %231 : vector<2x4xf32> to vector<2x4x1xf32>
    %233 = vector.broadcast %232 : vector<2x4x1xf32> to vector<2x4x4xf32>
    %234 = arith.cmpf oeq, %230, %233 : vector<2x4x4xf32>
    %c4_i32_111 = arith.constant 4 : i32
    %235 = vector.broadcast %c4_i32_111 : i32 to vector<2x4x4xi32>
    %236 = arith.select %234, %103, %235 : vector<2x4x4xi1>, vector<2x4x4xi32>
    %cst_112 = arith.constant dense<2147483647> : vector<2x4xi32>
    %237 = vector.multi_reduction <minsi>, %236, %cst_112 [2] : vector<2x4x4xi32> to vector<2x4xi32>
    %c8_113 = arith.constant 8 : index
    %c0_114 = arith.constant 0 : index
    %c0_115 = arith.constant 0 : index
    %238 = vector.load %arg21[%c8_113, %c0_114, %c0_115] : memref<16x2x4xi32, #tpu.memory_space<vmem>>, vector<1x2x4xi32>
    %239 = vector.shape_cast %238 : vector<1x2x4xi32> to vector<2x4xi32>
    %240 = vector.shape_cast %237 : vector<2x4xi32> to vector<1x2x4xi32>
    tpu.vector_store %arg21[%c8_113, %c0_114, %c0_115], %240 {strides = array<i32>} : memref<16x2x4xi32, #tpu.memory_space<vmem>>, vector<1x2x4xi32>,
    %241 = vector.extract_strided_slice %97 {offsets = [16, 0], sizes = [2, 4], strides = [1, 1]} : vector<32x4xf32> to vector<2x4xf32>
    %242 = arith.addf %231, %241 : vector<2x4xf32>
    %243 = vector.shape_cast %100 : vector<4x4xf32> to vector<1x4x4xf32>
    %244 = vector.shape_cast %242 : vector<2x4xf32> to vector<2x1x4xf32>
    %245 = vector.broadcast %243 : vector<1x4x4xf32> to vector<2x4x4xf32>
    %246 = vector.broadcast %244 : vector<2x1x4xf32> to vector<2x4x4xf32>
    %247 = arith.addf %245, %246 : vector<2x4x4xf32>
    %cst_116 = arith.constant dense<0xFF800000> : vector<2x4xf32>
    %248 = vector.multi_reduction <maximumf>, %247, %cst_116 [2] : vector<2x4x4xf32> to vector<2x4xf32>
    %249 = vector.shape_cast %248 : vector<2x4xf32> to vector<2x4x1xf32>
    %250 = vector.broadcast %249 : vector<2x4x1xf32> to vector<2x4x4xf32>
    %251 = arith.cmpf oeq, %247, %250 : vector<2x4x4xf32>
    %c4_i32_117 = arith.constant 4 : i32
    %252 = vector.broadcast %c4_i32_117 : i32 to vector<2x4x4xi32>
    %253 = arith.select %251, %103, %252 : vector<2x4x4xi1>, vector<2x4x4xi32>
    %cst_118 = arith.constant dense<2147483647> : vector<2x4xi32>
    %254 = vector.multi_reduction <minsi>, %253, %cst_118 [2] : vector<2x4x4xi32> to vector<2x4xi32>
    %c9_119 = arith.constant 9 : index
    %c0_120 = arith.constant 0 : index
    %c0_121 = arith.constant 0 : index
    %255 = vector.load %arg21[%c9_119, %c0_120, %c0_121] : memref<16x2x4xi32, #tpu.memory_space<vmem>>, vector<1x2x4xi32>
    %256 = vector.shape_cast %255 : vector<1x2x4xi32> to vector<2x4xi32>
    %257 = vector.shape_cast %254 : vector<2x4xi32> to vector<1x2x4xi32>
    tpu.vector_store %arg21[%c9_119, %c0_120, %c0_121], %257 {strides = array<i32>} : memref<16x2x4xi32, #tpu.memory_space<vmem>>, vector<1x2x4xi32>,
    %258 = vector.extract_strided_slice %97 {offsets = [18, 0], sizes = [2, 4], strides = [1, 1]} : vector<32x4xf32> to vector<2x4xf32>
    %259 = arith.addf %248, %258 : vector<2x4xf32>
    %260 = vector.shape_cast %100 : vector<4x4xf32> to vector<1x4x4xf32>
    %261 = vector.shape_cast %259 : vector<2x4xf32> to vector<2x1x4xf32>
    %262 = vector.broadcast %260 : vector<1x4x4xf32> to vector<2x4x4xf32>
    %263 = vector.broadcast %261 : vector<2x1x4xf32> to vector<2x4x4xf32>
    %264 = arith.addf %262, %263 : vector<2x4x4xf32>
    %cst_122 = arith.constant dense<0xFF800000> : vector<2x4xf32>
    %265 = vector.multi_reduction <maximumf>, %264, %cst_122 [2] : vector<2x4x4xf32> to vector<2x4xf32>
    %266 = vector.shape_cast %265 : vector<2x4xf32> to vector<2x4x1xf32>
    %267 = vector.broadcast %266 : vector<2x4x1xf32> to vector<2x4x4xf32>
    %268 = arith.cmpf oeq, %264, %267 : vector<2x4x4xf32>
    %c4_i32_123 = arith.constant 4 : i32
    %269 = vector.broadcast %c4_i32_123 : i32 to vector<2x4x4xi32>
    %270 = arith.select %268, %103, %269 : vector<2x4x4xi1>, vector<2x4x4xi32>
    %cst_124 = arith.constant dense<2147483647> : vector<2x4xi32>
    %271 = vector.multi_reduction <minsi>, %270, %cst_124 [2] : vector<2x4x4xi32> to vector<2x4xi32>
    %c10 = arith.constant 10 : index
    %c0_125 = arith.constant 0 : index
    %c0_126 = arith.constant 0 : index
    %272 = vector.load %arg21[%c10, %c0_125, %c0_126] : memref<16x2x4xi32, #tpu.memory_space<vmem>>, vector<1x2x4xi32>
    %273 = vector.shape_cast %272 : vector<1x2x4xi32> to vector<2x4xi32>
    %274 = vector.shape_cast %271 : vector<2x4xi32> to vector<1x2x4xi32>
    tpu.vector_store %arg21[%c10, %c0_125, %c0_126], %274 {strides = array<i32>} : memref<16x2x4xi32, #tpu.memory_space<vmem>>, vector<1x2x4xi32>,
    %275 = vector.extract_strided_slice %97 {offsets = [20, 0], sizes = [2, 4], strides = [1, 1]} : vector<32x4xf32> to vector<2x4xf32>
    %276 = arith.addf %265, %275 : vector<2x4xf32>
    %277 = vector.shape_cast %100 : vector<4x4xf32> to vector<1x4x4xf32>
    %278 = vector.shape_cast %276 : vector<2x4xf32> to vector<2x1x4xf32>
    %279 = vector.broadcast %277 : vector<1x4x4xf32> to vector<2x4x4xf32>
    %280 = vector.broadcast %278 : vector<2x1x4xf32> to vector<2x4x4xf32>
    %281 = arith.addf %279, %280 : vector<2x4x4xf32>
    %cst_127 = arith.constant dense<0xFF800000> : vector<2x4xf32>
    %282 = vector.multi_reduction <maximumf>, %281, %cst_127 [2] : vector<2x4x4xf32> to vector<2x4xf32>
    %283 = vector.shape_cast %282 : vector<2x4xf32> to vector<2x4x1xf32>
    %284 = vector.broadcast %283 : vector<2x4x1xf32> to vector<2x4x4xf32>
    %285 = arith.cmpf oeq, %281, %284 : vector<2x4x4xf32>
    %c4_i32_128 = arith.constant 4 : i32
    %286 = vector.broadcast %c4_i32_128 : i32 to vector<2x4x4xi32>
    %287 = arith.select %285, %103, %286 : vector<2x4x4xi1>, vector<2x4x4xi32>
    %cst_129 = arith.constant dense<2147483647> : vector<2x4xi32>
    %288 = vector.multi_reduction <minsi>, %287, %cst_129 [2] : vector<2x4x4xi32> to vector<2x4xi32>
    %c11 = arith.constant 11 : index
    %c0_130 = arith.constant 0 : index
    %c0_131 = arith.constant 0 : index
    %289 = vector.load %arg21[%c11, %c0_130, %c0_131] : memref<16x2x4xi32, #tpu.memory_space<vmem>>, vector<1x2x4xi32>
    %290 = vector.shape_cast %289 : vector<1x2x4xi32> to vector<2x4xi32>
    %291 = vector.shape_cast %288 : vector<2x4xi32> to vector<1x2x4xi32>
    tpu.vector_store %arg21[%c11, %c0_130, %c0_131], %291 {strides = array<i32>} : memref<16x2x4xi32, #tpu.memory_space<vmem>>, vector<1x2x4xi32>,
    %292 = vector.extract_strided_slice %97 {offsets = [22, 0], sizes = [2, 4], strides = [1, 1]} : vector<32x4xf32> to vector<2x4xf32>
    %293 = arith.addf %282, %292 : vector<2x4xf32>
    %294 = vector.shape_cast %100 : vector<4x4xf32> to vector<1x4x4xf32>
    %295 = vector.shape_cast %293 : vector<2x4xf32> to vector<2x1x4xf32>
    %296 = vector.broadcast %294 : vector<1x4x4xf32> to vector<2x4x4xf32>
    %297 = vector.broadcast %295 : vector<2x1x4xf32> to vector<2x4x4xf32>
    %298 = arith.addf %296, %297 : vector<2x4x4xf32>
    %cst_132 = arith.constant dense<0xFF800000> : vector<2x4xf32>
    %299 = vector.multi_reduction <maximumf>, %298, %cst_132 [2] : vector<2x4x4xf32> to vector<2x4xf32>
    %300 = vector.shape_cast %299 : vector<2x4xf32> to vector<2x4x1xf32>
    %301 = vector.broadcast %300 : vector<2x4x1xf32> to vector<2x4x4xf32>
    %302 = arith.cmpf oeq, %298, %301 : vector<2x4x4xf32>
    %c4_i32_133 = arith.constant 4 : i32
    %303 = vector.broadcast %c4_i32_133 : i32 to vector<2x4x4xi32>
    %304 = arith.select %302, %103, %303 : vector<2x4x4xi1>, vector<2x4x4xi32>
    %cst_134 = arith.constant dense<2147483647> : vector<2x4xi32>
    %305 = vector.multi_reduction <minsi>, %304, %cst_134 [2] : vector<2x4x4xi32> to vector<2x4xi32>
    %c12 = arith.constant 12 : index
    %c0_135 = arith.constant 0 : index
    %c0_136 = arith.constant 0 : index
    %306 = vector.load %arg21[%c12, %c0_135, %c0_136] : memref<16x2x4xi32, #tpu.memory_space<vmem>>, vector<1x2x4xi32>
    %307 = vector.shape_cast %306 : vector<1x2x4xi32> to vector<2x4xi32>
    %308 = vector.shape_cast %305 : vector<2x4xi32> to vector<1x2x4xi32>
    tpu.vector_store %arg21[%c12, %c0_135, %c0_136], %308 {strides = array<i32>} : memref<16x2x4xi32, #tpu.memory_space<vmem>>, vector<1x2x4xi32>,
    %309 = vector.extract_strided_slice %97 {offsets = [24, 0], sizes = [2, 4], strides = [1, 1]} : vector<32x4xf32> to vector<2x4xf32>
    %310 = arith.addf %299, %309 : vector<2x4xf32>
    %311 = vector.shape_cast %100 : vector<4x4xf32> to vector<1x4x4xf32>
    %312 = vector.shape_cast %310 : vector<2x4xf32> to vector<2x1x4xf32>
    %313 = vector.broadcast %311 : vector<1x4x4xf32> to vector<2x4x4xf32>
    %314 = vector.broadcast %312 : vector<2x1x4xf32> to vector<2x4x4xf32>
    %315 = arith.addf %313, %314 : vector<2x4x4xf32>
    %cst_137 = arith.constant dense<0xFF800000> : vector<2x4xf32>
    %316 = vector.multi_reduction <maximumf>, %315, %cst_137 [2] : vector<2x4x4xf32> to vector<2x4xf32>
    %317 = vector.shape_cast %316 : vector<2x4xf32> to vector<2x4x1xf32>
    %318 = vector.broadcast %317 : vector<2x4x1xf32> to vector<2x4x4xf32>
    %319 = arith.cmpf oeq, %315, %318 : vector<2x4x4xf32>
    %c4_i32_138 = arith.constant 4 : i32
    %320 = vector.broadcast %c4_i32_138 : i32 to vector<2x4x4xi32>
    %321 = arith.select %319, %103, %320 : vector<2x4x4xi1>, vector<2x4x4xi32>
    %cst_139 = arith.constant dense<2147483647> : vector<2x4xi32>
    %322 = vector.multi_reduction <minsi>, %321, %cst_139 [2] : vector<2x4x4xi32> to vector<2x4xi32>
    %c13 = arith.constant 13 : index
    %c0_140 = arith.constant 0 : index
    %c0_141 = arith.constant 0 : index
    %323 = vector.load %arg21[%c13, %c0_140, %c0_141] : memref<16x2x4xi32, #tpu.memory_space<vmem>>, vector<1x2x4xi32>
    %324 = vector.shape_cast %323 : vector<1x2x4xi32> to vector<2x4xi32>
    %325 = vector.shape_cast %322 : vector<2x4xi32> to vector<1x2x4xi32>
    tpu.vector_store %arg21[%c13, %c0_140, %c0_141], %325 {strides = array<i32>} : memref<16x2x4xi32, #tpu.memory_space<vmem>>, vector<1x2x4xi32>,
    %326 = vector.extract_strided_slice %97 {offsets = [26, 0], sizes = [2, 4], strides = [1, 1]} : vector<32x4xf32> to vector<2x4xf32>
    %327 = arith.addf %316, %326 : vector<2x4xf32>
    %328 = vector.shape_cast %100 : vector<4x4xf32> to vector<1x4x4xf32>
    %329 = vector.shape_cast %327 : vector<2x4xf32> to vector<2x1x4xf32>
    %330 = vector.broadcast %328 : vector<1x4x4xf32> to vector<2x4x4xf32>
    %331 = vector.broadcast %329 : vector<2x1x4xf32> to vector<2x4x4xf32>
    %332 = arith.addf %330, %331 : vector<2x4x4xf32>
    %cst_142 = arith.constant dense<0xFF800000> : vector<2x4xf32>
    %333 = vector.multi_reduction <maximumf>, %332, %cst_142 [2] : vector<2x4x4xf32> to vector<2x4xf32>
    %334 = vector.shape_cast %333 : vector<2x4xf32> to vector<2x4x1xf32>
    %335 = vector.broadcast %334 : vector<2x4x1xf32> to vector<2x4x4xf32>
    %336 = arith.cmpf oeq, %332, %335 : vector<2x4x4xf32>
    %c4_i32_143 = arith.constant 4 : i32
    %337 = vector.broadcast %c4_i32_143 : i32 to vector<2x4x4xi32>
    %338 = arith.select %336, %103, %337 : vector<2x4x4xi1>, vector<2x4x4xi32>
    %cst_144 = arith.constant dense<2147483647> : vector<2x4xi32>
    %339 = vector.multi_reduction <minsi>, %338, %cst_144 [2] : vector<2x4x4xi32> to vector<2x4xi32>
    %c14 = arith.constant 14 : index
    %c0_145 = arith.constant 0 : index
    %c0_146 = arith.constant 0 : index
    %340 = vector.load %arg21[%c14, %c0_145, %c0_146] : memref<16x2x4xi32, #tpu.memory_space<vmem>>, vector<1x2x4xi32>
    %341 = vector.shape_cast %340 : vector<1x2x4xi32> to vector<2x4xi32>
    %342 = vector.shape_cast %339 : vector<2x4xi32> to vector<1x2x4xi32>
    tpu.vector_store %arg21[%c14, %c0_145, %c0_146], %342 {strides = array<i32>} : memref<16x2x4xi32, #tpu.memory_space<vmem>>, vector<1x2x4xi32>,
    %343 = vector.extract_strided_slice %97 {offsets = [28, 0], sizes = [2, 4], strides = [1, 1]} : vector<32x4xf32> to vector<2x4xf32>
    %344 = arith.addf %333, %343 : vector<2x4xf32>
    %345 = vector.shape_cast %100 : vector<4x4xf32> to vector<1x4x4xf32>
    %346 = vector.shape_cast %344 : vector<2x4xf32> to vector<2x1x4xf32>
    %347 = vector.broadcast %345 : vector<1x4x4xf32> to vector<2x4x4xf32>
    %348 = vector.broadcast %346 : vector<2x1x4xf32> to vector<2x4x4xf32>
    %349 = arith.addf %347, %348 : vector<2x4x4xf32>
    %cst_147 = arith.constant dense<0xFF800000> : vector<2x4xf32>
    %350 = vector.multi_reduction <maximumf>, %349, %cst_147 [2] : vector<2x4x4xf32> to vector<2x4xf32>
    %351 = vector.shape_cast %350 : vector<2x4xf32> to vector<2x4x1xf32>
    %352 = vector.broadcast %351 : vector<2x4x1xf32> to vector<2x4x4xf32>
    %353 = arith.cmpf oeq, %349, %352 : vector<2x4x4xf32>
    %c4_i32_148 = arith.constant 4 : i32
    %354 = vector.broadcast %c4_i32_148 : i32 to vector<2x4x4xi32>
    %355 = arith.select %353, %103, %354 : vector<2x4x4xi1>, vector<2x4x4xi32>
    %cst_149 = arith.constant dense<2147483647> : vector<2x4xi32>
    %356 = vector.multi_reduction <minsi>, %355, %cst_149 [2] : vector<2x4x4xi32> to vector<2x4xi32>
    %c15_150 = arith.constant 15 : index
    %c0_151 = arith.constant 0 : index
    %c0_152 = arith.constant 0 : index
    %357 = vector.load %arg21[%c15_150, %c0_151, %c0_152] : memref<16x2x4xi32, #tpu.memory_space<vmem>>, vector<1x2x4xi32>
    %358 = vector.shape_cast %357 : vector<1x2x4xi32> to vector<2x4xi32>
    %359 = vector.shape_cast %356 : vector<2x4xi32> to vector<1x2x4xi32>
    tpu.vector_store %arg21[%c15_150, %c0_151, %c0_152], %359 {strides = array<i32>} : memref<16x2x4xi32, #tpu.memory_space<vmem>>, vector<1x2x4xi32>,
    %360 = vector.extract_strided_slice %97 {offsets = [30, 0], sizes = [2, 4], strides = [1, 1]} : vector<32x4xf32> to vector<2x4xf32>
    %361 = arith.addf %350, %360 : vector<2x4xf32>
    %362 = vector.broadcast %101 : vector<1x4xf32> to vector<2x4xf32>
    %363 = arith.addf %361, %362 : vector<2x4xf32>
    %cst_153 = arith.constant dense<0xFF800000> : vector<2xf32>
    %364 = vector.multi_reduction <maximumf>, %363, %cst_153 [1] : vector<2x4xf32> to vector<2xf32>
    %365 = vector.shape_cast %364 : vector<2xf32> to vector<2x1xf32>
    %366 = vector.broadcast %365 : vector<2x1xf32> to vector<2x4xf32>
    %367 = arith.cmpf oeq, %363, %366 : vector<2x4xf32>
    %c4_i32_154 = arith.constant 4 : i32
    %368 = vector.broadcast %c4_i32_154 : i32 to vector<2x4xi32>
    %369 = arith.select %367, %102, %368 : vector<2x4xi1>, vector<2x4xi32>
    %cst_155 = arith.constant dense<2147483647> : vector<2xi32>
    %370 = vector.multi_reduction <minsi>, %369, %cst_155 [1] : vector<2x4xi32> to vector<2xi32>
    %371 = vector.shape_cast %370 : vector<2xi32> to vector<2x1xi32>
    %372 = vector.broadcast %371 : vector<2x1xi32> to vector<2x4xi32>
    %373 = arith.cmpi eq, %102, %372 : vector<2x4xi32>
    %374 = arith.extui %373 : vector<2x4xi1> to vector<2x4xi32>
    %375 = arith.sitofp %374 : vector<2x4xi32> to vector<2x4xf32>
    %c15_156 = arith.constant 15 : index
    %c0_157 = arith.constant 0 : index
    %c0_158 = arith.constant 0 : index
    %376 = vector.load %arg21[%c15_156, %c0_157, %c0_158] : memref<16x2x4xi32, #tpu.memory_space<vmem>>, vector<1x2x4xi32>
    %377 = vector.shape_cast %376 : vector<1x2x4xi32> to vector<2x4xi32>
    %378 = vector.broadcast %371 : vector<2x1xi32> to vector<2x4xi32>
    %379 = arith.cmpi eq, %102, %378 : vector<2x4xi32>
    %c0_i32_159 = arith.constant 0 : i32
    %380 = vector.broadcast %c0_i32_159 : i32 to vector<2x4xi32>
    %381 = arith.select %379, %377, %380 : vector<2x4xi1>, vector<2x4xi32>
    %cst_160 = arith.constant dense<0> : vector<2xi32>
    %382 = vector.multi_reduction <add>, %381, %cst_160 [1] : vector<2x4xi32> to vector<2xi32>
    %383 = vector.shape_cast %382 : vector<2xi32> to vector<2x1xi32>
    %384 = vector.broadcast %383 : vector<2x1xi32> to vector<2x4xi32>
    %385 = arith.cmpi eq, %102, %384 : vector<2x4xi32>
    %386 = arith.extui %385 : vector<2x4xi1> to vector<2x4xi32>
    %387 = arith.sitofp %386 : vector<2x4xi32> to vector<2x4xf32>
    %388 = arith.addf %375, %387 : vector<2x4xf32>
    %c14_161 = arith.constant 14 : index
    %c0_162 = arith.constant 0 : index
    %c0_163 = arith.constant 0 : index
    %389 = vector.load %arg21[%c14_161, %c0_162, %c0_163] : memref<16x2x4xi32, #tpu.memory_space<vmem>>, vector<1x2x4xi32>
    %390 = vector.shape_cast %389 : vector<1x2x4xi32> to vector<2x4xi32>
    %391 = vector.broadcast %383 : vector<2x1xi32> to vector<2x4xi32>
    %392 = arith.cmpi eq, %102, %391 : vector<2x4xi32>
    %c0_i32_164 = arith.constant 0 : i32
    %393 = vector.broadcast %c0_i32_164 : i32 to vector<2x4xi32>
    %394 = arith.select %392, %390, %393 : vector<2x4xi1>, vector<2x4xi32>
    %cst_165 = arith.constant dense<0> : vector<2xi32>
    %395 = vector.multi_reduction <add>, %394, %cst_165 [1] : vector<2x4xi32> to vector<2xi32>
    %396 = vector.shape_cast %395 : vector<2xi32> to vector<2x1xi32>
    %397 = vector.broadcast %396 : vector<2x1xi32> to vector<2x4xi32>
    %398 = arith.cmpi eq, %102, %397 : vector<2x4xi32>
    %399 = arith.extui %398 : vector<2x4xi1> to vector<2x4xi32>
    %400 = arith.sitofp %399 : vector<2x4xi32> to vector<2x4xf32>
    %401 = arith.addf %388, %400 : vector<2x4xf32>
    %c13_166 = arith.constant 13 : index
    %c0_167 = arith.constant 0 : index
    %c0_168 = arith.constant 0 : index
    %402 = vector.load %arg21[%c13_166, %c0_167, %c0_168] : memref<16x2x4xi32, #tpu.memory_space<vmem>>, vector<1x2x4xi32>
    %403 = vector.shape_cast %402 : vector<1x2x4xi32> to vector<2x4xi32>
    %404 = vector.broadcast %396 : vector<2x1xi32> to vector<2x4xi32>
    %405 = arith.cmpi eq, %102, %404 : vector<2x4xi32>
    %c0_i32_169 = arith.constant 0 : i32
    %406 = vector.broadcast %c0_i32_169 : i32 to vector<2x4xi32>
    %407 = arith.select %405, %403, %406 : vector<2x4xi1>, vector<2x4xi32>
    %cst_170 = arith.constant dense<0> : vector<2xi32>
    %408 = vector.multi_reduction <add>, %407, %cst_170 [1] : vector<2x4xi32> to vector<2xi32>
    %409 = vector.shape_cast %408 : vector<2xi32> to vector<2x1xi32>
    %410 = vector.broadcast %409 : vector<2x1xi32> to vector<2x4xi32>
    %411 = arith.cmpi eq, %102, %410 : vector<2x4xi32>
    %412 = arith.extui %411 : vector<2x4xi1> to vector<2x4xi32>
    %413 = arith.sitofp %412 : vector<2x4xi32> to vector<2x4xf32>
    %414 = arith.addf %401, %413 : vector<2x4xf32>
    %c12_171 = arith.constant 12 : index
    %c0_172 = arith.constant 0 : index
    %c0_173 = arith.constant 0 : index
    %415 = vector.load %arg21[%c12_171, %c0_172, %c0_173] : memref<16x2x4xi32, #tpu.memory_space<vmem>>, vector<1x2x4xi32>
    %416 = vector.shape_cast %415 : vector<1x2x4xi32> to vector<2x4xi32>
    %417 = vector.broadcast %409 : vector<2x1xi32> to vector<2x4xi32>
    %418 = arith.cmpi eq, %102, %417 : vector<2x4xi32>
    %c0_i32_174 = arith.constant 0 : i32
    %419 = vector.broadcast %c0_i32_174 : i32 to vector<2x4xi32>
    %420 = arith.select %418, %416, %419 : vector<2x4xi1>, vector<2x4xi32>
    %cst_175 = arith.constant dense<0> : vector<2xi32>
    %421 = vector.multi_reduction <add>, %420, %cst_175 [1] : vector<2x4xi32> to vector<2xi32>
    %422 = vector.shape_cast %421 : vector<2xi32> to vector<2x1xi32>
    %423 = vector.broadcast %422 : vector<2x1xi32> to vector<2x4xi32>
    %424 = arith.cmpi eq, %102, %423 : vector<2x4xi32>
    %425 = arith.extui %424 : vector<2x4xi1> to vector<2x4xi32>
    %426 = arith.sitofp %425 : vector<2x4xi32> to vector<2x4xf32>
    %427 = arith.addf %414, %426 : vector<2x4xf32>
    %c11_176 = arith.constant 11 : index
    %c0_177 = arith.constant 0 : index
    %c0_178 = arith.constant 0 : index
    %428 = vector.load %arg21[%c11_176, %c0_177, %c0_178] : memref<16x2x4xi32, #tpu.memory_space<vmem>>, vector<1x2x4xi32>
    %429 = vector.shape_cast %428 : vector<1x2x4xi32> to vector<2x4xi32>
    %430 = vector.broadcast %422 : vector<2x1xi32> to vector<2x4xi32>
    %431 = arith.cmpi eq, %102, %430 : vector<2x4xi32>
    %c0_i32_179 = arith.constant 0 : i32
    %432 = vector.broadcast %c0_i32_179 : i32 to vector<2x4xi32>
    %433 = arith.select %431, %429, %432 : vector<2x4xi1>, vector<2x4xi32>
    %cst_180 = arith.constant dense<0> : vector<2xi32>
    %434 = vector.multi_reduction <add>, %433, %cst_180 [1] : vector<2x4xi32> to vector<2xi32>
    %435 = vector.shape_cast %434 : vector<2xi32> to vector<2x1xi32>
    %436 = vector.broadcast %435 : vector<2x1xi32> to vector<2x4xi32>
    %437 = arith.cmpi eq, %102, %436 : vector<2x4xi32>
    %438 = arith.extui %437 : vector<2x4xi1> to vector<2x4xi32>
    %439 = arith.sitofp %438 : vector<2x4xi32> to vector<2x4xf32>
    %440 = arith.addf %427, %439 : vector<2x4xf32>
    %c10_181 = arith.constant 10 : index
    %c0_182 = arith.constant 0 : index
    %c0_183 = arith.constant 0 : index
    %441 = vector.load %arg21[%c10_181, %c0_182, %c0_183] : memref<16x2x4xi32, #tpu.memory_space<vmem>>, vector<1x2x4xi32>
    %442 = vector.shape_cast %441 : vector<1x2x4xi32> to vector<2x4xi32>
    %443 = vector.broadcast %435 : vector<2x1xi32> to vector<2x4xi32>
    %444 = arith.cmpi eq, %102, %443 : vector<2x4xi32>
    %c0_i32_184 = arith.constant 0 : i32
    %445 = vector.broadcast %c0_i32_184 : i32 to vector<2x4xi32>
    %446 = arith.select %444, %442, %445 : vector<2x4xi1>, vector<2x4xi32>
    %cst_185 = arith.constant dense<0> : vector<2xi32>
    %447 = vector.multi_reduction <add>, %446, %cst_185 [1] : vector<2x4xi32> to vector<2xi32>
    %448 = vector.shape_cast %447 : vector<2xi32> to vector<2x1xi32>
    %449 = vector.broadcast %448 : vector<2x1xi32> to vector<2x4xi32>
    %450 = arith.cmpi eq, %102, %449 : vector<2x4xi32>
    %451 = arith.extui %450 : vector<2x4xi1> to vector<2x4xi32>
    %452 = arith.sitofp %451 : vector<2x4xi32> to vector<2x4xf32>
    %453 = arith.addf %440, %452 : vector<2x4xf32>
    %c9_186 = arith.constant 9 : index
    %c0_187 = arith.constant 0 : index
    %c0_188 = arith.constant 0 : index
    %454 = vector.load %arg21[%c9_186, %c0_187, %c0_188] : memref<16x2x4xi32, #tpu.memory_space<vmem>>, vector<1x2x4xi32>
    %455 = vector.shape_cast %454 : vector<1x2x4xi32> to vector<2x4xi32>
    %456 = vector.broadcast %448 : vector<2x1xi32> to vector<2x4xi32>
    %457 = arith.cmpi eq, %102, %456 : vector<2x4xi32>
    %c0_i32_189 = arith.constant 0 : i32
    %458 = vector.broadcast %c0_i32_189 : i32 to vector<2x4xi32>
    %459 = arith.select %457, %455, %458 : vector<2x4xi1>, vector<2x4xi32>
    %cst_190 = arith.constant dense<0> : vector<2xi32>
    %460 = vector.multi_reduction <add>, %459, %cst_190 [1] : vector<2x4xi32> to vector<2xi32>
    %461 = vector.shape_cast %460 : vector<2xi32> to vector<2x1xi32>
    %462 = vector.broadcast %461 : vector<2x1xi32> to vector<2x4xi32>
    %463 = arith.cmpi eq, %102, %462 : vector<2x4xi32>
    %464 = arith.extui %463 : vector<2x4xi1> to vector<2x4xi32>
    %465 = arith.sitofp %464 : vector<2x4xi32> to vector<2x4xf32>
    %466 = arith.addf %453, %465 : vector<2x4xf32>
    %c8_191 = arith.constant 8 : index
    %c0_192 = arith.constant 0 : index
    %c0_193 = arith.constant 0 : index
    %467 = vector.load %arg21[%c8_191, %c0_192, %c0_193] : memref<16x2x4xi32, #tpu.memory_space<vmem>>, vector<1x2x4xi32>
    %468 = vector.shape_cast %467 : vector<1x2x4xi32> to vector<2x4xi32>
    %469 = vector.broadcast %461 : vector<2x1xi32> to vector<2x4xi32>
    %470 = arith.cmpi eq, %102, %469 : vector<2x4xi32>
    %c0_i32_194 = arith.constant 0 : i32
    %471 = vector.broadcast %c0_i32_194 : i32 to vector<2x4xi32>
    %472 = arith.select %470, %468, %471 : vector<2x4xi1>, vector<2x4xi32>
    %cst_195 = arith.constant dense<0> : vector<2xi32>
    %473 = vector.multi_reduction <add>, %472, %cst_195 [1] : vector<2x4xi32> to vector<2xi32>
    %474 = vector.shape_cast %473 : vector<2xi32> to vector<2x1xi32>
    %475 = vector.broadcast %474 : vector<2x1xi32> to vector<2x4xi32>
    %476 = arith.cmpi eq, %102, %475 : vector<2x4xi32>
    %477 = arith.extui %476 : vector<2x4xi1> to vector<2x4xi32>
    %478 = arith.sitofp %477 : vector<2x4xi32> to vector<2x4xf32>
    %479 = arith.addf %466, %478 : vector<2x4xf32>
    %c7_196 = arith.constant 7 : index
    %c0_197 = arith.constant 0 : index
    %c0_198 = arith.constant 0 : index
    %480 = vector.load %arg21[%c7_196, %c0_197, %c0_198] : memref<16x2x4xi32, #tpu.memory_space<vmem>>, vector<1x2x4xi32>
    %481 = vector.shape_cast %480 : vector<1x2x4xi32> to vector<2x4xi32>
    %482 = vector.broadcast %474 : vector<2x1xi32> to vector<2x4xi32>
    %483 = arith.cmpi eq, %102, %482 : vector<2x4xi32>
    %c0_i32_199 = arith.constant 0 : i32
    %484 = vector.broadcast %c0_i32_199 : i32 to vector<2x4xi32>
    %485 = arith.select %483, %481, %484 : vector<2x4xi1>, vector<2x4xi32>
    %cst_200 = arith.constant dense<0> : vector<2xi32>
    %486 = vector.multi_reduction <add>, %485, %cst_200 [1] : vector<2x4xi32> to vector<2xi32>
    %487 = vector.shape_cast %486 : vector<2xi32> to vector<2x1xi32>
    %488 = vector.broadcast %487 : vector<2x1xi32> to vector<2x4xi32>
    %489 = arith.cmpi eq, %102, %488 : vector<2x4xi32>
    %490 = arith.extui %489 : vector<2x4xi1> to vector<2x4xi32>
    %491 = arith.sitofp %490 : vector<2x4xi32> to vector<2x4xf32>
    %492 = arith.addf %479, %491 : vector<2x4xf32>
    %c6_201 = arith.constant 6 : index
    %c0_202 = arith.constant 0 : index
    %c0_203 = arith.constant 0 : index
    %493 = vector.load %arg21[%c6_201, %c0_202, %c0_203] : memref<16x2x4xi32, #tpu.memory_space<vmem>>, vector<1x2x4xi32>
    %494 = vector.shape_cast %493 : vector<1x2x4xi32> to vector<2x4xi32>
    %495 = vector.broadcast %487 : vector<2x1xi32> to vector<2x4xi32>
    %496 = arith.cmpi eq, %102, %495 : vector<2x4xi32>
    %c0_i32_204 = arith.constant 0 : i32
    %497 = vector.broadcast %c0_i32_204 : i32 to vector<2x4xi32>
    %498 = arith.select %496, %494, %497 : vector<2x4xi1>, vector<2x4xi32>
    %cst_205 = arith.constant dense<0> : vector<2xi32>
    %499 = vector.multi_reduction <add>, %498, %cst_205 [1] : vector<2x4xi32> to vector<2xi32>
    %500 = vector.shape_cast %499 : vector<2xi32> to vector<2x1xi32>
    %501 = vector.broadcast %500 : vector<2x1xi32> to vector<2x4xi32>
    %502 = arith.cmpi eq, %102, %501 : vector<2x4xi32>
    %503 = arith.extui %502 : vector<2x4xi1> to vector<2x4xi32>
    %504 = arith.sitofp %503 : vector<2x4xi32> to vector<2x4xf32>
    %505 = arith.addf %492, %504 : vector<2x4xf32>
    %c5_206 = arith.constant 5 : index
    %c0_207 = arith.constant 0 : index
    %c0_208 = arith.constant 0 : index
    %506 = vector.load %arg21[%c5_206, %c0_207, %c0_208] : memref<16x2x4xi32, #tpu.memory_space<vmem>>, vector<1x2x4xi32>
    %507 = vector.shape_cast %506 : vector<1x2x4xi32> to vector<2x4xi32>
    %508 = vector.broadcast %500 : vector<2x1xi32> to vector<2x4xi32>
    %509 = arith.cmpi eq, %102, %508 : vector<2x4xi32>
    %c0_i32_209 = arith.constant 0 : i32
    %510 = vector.broadcast %c0_i32_209 : i32 to vector<2x4xi32>
    %511 = arith.select %509, %507, %510 : vector<2x4xi1>, vector<2x4xi32>
    %cst_210 = arith.constant dense<0> : vector<2xi32>
    %512 = vector.multi_reduction <add>, %511, %cst_210 [1] : vector<2x4xi32> to vector<2xi32>
    %513 = vector.shape_cast %512 : vector<2xi32> to vector<2x1xi32>
    %514 = vector.broadcast %513 : vector<2x1xi32> to vector<2x4xi32>
    %515 = arith.cmpi eq, %102, %514 : vector<2x4xi32>
    %516 = arith.extui %515 : vector<2x4xi1> to vector<2x4xi32>
    %517 = arith.sitofp %516 : vector<2x4xi32> to vector<2x4xf32>
    %518 = arith.addf %505, %517 : vector<2x4xf32>
    %c4_211 = arith.constant 4 : index
    %c0_212 = arith.constant 0 : index
    %c0_213 = arith.constant 0 : index
    %519 = vector.load %arg21[%c4_211, %c0_212, %c0_213] : memref<16x2x4xi32, #tpu.memory_space<vmem>>, vector<1x2x4xi32>
    %520 = vector.shape_cast %519 : vector<1x2x4xi32> to vector<2x4xi32>
    %521 = vector.broadcast %513 : vector<2x1xi32> to vector<2x4xi32>
    %522 = arith.cmpi eq, %102, %521 : vector<2x4xi32>
    %c0_i32_214 = arith.constant 0 : i32
    %523 = vector.broadcast %c0_i32_214 : i32 to vector<2x4xi32>
    %524 = arith.select %522, %520, %523 : vector<2x4xi1>, vector<2x4xi32>
    %cst_215 = arith.constant dense<0> : vector<2xi32>
    %525 = vector.multi_reduction <add>, %524, %cst_215 [1] : vector<2x4xi32> to vector<2xi32>
    %526 = vector.shape_cast %525 : vector<2xi32> to vector<2x1xi32>
    %527 = vector.broadcast %526 : vector<2x1xi32> to vector<2x4xi32>
    %528 = arith.cmpi eq, %102, %527 : vector<2x4xi32>
    %529 = arith.extui %528 : vector<2x4xi1> to vector<2x4xi32>
    %530 = arith.sitofp %529 : vector<2x4xi32> to vector<2x4xf32>
    %531 = arith.addf %518, %530 : vector<2x4xf32>
    %c3_216 = arith.constant 3 : index
    %c0_217 = arith.constant 0 : index
    %c0_218 = arith.constant 0 : index
    %532 = vector.load %arg21[%c3_216, %c0_217, %c0_218] : memref<16x2x4xi32, #tpu.memory_space<vmem>>, vector<1x2x4xi32>
    %533 = vector.shape_cast %532 : vector<1x2x4xi32> to vector<2x4xi32>
    %534 = vector.broadcast %526 : vector<2x1xi32> to vector<2x4xi32>
    %535 = arith.cmpi eq, %102, %534 : vector<2x4xi32>
    %c0_i32_219 = arith.constant 0 : i32
    %536 = vector.broadcast %c0_i32_219 : i32 to vector<2x4xi32>
    %537 = arith.select %535, %533, %536 : vector<2x4xi1>, vector<2x4xi32>
    %cst_220 = arith.constant dense<0> : vector<2xi32>
    %538 = vector.multi_reduction <add>, %537, %cst_220 [1] : vector<2x4xi32> to vector<2xi32>
    %539 = vector.shape_cast %538 : vector<2xi32> to vector<2x1xi32>
    %540 = vector.broadcast %539 : vector<2x1xi32> to vector<2x4xi32>
    %541 = arith.cmpi eq, %102, %540 : vector<2x4xi32>
    %542 = arith.extui %541 : vector<2x4xi1> to vector<2x4xi32>
    %543 = arith.sitofp %542 : vector<2x4xi32> to vector<2x4xf32>
    %544 = arith.addf %531, %543 : vector<2x4xf32>
    %c2_221 = arith.constant 2 : index
    %c0_222 = arith.constant 0 : index
    %c0_223 = arith.constant 0 : index
    %545 = vector.load %arg21[%c2_221, %c0_222, %c0_223] : memref<16x2x4xi32, #tpu.memory_space<vmem>>, vector<1x2x4xi32>
    %546 = vector.shape_cast %545 : vector<1x2x4xi32> to vector<2x4xi32>
    %547 = vector.broadcast %539 : vector<2x1xi32> to vector<2x4xi32>
    %548 = arith.cmpi eq, %102, %547 : vector<2x4xi32>
    %c0_i32_224 = arith.constant 0 : i32
    %549 = vector.broadcast %c0_i32_224 : i32 to vector<2x4xi32>
    %550 = arith.select %548, %546, %549 : vector<2x4xi1>, vector<2x4xi32>
    %cst_225 = arith.constant dense<0> : vector<2xi32>
    %551 = vector.multi_reduction <add>, %550, %cst_225 [1] : vector<2x4xi32> to vector<2xi32>
    %552 = vector.shape_cast %551 : vector<2xi32> to vector<2x1xi32>
    %553 = vector.broadcast %552 : vector<2x1xi32> to vector<2x4xi32>
    %554 = arith.cmpi eq, %102, %553 : vector<2x4xi32>
    %555 = arith.extui %554 : vector<2x4xi1> to vector<2x4xi32>
    %556 = arith.sitofp %555 : vector<2x4xi32> to vector<2x4xf32>
    %557 = arith.addf %544, %556 : vector<2x4xf32>
    %c1_226 = arith.constant 1 : index
    %c0_227 = arith.constant 0 : index
    %c0_228 = arith.constant 0 : index
    %558 = vector.load %arg21[%c1_226, %c0_227, %c0_228] : memref<16x2x4xi32, #tpu.memory_space<vmem>>, vector<1x2x4xi32>
    %559 = vector.shape_cast %558 : vector<1x2x4xi32> to vector<2x4xi32>
    %560 = vector.broadcast %552 : vector<2x1xi32> to vector<2x4xi32>
    %561 = arith.cmpi eq, %102, %560 : vector<2x4xi32>
    %c0_i32_229 = arith.constant 0 : i32
    %562 = vector.broadcast %c0_i32_229 : i32 to vector<2x4xi32>
    %563 = arith.select %561, %559, %562 : vector<2x4xi1>, vector<2x4xi32>
    %cst_230 = arith.constant dense<0> : vector<2xi32>
    %564 = vector.multi_reduction <add>, %563, %cst_230 [1] : vector<2x4xi32> to vector<2xi32>
    %565 = vector.shape_cast %564 : vector<2xi32> to vector<2x1xi32>
    %566 = vector.broadcast %565 : vector<2x1xi32> to vector<2x4xi32>
    %567 = arith.cmpi eq, %102, %566 : vector<2x4xi32>
    %568 = arith.extui %567 : vector<2x4xi1> to vector<2x4xi32>
    %569 = arith.sitofp %568 : vector<2x4xi32> to vector<2x4xf32>
    %570 = arith.addf %557, %569 : vector<2x4xf32>
    %cst_231 = arith.constant 6.250000e-02 : f32
    %571 = vector.broadcast %cst_231 : f32 to vector<2x4xf32>
    %572 = arith.mulf %570, %571 : vector<2x4xf32>
    %c0_232 = arith.constant 0 : index
    %c0_233 = arith.constant 0 : index
    %573 = vector.load %arg12[%c0_232, %c0_233] : memref<4x4xf32, #tpu.memory_space<vmem>>, vector<4x4xf32>
    %cst_234 = arith.constant dense<0.000000e+00> : vector<2x4xf32>
    %574 = tpu.matmul %572, %573, %cst_234 {dimension_numbers = #tpu.dot_dimension_numbers<[1], [0], [0], [1], [0, 0, 1, 1], [], []>} : vector<2x4xf32>, vector<4x4xf32>, vector<2x4xf32> -> vector<2x4xf32>
    %c0_235 = arith.constant 0 : index
    %c0_236 = arith.constant 0 : index
    %575 = vector.load %arg13[%c0_235, %c0_236] : memref<1x4xf32, #tpu.memory_space<vmem>>, vector<1x4xf32>
    %576 = vector.broadcast %575 : vector<1x4xf32> to vector<2x4xf32>
    %577 = arith.addf %574, %576 : vector<2x4xf32>
    %c0_237 = arith.constant 0 : index
    %c0_238 = arith.constant 0 : index
    %578 = vector.load %arg16[%c0_237, %c0_238] : memref<2x4xf32, #tpu.memory_space<vmem>>, vector<2x4xf32>
    tpu.vector_store %arg16[%c0_237, %c0_238], %577 {strides = array<i32>} : memref<2x4xf32, #tpu.memory_space<vmem>>, vector<2x4xf32>,
    return
  }
}

</mosaic_0001>

<llo_original>
// kernel: crf_model_forward.1
$region0: #{crf_model_forward.1}
  #allocation0 [shape = 'u32[]', space=smem, size = 0x4, offset = 0x4, fixed_abs, tag = 'smem constant byte address 0x4 - core index']
  #allocation1 [shape = 'u32[144,128]{1,0:T(1,128)}', space=vmem, size = 0x12000, scoped, tag = 'internal scratch']
  #allocation2 [shape = 'f32[536,32]{1,0:T(8,128)}', space=vmem, size = 0x43000, scoped, tag = 'scratch operand']
  #allocation3 [shape = 'f32[160,32]{1,0:T(8,128)}', space=vmem, size = 0x14000, scoped, tag = 'scratch operand']
  #allocation4 [shape = 'f32[144,16]{1,0:T(8,128)}', space=vmem, size = 0x12000, scoped, tag = 'scratch operand']
  #allocation5 [shape = 's32[16,2,4]{2,1,0:T(2,128)}', space=vmem, size = 0x4000, scoped, tag = 'scratch operand']
  %s0 = inlined_call_operand.vmem [shape: f32[512,16], index: 0, kind: input, shape index: {}]
  %s1 = inlined_call_operand.vmem [shape: f32[16,32], index: 1, kind: input, shape index: {}]
  %s2 = inlined_call_operand.vmem [shape: f32[1,32], index: 2, kind: input, shape index: {}]
  %s3 = inlined_call_operand.vmem [shape: f32[1,32], index: 3, kind: input, shape index: {}]
  %s4 = inlined_call_operand.vmem [shape: f32[288,16], index: 4, kind: input, shape index: {}]
  %s5 = inlined_call_operand.vmem [shape: f32[1,16], index: 5, kind: input, shape index: {}]
  %s6 = inlined_call_operand.vmem [shape: f32[1,16], index: 6, kind: input, shape index: {}]
  %s7 = inlined_call_operand.vmem [shape: f32[16,4], index: 7, kind: input, shape index: {}]
  %s8 = inlined_call_operand.vmem [shape: f32[1,4], index: 8, kind: input, shape index: {}]
  %s9 = inlined_call_operand.vmem [shape: f32[1,4], index: 9, kind: input, shape index: {}]
  %s10 = inlined_call_operand.vmem [shape: f32[4,4], index: 10, kind: input, shape index: {}]
  %s11 = inlined_call_operand.vmem [shape: f32[1,4], index: 11, kind: input, shape index: {}]
  %s12 = inlined_call_operand.vmem [shape: f32[4,4], index: 12, kind: input, shape index: {}]
  %s13 = inlined_call_operand.vmem [shape: f32[1,4], index: 13, kind: input, shape index: {}]
  %s14 = inlined_call_operand.vmem [shape: f32[128,512], index: 14, kind: input, shape index: {}]
  %s15 = inlined_call_operand.vmem [shape: f32[32,128], index: 15, kind: input, shape index: {}]
  %s16 = inlined_call_operand.hbm [shape: f32[2,4], index: 16, kind: output, shape index: {0}]
  %s17 = inlined_call_operand.vmem [shape: f32[32,4], index: 17, kind: output, shape index: {1}]
  %18 = xla_tuple %s16, %s17
  %s19 = sld [smem:[#allocation0]]
  $region82: #{crf_model_forward.1} parent=0
    _
  %s21 = ssub.s32 1, %s19
  %s22 = scalar_select 0, %s21, %s19
  $region1: #{crf_model_forward.1} parent=0
    #allocation6 [shape = 'u8[1024]{0}', space=vmem, size = 0x400, scoped, tag = 'output window, operand 0, single buffered']
    #allocation7 [shape = 's32[1]{0}', space=sflag, size = 0x4, scoped, tag = 'scoped memory for crf_model_forward.1']
    %23 = vsyncpa [#allocation7], 0
    // Predicated region
    $region2: #{crf_model_forward.1} parent=1 // pred_check
      _
    $region3: #{crf_model_forward.1} parent=1 // pred_check_branch
      %25 = sbr.rel (0) target = $region5
    $region4: #{crf_model_forward.1} parent=1 // pred_region
      _
    $region5: #{crf_model_forward.1} parent=1 // pred_fallthru
      _
    // Predicated region
    $region6: #{crf_model_forward.1} parent=1 // pred_check
      _
    $region7: #{crf_model_forward.1} parent=1 // pred_check_branch
      %27 = sbr.rel (0) target = $region9
    $region8: #{crf_model_forward.1} parent=1 // pred_region
      _
    $region9: #{crf_model_forward.1} parent=1 // pred_fallthru
      _
    // Predicated region
    $region10: #{crf_model_forward.1} parent=1 // pred_check
      _
    $region11: #{crf_model_forward.1} parent=1 // pred_check_branch
      %29 = sbr.rel (0) target = $region13
    $region12: #{crf_model_forward.1} parent=1 // pred_region
      _
    $region13: #{crf_model_forward.1} parent=1 // pred_fallthru
      _
    // Predicated region
    $region14: #{crf_model_forward.1} parent=1 // pred_check
      _
    $region15: #{crf_model_forward.1} parent=1 // pred_check_branch
      %31 = sbr.rel (0) target = $region17
    $region16: #{crf_model_forward.1} parent=1 // pred_region
      _
    $region17: #{crf_model_forward.1} parent=1 // pred_fallthru
      _
    // Predicated region
    $region18: #{crf_model_forward.1} parent=1 // pred_check
      _
    $region19: #{crf_model_forward.1} parent=1 // pred_check_branch
      %33 = sbr.rel (0) target = $region21
    $region20: #{crf_model_forward.1} parent=1 // pred_region
      _
    $region21: #{crf_model_forward.1} parent=1 // pred_fallthru
      _
    // Predicated region
    $region22: #{crf_model_forward.1} parent=1 // pred_check
      _
    $region23: #{crf_model_forward.1} parent=1 // pred_check_branch
      %35 = sbr.rel (0) target = $region25
    $region24: #{crf_model_forward.1} parent=1 // pred_region
      _
    $region25: #{crf_model_forward.1} parent=1 // pred_fallthru
      _
    // Predicated region
    $region26: #{crf_model_forward.1} parent=1 // pred_check
      _
    $region27: #{crf_model_forward.1} parent=1 // pred_check_branch
      %37 = sbr.rel (0) target = $region29
    $region28: #{crf_model_forward.1} parent=1 // pred_region
      _
    $region29: #{crf_model_forward.1} parent=1 // pred_fallthru
      _
    // Predicated region
    $region30: #{crf_model_forward.1} parent=1 // pred_check
      _
    $region31: #{crf_model_forward.1} parent=1 // pred_check_branch
      %39 = sbr.rel (0) target = $region33
    $region32: #{crf_model_forward.1} parent=1 // pred_region
      _
    $region33: #{crf_model_forward.1} parent=1 // pred_fallthru
      _
    // Predicated region
    $region34: #{crf_model_forward.1} parent=1 // pred_check
      _
    $region35: #{crf_model_forward.1} parent=1 // pred_check_branch
      %41 = sbr.rel (0) target = $region37
    $region36: #{crf_model_forward.1} parent=1 // pred_region
      _
    $region37: #{crf_model_forward.1} parent=1 // pred_fallthru
      _
    // Predicated region
    $region38: #{crf_model_forward.1} parent=1 // pred_check
      _
    $region39: #{crf_model_forward.1} parent=1 // pred_check_branch
      %43 = sbr.rel (0) target = $region41
    $region40: #{crf_model_forward.1} parent=1 // pred_region
      _
    $region41: #{crf_model_forward.1} parent=1 // pred_fallthru
      _
    // Predicated region
    $region42: #{crf_model_forward.1} parent=1 // pred_check
      _
    $region43: #{crf_model_forward.1} parent=1 // pred_check_branch
      %45 = sbr.rel (0) target = $region45
    $region44: #{crf_model_forward.1} parent=1 // pred_region
      _
    $region45: #{crf_model_forward.1} parent=1 // pred_fallthru
      _
    // Predicated region
    $region46: #{crf_model_forward.1} parent=1 // pred_check
      _
    $region47: #{crf_model_forward.1} parent=1 // pred_check_branch
      %47 = sbr.rel (0) target = $region49
    $region48: #{crf_model_forward.1} parent=1 // pred_region
      _
    $region49: #{crf_model_forward.1} parent=1 // pred_fallthru
      _
    // Predicated region
    $region50: #{crf_model_forward.1} parent=1 // pred_check
      _
    $region51: #{crf_model_forward.1} parent=1 // pred_check_branch
      %49 = sbr.rel (0) target = $region53
    $region52: #{crf_model_forward.1} parent=1 // pred_region
      _
    $region53: #{crf_model_forward.1} parent=1 // pred_fallthru
      _
    // Predicated region
    $region54: #{crf_model_forward.1} parent=1 // pred_check
      _
    $region55: #{crf_model_forward.1} parent=1 // pred_check_branch
      %51 = sbr.rel (0) target = $region57
    $region56: #{crf_model_forward.1} parent=1 // pred_region
      _
    $region57: #{crf_model_forward.1} parent=1 // pred_fallthru
      _
    // Predicated region
    $region58: #{crf_model_forward.1} parent=1 // pred_check
      _
    $region59: #{crf_model_forward.1} parent=1 // pred_check_branch
      %53 = sbr.rel (0) target = $region61
    $region60: #{crf_model_forward.1} parent=1 // pred_region
      _
    $region61: #{crf_model_forward.1} parent=1 // pred_fallthru
      _
    // Predicated region
    $region62: #{crf_model_forward.1} parent=1 // pred_check
      _
    $region63: #{crf_model_forward.1} parent=1 // pred_check_branch
      %55 = sbr.rel (0) target = $region65
    $region64: #{crf_model_forward.1} parent=1 // pred_region
      _
    $region65: #{crf_model_forward.1} parent=1 // pred_fallthru
      _
    %v56 = vld [vmem:[%s0] sm:$0xff]
    %v57 = vld [vmem:[%s0 + $0x8] sm:$0xff]
    %v58 = vld [vmem:[%s0 + $0x10] sm:$0xff]
    %v59 = vld [vmem:[%s0 + $0x18] sm:$0xff]
    %v60 = vld [vmem:[%s0 + $0x20] sm:$0xff]
    %v61 = vld [vmem:[%s0 + $0x28] sm:$0xff]
    %v62 = vld [vmem:[%s0 + $0x30] sm:$0xff]
    %v63 = vld [vmem:[%s0 + $0x38] sm:$0xff]
    %v64 = vld [vmem:[%s0 + $0x40] sm:$0xff]
    %v65 = vld [vmem:[%s0 + $0x48] sm:$0xff]
    %v66 = vld [vmem:[%s0 + $0x50] sm:$0xff]
    %v67 = vld [vmem:[%s0 + $0x58] sm:$0xff]
    %v68 = vld [vmem:[%s0 + $0x60] sm:$0xff]
    %v69 = vld [vmem:[%s0 + $0x68] sm:$0xff]
    %v70 = vld [vmem:[%s0 + $0x70] sm:$0xff]
    %v71 = vld [vmem:[%s0 + $0x78] sm:$0xff]
    %v72 = vld [vmem:[%s0 + $0x80] sm:$0xff]
    %v73 = vld [vmem:[%s0 + $0x88] sm:$0xff]
    %v74 = vld [vmem:[%s0 + $0x90] sm:$0xff]
    %v75 = vld [vmem:[%s0 + $0x98] sm:$0xff]
    %v76 = vld [vmem:[%s0 + $0xa0] sm:$0xff]
    %v77 = vld [vmem:[%s0 + $0xa8] sm:$0xff]
    %v78 = vld [vmem:[%s0 + $0xb0] sm:$0xff]
    %v79 = vld [vmem:[%s0 + $0xb8] sm:$0xff]
    %v80 = vld [vmem:[%s0 + $0xc0] sm:$0xff]
    %v81 = vld [vmem:[%s0 + $0xc8] sm:$0xff]
    %v82 = vld [vmem:[%s0 + $0xd0] sm:$0xff]
    %v83 = vld [vmem:[%s0 + $0xd8] sm:$0xff]
    %v84 = vld [vmem:[%s0 + $0xe0] sm:$0xff]
    %v85 = vld [vmem:[%s0 + $0xe8] sm:$0xff]
    %v86 = vld [vmem:[%s0 + $0xf0] sm:$0xff]
    %v87 = vld [vmem:[%s0 + $0xf8] sm:$0xff]
    %v88 = vld [vmem:[%s0 + $0x100] sm:$0xff]
    %v89 = vld [vmem:[%s0 + $0x108] sm:$0xff]
    %v90 = vld [vmem:[%s0 + $0x110] sm:$0xff]
    %v91 = vld [vmem:[%s0 + $0x118] sm:$0xff]
    %v92 = vld [vmem:[%s0 + $0x120] sm:$0xff]
    %v93 = vld [vmem:[%s0 + $0x128] sm:$0xff]
    %v94 = vld [vmem:[%s0 + $0x130] sm:$0xff]
    %v95 = vld [vmem:[%s0 + $0x138] sm:$0xff]
    %v96 = vld [vmem:[%s0 + $0x140] sm:$0xff]
    %v97 = vld [vmem:[%s0 + $0x148] sm:$0xff]
    %v98 = vld [vmem:[%s0 + $0x150] sm:$0xff]
    %v99 = vld [vmem:[%s0 + $0x158] sm:$0xff]
    %v100 = vld [vmem:[%s0 + $0x160] sm:$0xff]
    %v101 = vld [vmem:[%s0 + $0x168] sm:$0xff]
    %v102 = vld [vmem:[%s0 + $0x170] sm:$0xff]
    %v103 = vld [vmem:[%s0 + $0x178] sm:$0xff]
    %v104 = vld [vmem:[%s0 + $0x180] sm:$0xff]
    %v105 = vld [vmem:[%s0 + $0x188] sm:$0xff]
    %v106 = vld [vmem:[%s0 + $0x190] sm:$0xff]
    %v107 = vld [vmem:[%s0 + $0x198] sm:$0xff]
    %v108 = vld [vmem:[%s0 + $0x1a0] sm:$0xff]
    %v109 = vld [vmem:[%s0 + $0x1a8] sm:$0xff]
    %v110 = vld [vmem:[%s0 + $0x1b0] sm:$0xff]
    %v111 = vld [vmem:[%s0 + $0x1b8] sm:$0xff]
    %v112 = vld [vmem:[%s0 + $0x1c0] sm:$0xff]
    %v113 = vld [vmem:[%s0 + $0x1c8] sm:$0xff]
    %v114 = vld [vmem:[%s0 + $0x1d0] sm:$0xff]
    %v115 = vld [vmem:[%s0 + $0x1d8] sm:$0xff]
    %v116 = vld [vmem:[%s0 + $0x1e0] sm:$0xff]
    %v117 = vld [vmem:[%s0 + $0x1e8] sm:$0xff]
    %v118 = vld [vmem:[%s0 + $0x1f0] sm:$0xff]
    %v119 = vld [vmem:[%s0 + $0x1f8] sm:$0xff]
    %v120 = vld [vmem:[%s1] sm:$0xff]
    %v121 = vld [vmem:[%s1 + $0x8] sm:$0xff]
    %vm122 = vcmask 130048
    %v124 = vsel %vm122, %v56, 0
    %v127 = vsel %vm122, %v57, 0
    %v130 = vsel %vm122, %v58, 0
    %v133 = vsel %vm122, %v59, 0
    %v136 = vsel %vm122, %v60, 0
    %v139 = vsel %vm122, %v61, 0
    %v142 = vsel %vm122, %v62, 0
    %v145 = vsel %vm122, %v63, 0
    %v148 = vsel %vm122, %v64, 0
    %v151 = vsel %vm122, %v65, 0
    %v154 = vsel %vm122, %v66, 0
    %v157 = vsel %vm122, %v67, 0
    %v160 = vsel %vm122, %v68, 0
    %v163 = vsel %vm122, %v69, 0
    %v166 = vsel %vm122, %v70, 0
    %v169 = vsel %vm122, %v71, 0
    %v172 = vsel %vm122, %v72, 0
    %v175 = vsel %vm122, %v73, 0
    %v178 = vsel %vm122, %v74, 0
    %v181 = vsel %vm122, %v75, 0
    %v184 = vsel %vm122, %v76, 0
    %v187 = vsel %vm122, %v77, 0
    %v190 = vsel %vm122, %v78, 0
    %v193 = vsel %vm122, %v79, 0
    %v196 = vsel %vm122, %v80, 0
    %v199 = vsel %vm122, %v81, 0
    %v202 = vsel %vm122, %v82, 0
    %v205 = vsel %vm122, %v83, 0
    %v208 = vsel %vm122, %v84, 0
    %v211 = vsel %vm122, %v85, 0
    %v214 = vsel %vm122, %v86, 0
    %v217 = vsel %vm122, %v87, 0
    %v220 = vsel %vm122, %v88, 0
    %v223 = vsel %vm122, %v89, 0
    %v226 = vsel %vm122, %v90, 0
    %v229 = vsel %vm122, %v91, 0
    %v232 = vsel %vm122, %v92, 0
    %v235 = vsel %vm122, %v93, 0
    %v238 = vsel %vm122, %v94, 0
    %v241 = vsel %vm122, %v95, 0
    %v244 = vsel %vm122, %v96, 0
    %v247 = vsel %vm122, %v97, 0
    %v250 = vsel %vm122, %v98, 0
    %v253 = vsel %vm122, %v99, 0
    %v256 = vsel %vm122, %v100, 0
    %v259 = vsel %vm122, %v101, 0
    %v262 = vsel %vm122, %v102, 0
    %v265 = vsel %vm122, %v103, 0
    %v268 = vsel %vm122, %v104, 0
    %v271 = vsel %vm122, %v105, 0
    %v274 = vsel %vm122, %v106, 0
    %v277 = vsel %vm122, %v107, 0
    %v280 = vsel %vm122, %v108, 0
    %v283 = vsel %vm122, %v109, 0
    %v286 = vsel %vm122, %v110, 0
    %v289 = vsel %vm122, %v111, 0
    %v292 = vsel %vm122, %v112, 0
    %v295 = vsel %vm122, %v113, 0
    %v298 = vsel %vm122, %v114, 0
    %v301 = vsel %vm122, %v115, 0
    %v304 = vsel %vm122, %v116, 0
    %v307 = vsel %vm122, %v117, 0
    %v310 = vsel %vm122, %v118, 0
    %v313 = vsel %vm122, %v119, 0
    %315 = vmatprep.subr.mxu0 0.0
    %316 = vmatpush1.msra.mxu0 0.0
    %317 = vmatprep.subr.mxu0 0.0
    %318 = vmatpush1.msra.mxu0 0.0
    %319 = vmatprep.subr.mxu0 0.0
    %320 = vmatpush1.msra.mxu0 0.0
    %321 = vmatprep.subr.mxu0 0.0
    %322 = vmatpush1.msra.mxu0 0.0
    %323 = vmatprep.subr.mxu0 0.0
    %324 = vmatpush1.msra.mxu0 0.0
    %325 = vmatprep.subr.mxu0 0.0
    %326 = vmatpush1.msra.mxu0 0.0
    %327 = vmatprep.subr.mxu0 0.0
    %328 = vmatpush1.msra.mxu0 0.0
    %329 = vmatprep.subr.mxu0 0.0
    %330 = vmatpush1.msra.mxu0 0.0
    %331 = vmatprep.subr.mxu0 0.0
    %332 = vmatpush1.msra.mxu0 0.0
    %333 = vmatprep.subr.mxu0 0.0
    %334 = vmatpush1.msra.mxu0 0.0
    %335 = vmatprep.subr.mxu0 0.0
    %336 = vmatpush1.msra.mxu0 0.0
    %337 = vmatprep.subr.mxu0 0.0
    %338 = vmatpush1.msra.mxu0 0.0
    %339 = vmatprep.subr.mxu0 0.0
    %340 = vmatpush1.msra.mxu0 0.0
    %341 = vmatprep.subr.mxu0 0.0
    %342 = vmatpush1.msra.mxu0 0.0
    %343 = vmatprep.subr.mxu0 0.0
    %344 = vmatpush1.msra.mxu0 %v121
    %345 = vmatprep.subr.mxu0 0.0
    %346 = vmatpush1.msra.mxu0 %v120
    %347 = vmatprep.subr.mxu0 0.0
    %348 = vmatpush2.msra.mxu0 0.0
    %349 = vmatprep.subr.mxu0 0.0
    %350 = vmatpush2.msra.mxu0 0.0
    %351 = vmatprep.subr.mxu0 0.0
    %352 = vmatpush2.msra.mxu0 0.0
    %353 = vmatprep.subr.mxu0 0.0
    %354 = vmatpush2.msra.mxu0 0.0
    %355 = vmatprep.subr.mxu0 0.0
    %356 = vmatpush2.msra.mxu0 0.0
    %357 = vmatprep.subr.mxu0 0.0
    %358 = vmatpush2.msra.mxu0 0.0
    %359 = vmatprep.subr.mxu0 0.0
    %360 = vmatpush2.msra.mxu0 0.0
    %361 = vmatprep.subr.mxu0 0.0
    %362 = vmatpush2.msra.mxu0 0.0
    %363 = vmatprep.subr.mxu0 0.0
    %364 = vmatpush2.msra.mxu0 0.0
    %365 = vmatprep.subr.mxu0 0.0
    %366 = vmatpush2.msra.mxu0 0.0
    %367 = vmatprep.subr.mxu0 0.0
    %368 = vmatpush2.msra.mxu0 0.0
    %369 = vmatprep.subr.mxu0 0.0
    %370 = vmatpush2.msra.mxu0 0.0
    %371 = vmatprep.subr.mxu0 0.0
    %372 = vmatpush2.msra.mxu0 0.0
    %373 = vmatprep.subr.mxu0 0.0
    %374 = vmatpush2.msra.mxu0 0.0
    %375 = vmatprep.subr.mxu0 0.0
    %376 = vmatpush2.msra.mxu0 0.0
    %377 = vmatprep.subr.mxu0 0.0
    %378 = vmatpush2.msra.mxu0 0.0
    %379 = vmatprep.mubr.f32.mxu0 0.0
    %380 = vmatmul.mubr.f32.gmra.mxu0 %v124
    %v381 = vpop.f32.mrf.mxu0
    %v382 = vadd.f32 0.0, %v381
    %v383 = vpop.f32.mrf.mxu0
    %384 = vmatprep.mubr.f32.mxu0 0.0
    %385 = vmatmul.mubr.f32.gmra.mxu0 %v127
    %v386 = vpop.f32.mrf.mxu0
    %v387 = vadd.f32 0.0, %v386
    %v388 = vpop.f32.mrf.mxu0
    %389 = vmatprep.mubr.f32.mxu0 0.0
    %390 = vmatmul.mubr.f32.gmra.mxu0 %v130
    %v391 = vpop.f32.mrf.mxu0
    %v392 = vadd.f32 0.0, %v391
    %v393 = vpop.f32.mrf.mxu0
    %394 = vmatprep.mubr.f32.mxu0 0.0
    %395 = vmatmul.mubr.f32.gmra.mxu0 %v133
    %v396 = vpop.f32.mrf.mxu0
    %v397 = vadd.f32 0.0, %v396
    %v398 = vpop.f32.mrf.mxu0
    %399 = vmatprep.mubr.f32.mxu0 0.0
    %400 = vmatmul.mubr.f32.gmra.mxu0 %v136
    %v401 = vpop.f32.mrf.mxu0
    %v402 = vadd.f32 0.0, %v401
    %v403 = vpop.f32.mrf.mxu0
    %404 = vmatprep.mubr.f32.mxu0 0.0
    %405 = vmatmul.mubr.f32.gmra.mxu0 %v139
    %v406 = vpop.f32.mrf.mxu0
    %v407 = vadd.f32 0.0, %v406
    %v408 = vpop.f32.mrf.mxu0
    %409 = vmatprep.mubr.f32.mxu0 0.0
    %410 = vmatmul.mubr.f32.gmra.mxu0 %v142
    %v411 = vpop.f32.mrf.mxu0
    %v412 = vadd.f32 0.0, %v411
    %v413 = vpop.f32.mrf.mxu0
    %414 = vmatprep.mubr.f32.mxu0 0.0
    %415 = vmatmul.mubr.f32.gmra.mxu0 %v145
    %v416 = vpop.f32.mrf.mxu0
    %v417 = vadd.f32 0.0, %v416
    %v418 = vpop.f32.mrf.mxu0
    %419 = vmatprep.mubr.f32.mxu0 0.0
    %420 = vmatmul.mubr.f32.gmra.mxu0 %v148
    %v421 = vpop.f32.mrf.mxu0
    %v422 = vadd.f32 0.0, %v421
    %v423 = vpop.f32.mrf.mxu0
    %424 = vmatprep.mubr.f32.mxu0 0.0
    %425 = vmatmul.mubr.f32.gmra.mxu0 %v151
    %v426 = vpop.f32.mrf.mxu0
    %v427 = vadd.f32 0.0, %v426
    %v428 = vpop.f32.mrf.mxu0
    %429 = vmatprep.mubr.f32.mxu0 0.0
    %430 = vmatmul.mubr.f32.gmra.mxu0 %v154
    %v431 = vpop.f32.mrf.mxu0
    %v432 = vadd.f32 0.0, %v431
    %v433 = vpop.f32.mrf.mxu0
    %434 = vmatprep.mubr.f32.mxu0 0.0
    %435 = vmatmul.mubr.f32.gmra.mxu0 %v157
    %v436 = vpop.f32.mrf.mxu0
    %v437 = vadd.f32 0.0, %v436
    %v438 = vpop.f32.mrf.mxu0
    %439 = vmatprep.mubr.f32.mxu0 0.0
    %440 = vmatmul.mubr.f32.gmra.mxu0 %v160
    %v441 = vpop.f32.mrf.mxu0
    %v442 = vadd.f32 0.0, %v441
    %v443 = vpop.f32.mrf.mxu0
    %444 = vmatprep.mubr.f32.mxu0 0.0
    %445 = vmatmul.mubr.f32.gmra.mxu0 %v163
    %v446 = vpop.f32.mrf.mxu0
    %v447 = vadd.f32 0.0, %v446
    %v448 = vpop.f32.mrf.mxu0
    %449 = vmatprep.mubr.f32.mxu0 0.0
    %450 = vmatmul.mubr.f32.gmra.mxu0 %v166
    %v451 = vpop.f32.mrf.mxu0
    %v452 = vadd.f32 0.0, %v451
    %v453 = vpop.f32.mrf.mxu0
    %454 = vmatprep.mubr.f32.mxu0 0.0
    %455 = vmatmul.mubr.f32.gmra.mxu0 %v169
    %v456 = vpop.f32.mrf.mxu0
    %v457 = vadd.f32 0.0, %v456
    %v458 = vpop.f32.mrf.mxu0
    %459 = vmatprep.mubr.f32.mxu0 0.0
    %460 = vmatmul.mubr.f32.gmra.mxu0 %v172
    %v461 = vpop.f32.mrf.mxu0
    %v462 = vadd.f32 0.0, %v461
    %v463 = vpop.f32.mrf.mxu0
    %464 = vmatprep.mubr.f32.mxu0 0.0
    %465 = vmatmul.mubr.f32.gmra.mxu0 %v175
    %v466 = vpop.f32.mrf.mxu0
    %v467 = vadd.f32 0.0, %v466
    %v468 = vpop.f32.mrf.mxu0
    %469 = vmatprep.mubr.f32.mxu0 0.0
    %470 = vmatmul.mubr.f32.gmra.mxu0 %v178
    %v471 = vpop.f32.mrf.mxu0
    %v472 = vadd.f32 0.0, %v471
    %v473 = vpop.f32.mrf.mxu0
    %474 = vmatprep.mubr.f32.mxu0 0.0
    %475 = vmatmul.mubr.f32.gmra.mxu0 %v181
    %v476 = vpop.f32.mrf.mxu0
    %v477 = vadd.f32 0.0, %v476
    %v478 = vpop.f32.mrf.mxu0
    %479 = vmatprep.mubr.f32.mxu0 0.0
    %480 = vmatmul.mubr.f32.gmra.mxu0 %v184
    %v481 = vpop.f32.mrf.mxu0
    %v482 = vadd.f32 0.0, %v481
    %v483 = vpop.f32.mrf.mxu0
    %484 = vmatprep.mubr.f32.mxu0 0.0
    %485 = vmatmul.mubr.f32.gmra.mxu0 %v187
    %v486 = vpop.f32.mrf.mxu0
    %v487 = vadd.f32 0.0, %v486
    %v488 = vpop.f32.mrf.mxu0
    %489 = vmatprep.mubr.f32.mxu0 0.0
    %490 = vmatmul.mubr.f32.gmra.mxu0 %v190
    %v491 = vpop.f32.mrf.mxu0
    %v492 = vadd.f32 0.0, %v491
    %v493 = vpop.f32.mrf.mxu0
    %494 = vmatprep.mubr.f32.mxu0 0.0
    %495 = vmatmul.mubr.f32.gmra.mxu0 %v193
    %v496 = vpop.f32.mrf.mxu0
    %v497 = vadd.f32 0.0, %v496
    %v498 = vpop.f32.mrf.mxu0
    %499 = vmatprep.mubr.f32.mxu0 0.0
    %500 = vmatmul.mubr.f32.gmra.mxu0 %v196
    %v501 = vpop.f32.mrf.mxu0
    %v502 = vadd.f32 0.0, %v501
    %v503 = vpop.f32.mrf.mxu0
    %504 = vmatprep.mubr.f32.mxu0 0.0
    %505 = vmatmul.mubr.f32.gmra.mxu0 %v199
    %v506 = vpop.f32.mrf.mxu0
    %v507 = vadd.f32 0.0, %v506
    %v508 = vpop.f32.mrf.mxu0
    %509 = vmatprep.mubr.f32.mxu0 0.0
    %510 = vmatmul.mubr.f32.gmra.mxu0 %v202
    %v511 = vpop.f32.mrf.mxu0
    %v512 = vadd.f32 0.0, %v511
    %v513 = vpop.f32.mrf.mxu0
    %514 = vmatprep.mubr.f32.mxu0 0.0
    %515 = vmatmul.mubr.f32.gmra.mxu0 %v205
    %v516 = vpop.f32.mrf.mxu0
    %v517 = vadd.f32 0.0, %v516
    %v518 = vpop.f32.mrf.mxu0
    %519 = vmatprep.mubr.f32.mxu0 0.0
    %520 = vmatmul.mubr.f32.gmra.mxu0 %v208
    %v521 = vpop.f32.mrf.mxu0
    %v522 = vadd.f32 0.0, %v521
    %v523 = vpop.f32.mrf.mxu0
    %524 = vmatprep.mubr.f32.mxu0 0.0
    %525 = vmatmul.mubr.f32.gmra.mxu0 %v211
    %v526 = vpop.f32.mrf.mxu0
    %v527 = vadd.f32 0.0, %v526
    %v528 = vpop.f32.mrf.mxu0
    %529 = vmatprep.mubr.f32.mxu0 0.0
    %530 = vmatmul.mubr.f32.gmra.mxu0 %v214
    %v531 = vpop.f32.mrf.mxu0
    %v532 = vadd.f32 0.0, %v531
    %v533 = vpop.f32.mrf.mxu0
    %534 = vmatprep.mubr.f32.mxu0 0.0
    %535 = vmatmul.mubr.f32.gmra.mxu0 %v217
    %v536 = vpop.f32.mrf.mxu0
    %v537 = vadd.f32 0.0, %v536
    %v538 = vpop.f32.mrf.mxu0
    %539 = vmatprep.mubr.f32.mxu0 0.0
    %540 = vmatmul.mubr.f32.gmra.mxu0 %v220
    %v541 = vpop.f32.mrf.mxu0
    %v542 = vadd.f32 0.0, %v541
    %v543 = vpop.f32.mrf.mxu0
    %544 = vmatprep.mubr.f32.mxu0 0.0
    %545 = vmatmul.mubr.f32.gmra.mxu0 %v223
    %v546 = vpop.f32.mrf.mxu0
    %v547 = vadd.f32 0.0, %v546
    %v548 = vpop.f32.mrf.mxu0
    %549 = vmatprep.mubr.f32.mxu0 0.0
    %550 = vmatmul.mubr.f32.gmra.mxu0 %v226
    %v551 = vpop.f32.mrf.mxu0
    %v552 = vadd.f32 0.0, %v551
    %v553 = vpop.f32.mrf.mxu0
    %554 = vmatprep.mubr.f32.mxu0 0.0
    %555 = vmatmul.mubr.f32.gmra.mxu0 %v229
    %v556 = vpop.f32.mrf.mxu0
    %v557 = vadd.f32 0.0, %v556
    %v558 = vpop.f32.mrf.mxu0
    %559 = vmatprep.mubr.f32.mxu0 0.0
    %560 = vmatmul.mubr.f32.gmra.mxu0 %v232
    %v561 = vpop.f32.mrf.mxu0
    %v562 = vadd.f32 0.0, %v561
    %v563 = vpop.f32.mrf.mxu0
    %564 = vmatprep.mubr.f32.mxu0 0.0
    %565 = vmatmul.mubr.f32.gmra.mxu0 %v235
    %v566 = vpop.f32.mrf.mxu0
    %v567 = vadd.f32 0.0, %v566
    %v568 = vpop.f32.mrf.mxu0
    %569 = vmatprep.mubr.f32.mxu0 0.0
    %570 = vmatmul.mubr.f32.gmra.mxu0 %v238
    %v571 = vpop.f32.mrf.mxu0
    %v572 = vadd.f32 0.0, %v571
    %v573 = vpop.f32.mrf.mxu0
    %574 = vmatprep.mubr.f32.mxu0 0.0
    %575 = vmatmul.mubr.f32.gmra.mxu0 %v241
    %v576 = vpop.f32.mrf.mxu0
    %v577 = vadd.f32 0.0, %v576
    %v578 = vpop.f32.mrf.mxu0
    %579 = vmatprep.mubr.f32.mxu0 0.0
    %580 = vmatmul.mubr.f32.gmra.mxu0 %v244
    %v581 = vpop.f32.mrf.mxu0
    %v582 = vadd.f32 0.0, %v581
    %v583 = vpop.f32.mrf.mxu0
    %584 = vmatprep.mubr.f32.mxu0 0.0
    %585 = vmatmul.mubr.f32.gmra.mxu0 %v247
    %v586 = vpop.f32.mrf.mxu0
    %v587 = vadd.f32 0.0, %v586
    %v588 = vpop.f32.mrf.mxu0
    %589 = vmatprep.mubr.f32.mxu0 0.0
    %590 = vmatmul.mubr.f32.gmra.mxu0 %v250
    %v591 = vpop.f32.mrf.mxu0
    %v592 = vadd.f32 0.0, %v591
    %v593 = vpop.f32.mrf.mxu0
    %594 = vmatprep.mubr.f32.mxu0 0.0
    %595 = vmatmul.mubr.f32.gmra.mxu0 %v253
    %v596 = vpop.f32.mrf.mxu0
    %v597 = vadd.f32 0.0, %v596
    %v598 = vpop.f32.mrf.mxu0
    %599 = vmatprep.mubr.f32.mxu0 0.0
    %600 = vmatmul.mubr.f32.gmra.mxu0 %v256
    %v601 = vpop.f32.mrf.mxu0
    %v602 = vadd.f32 0.0, %v601
    %v603 = vpop.f32.mrf.mxu0
    %604 = vmatprep.mubr.f32.mxu0 0.0
    %605 = vmatmul.mubr.f32.gmra.mxu0 %v259
    %v606 = vpop.f32.mrf.mxu0
    %v607 = vadd.f32 0.0, %v606
    %v608 = vpop.f32.mrf.mxu0
    %609 = vmatprep.mubr.f32.mxu0 0.0
    %610 = vmatmul.mubr.f32.gmra.mxu0 %v262
    %v611 = vpop.f32.mrf.mxu0
    %v612 = vadd.f32 0.0, %v611
    %v613 = vpop.f32.mrf.mxu0
    %614 = vmatprep.mubr.f32.mxu0 0.0
    %615 = vmatmul.mubr.f32.gmra.mxu0 %v265
    %v616 = vpop.f32.mrf.mxu0
    %v617 = vadd.f32 0.0, %v616
    %v618 = vpop.f32.mrf.mxu0
    %619 = vmatprep.mubr.f32.mxu0 0.0
    %620 = vmatmul.mubr.f32.gmra.mxu0 %v268
    %v621 = vpop.f32.mrf.mxu0
    %v622 = vadd.f32 0.0, %v621
    %v623 = vpop.f32.mrf.mxu0
    %624 = vmatprep.mubr.f32.mxu0 0.0
    %625 = vmatmul.mubr.f32.gmra.mxu0 %v271
    %v626 = vpop.f32.mrf.mxu0
    %v627 = vadd.f32 0.0, %v626
    %v628 = vpop.f32.mrf.mxu0
    %629 = vmatprep.mubr.f32.mxu0 0.0
    %630 = vmatmul.mubr.f32.gmra.mxu0 %v274
    %v631 = vpop.f32.mrf.mxu0
    %v632 = vadd.f32 0.0, %v631
    %v633 = vpop.f32.mrf.mxu0
    %634 = vmatprep.mubr.f32.mxu0 0.0
    %635 = vmatmul.mubr.f32.gmra.mxu0 %v277
    %v636 = vpop.f32.mrf.mxu0
    %v637 = vadd.f32 0.0, %v636
    %v638 = vpop.f32.mrf.mxu0
    %639 = vmatprep.mubr.f32.mxu0 0.0
    %640 = vmatmul.mubr.f32.gmra.mxu0 %v280
    %v641 = vpop.f32.mrf.mxu0
    %v642 = vadd.f32 0.0, %v641
    %v643 = vpop.f32.mrf.mxu0
    %644 = vmatprep.mubr.f32.mxu0 0.0
    %645 = vmatmul.mubr.f32.gmra.mxu0 %v283
    %v646 = vpop.f32.mrf.mxu0
    %v647 = vadd.f32 0.0, %v646
    %v648 = vpop.f32.mrf.mxu0
    %649 = vmatprep.mubr.f32.mxu0 0.0
    %650 = vmatmul.mubr.f32.gmra.mxu0 %v286
    %v651 = vpop.f32.mrf.mxu0
    %v652 = vadd.f32 0.0, %v651
    %v653 = vpop.f32.mrf.mxu0
    %654 = vmatprep.mubr.f32.mxu0 0.0
    %655 = vmatmul.mubr.f32.gmra.mxu0 %v289
    %v656 = vpop.f32.mrf.mxu0
    %v657 = vadd.f32 0.0, %v656
    %v658 = vpop.f32.mrf.mxu0
    %659 = vmatprep.mubr.f32.mxu0 0.0
    %660 = vmatmul.mubr.f32.gmra.mxu0 %v292
    %v661 = vpop.f32.mrf.mxu0
    %v662 = vadd.f32 0.0, %v661
    %v663 = vpop.f32.mrf.mxu0
    %664 = vmatprep.mubr.f32.mxu0 0.0
    %665 = vmatmul.mubr.f32.gmra.mxu0 %v295
    %v666 = vpop.f32.mrf.mxu0
    %v667 = vadd.f32 0.0, %v666
    %v668 = vpop.f32.mrf.mxu0
    %669 = vmatprep.mubr.f32.mxu0 0.0
    %670 = vmatmul.mubr.f32.gmra.mxu0 %v298
    %v671 = vpop.f32.mrf.mxu0
    %v672 = vadd.f32 0.0, %v671
    %v673 = vpop.f32.mrf.mxu0
    %674 = vmatprep.mubr.f32.mxu0 0.0
    %675 = vmatmul.mubr.f32.gmra.mxu0 %v301
    %v676 = vpop.f32.mrf.mxu0
    %v677 = vadd.f32 0.0, %v676
    %v678 = vpop.f32.mrf.mxu0
    %679 = vmatprep.mubr.f32.mxu0 0.0
    %680 = vmatmul.mubr.f32.gmra.mxu0 %v304
    %v681 = vpop.f32.mrf.mxu0
    %v682 = vadd.f32 0.0, %v681
    %v683 = vpop.f32.mrf.mxu0
    %684 = vmatprep.mubr.f32.mxu0 0.0
    %685 = vmatmul.mubr.f32.gmra.mxu0 %v307
    %v686 = vpop.f32.mrf.mxu0
    %v687 = vadd.f32 0.0, %v686
    %v688 = vpop.f32.mrf.mxu0
    %689 = vmatprep.mubr.f32.mxu0 0.0
    %690 = vmatmul.mubr.f32.gmra.mxu0 %v310
    %v691 = vpop.f32.mrf.mxu0
    %v692 = vadd.f32 0.0, %v691
    %v693 = vpop.f32.mrf.mxu0
    %694 = vmatprep.mubr.f32.mxu0 0.0
    %695 = vmatmul.mubr.f32.gmra.mxu0 %v313
    %v696 = vpop.f32.mrf.mxu0
    %v697 = vadd.f32 0.0, %v696
    %v698 = vpop.f32.mrf.mxu0
    %699 = vdwg.mxu0
    %v700 = vld [vmem:[%s2] sm:$0x1]
    %v702 = vlaneseq
    %v703 = vshrl.u32 %v702, 7
    %v704 = vsub.s32 0, %v703
    %v705 = vrot.slane %v700, %v704
    %v707 = vmul.f32 %v382, %v705
    %v708 = vmul.f32 %v387, %v705
    %v709 = vmul.f32 %v392, %v705
    %v710 = vmul.f32 %v397, %v705
    %v711 = vmul.f32 %v402, %v705
    %v712 = vmul.f32 %v407, %v705
    %v713 = vmul.f32 %v412, %v705
    %v714 = vmul.f32 %v417, %v705
    %v715 = vmul.f32 %v422, %v705
    %v716 = vmul.f32 %v427, %v705
    %v717 = vmul.f32 %v432, %v705
    %v718 = vmul.f32 %v437, %v705
    %v719 = vmul.f32 %v442, %v705
    %v720 = vmul.f32 %v447, %v705
    %v721 = vmul.f32 %v452, %v705
    %v722 = vmul.f32 %v457, %v705
    %v723 = vmul.f32 %v462, %v705
    %v724 = vmul.f32 %v467, %v705
    %v725 = vmul.f32 %v472, %v705
    %v726 = vmul.f32 %v477, %v705
    %v727 = vmul.f32 %v482, %v705
    %v728 = vmul.f32 %v487, %v705
    %v729 = vmul.f32 %v492, %v705
    %v730 = vmul.f32 %v497, %v705
    %v731 = vmul.f32 %v502, %v705
    %v732 = vmul.f32 %v507, %v705
    %v733 = vmul.f32 %v512, %v705
    %v734 = vmul.f32 %v517, %v705
    %v735 = vmul.f32 %v522, %v705
    %v736 = vmul.f32 %v527, %v705
    %v737 = vmul.f32 %v532, %v705
    %v738 = vmul.f32 %v537, %v705
    %v739 = vmul.f32 %v542, %v705
    %v740 = vmul.f32 %v547, %v705
    %v741 = vmul.f32 %v552, %v705
    %v742 = vmul.f32 %v557, %v705
    %v743 = vmul.f32 %v562, %v705
    %v744 = vmul.f32 %v567, %v705
    %v745 = vmul.f32 %v572, %v705
    %v746 = vmul.f32 %v577, %v705
    %v747 = vmul.f32 %v582, %v705
    %v748 = vmul.f32 %v587, %v705
    %v749 = vmul.f32 %v592, %v705
    %v750 = vmul.f32 %v597, %v705
    %v751 = vmul.f32 %v602, %v705
    %v752 = vmul.f32 %v607, %v705
    %v753 = vmul.f32 %v612, %v705
    %v754 = vmul.f32 %v617, %v705
    %v755 = vmul.f32 %v622, %v705
    %v756 = vmul.f32 %v627, %v705
    %v757 = vmul.f32 %v632, %v705
    %v758 = vmul.f32 %v637, %v705
    %v759 = vmul.f32 %v642, %v705
    %v760 = vmul.f32 %v647, %v705
    %v761 = vmul.f32 %v652, %v705
    %v762 = vmul.f32 %v657, %v705
    %v763 = vmul.f32 %v662, %v705
    %v764 = vmul.f32 %v667, %v705
    %v765 = vmul.f32 %v672, %v705
    %v766 = vmul.f32 %v677, %v705
    %v767 = vmul.f32 %v682, %v705
    %v768 = vmul.f32 %v687, %v705
    %v769 = vmul.f32 %v692, %v705
    %v770 = vmul.f32 %v697, %v705
    %v771 = vld [vmem:[%s3] sm:$0x1]
    %v773 = vlaneseq
    %v774 = vshrl.u32 %v773, 7
    %v775 = vsub.s32 0, %v774
    %v776 = vrot.slane %v771, %v775
    %v778 = vadd.f32 %v707, %v776
    %v779 = vadd.f32 %v708, %v776
    %v780 = vadd.f32 %v709, %v776
    %v781 = vadd.f32 %v710, %v776
    %v782 = vadd.f32 %v711, %v776
    %v783 = vadd.f32 %v712, %v776
    %v784 = vadd.f32 %v713, %v776
    %v785 = vadd.f32 %v714, %v776
    %v786 = vadd.f32 %v715, %v776
    %v787 = vadd.f32 %v716, %v776
    %v788 = vadd.f32 %v717, %v776
    %v789 = vadd.f32 %v718, %v776
    %v790 = vadd.f32 %v719, %v776
    %v791 = vadd.f32 %v720, %v776
    %v792 = vadd.f32 %v721, %v776
    %v793 = vadd.f32 %v722, %v776
    %v794 = vadd.f32 %v723, %v776
    %v795 = vadd.f32 %v724, %v776
    %v796 = vadd.f32 %v725, %v776
    %v797 = vadd.f32 %v726, %v776
    %v798 = vadd.f32 %v727, %v776
    %v799 = vadd.f32 %v728, %v776
    %v800 = vadd.f32 %v729, %v776
    %v801 = vadd.f32 %v730, %v776
    %v802 = vadd.f32 %v731, %v776
    %v803 = vadd.f32 %v732, %v776
    %v804 = vadd.f32 %v733, %v776
    %v805 = vadd.f32 %v734, %v776
    %v806 = vadd.f32 %v735, %v776
    %v807 = vadd.f32 %v736, %v776
    %v808 = vadd.f32 %v737, %v776
    %v809 = vadd.f32 %v738, %v776
    %v810 = vadd.f32 %v739, %v776
    %v811 = vadd.f32 %v740, %v776
    %v812 = vadd.f32 %v741, %v776
    %v813 = vadd.f32 %v742, %v776
    %v814 = vadd.f32 %v743, %v776
    %v815 = vadd.f32 %v744, %v776
    %v816 = vadd.f32 %v745, %v776
    %v817 = vadd.f32 %v746, %v776
    %v818 = vadd.f32 %v747, %v776
    %v819 = vadd.f32 %v748, %v776
    %v820 = vadd.f32 %v749, %v776
    %v821 = vadd.f32 %v750, %v776
    %v822 = vadd.f32 %v751, %v776
    %v823 = vadd.f32 %v752, %v776
    %v824 = vadd.f32 %v753, %v776
    %v825 = vadd.f32 %v754, %v776
    %v826 = vadd.f32 %v755, %v776
    %v827 = vadd.f32 %v756, %v776
    %v828 = vadd.f32 %v757, %v776
    %v829 = vadd.f32 %v758, %v776
    %v830 = vadd.f32 %v759, %v776
    %v831 = vadd.f32 %v760, %v776
    %v832 = vadd.f32 %v761, %v776
    %v833 = vadd.f32 %v762, %v776
    %v834 = vadd.f32 %v763, %v776
    %v835 = vadd.f32 %v764, %v776
    %v836 = vadd.f32 %v765, %v776
    %v837 = vadd.f32 %v766, %v776
    %v838 = vadd.f32 %v767, %v776
    %v839 = vadd.f32 %v768, %v776
    %v840 = vadd.f32 %v769, %v776
    %v841 = vadd.f32 %v770, %v776
    %v842 = vmax.f32 %v778, 0.0
    %v843 = vmax.f32 %v779, 0.0
    %v844 = vmax.f32 %v780, 0.0
    %v845 = vmax.f32 %v781, 0.0
    %v846 = vmax.f32 %v782, 0.0
    %v847 = vmax.f32 %v783, 0.0
    %v848 = vmax.f32 %v784, 0.0
    %v849 = vmax.f32 %v785, 0.0
    %v850 = vmax.f32 %v786, 0.0
    %v851 = vmax.f32 %v787, 0.0
    %v852 = vmax.f32 %v788, 0.0
    %v853 = vmax.f32 %v789, 0.0
    %v854 = vmax.f32 %v790, 0.0
    %v855 = vmax.f32 %v791, 0.0
    %v856 = vmax.f32 %v792, 0.0
    %v857 = vmax.f32 %v793, 0.0
    %v858 = vmax.f32 %v794, 0.0
    %v859 = vmax.f32 %v795, 0.0
    %v860 = vmax.f32 %v796, 0.0
    %v861 = vmax.f32 %v797, 0.0
    %v862 = vmax.f32 %v798, 0.0
    %v863 = vmax.f32 %v799, 0.0
    %v864 = vmax.f32 %v800, 0.0
    %v865 = vmax.f32 %v801, 0.0
    %v866 = vmax.f32 %v802, 0.0
    %v867 = vmax.f32 %v803, 0.0
    %v868 = vmax.f32 %v804, 0.0
    %v869 = vmax.f32 %v805, 0.0
    %v870 = vmax.f32 %v806, 0.0
    %v871 = vmax.f32 %v807, 0.0
    %v872 = vmax.f32 %v808, 0.0
    %v873 = vmax.f32 %v809, 0.0
    %v874 = vmax.f32 %v810, 0.0
    %v875 = vmax.f32 %v811, 0.0
    %v876 = vmax.f32 %v812, 0.0
    %v877 = vmax.f32 %v813, 0.0
    %v878 = vmax.f32 %v814, 0.0
    %v879 = vmax.f32 %v815, 0.0
    %v880 = vmax.f32 %v816, 0.0
    %v881 = vmax.f32 %v817, 0.0
    %v882 = vmax.f32 %v818, 0.0
    %v883 = vmax.f32 %v819, 0.0
    %v884 = vmax.f32 %v820, 0.0
    %v885 = vmax.f32 %v821, 0.0
    %v886 = vmax.f32 %v822, 0.0
    %v887 = vmax.f32 %v823, 0.0
    %v888 = vmax.f32 %v824, 0.0
    %v889 = vmax.f32 %v825, 0.0
    %v890 = vmax.f32 %v826, 0.0
    %v891 = vmax.f32 %v827, 0.0
    %v892 = vmax.f32 %v828, 0.0
    %v893 = vmax.f32 %v829, 0.0
    %v894 = vmax.f32 %v830, 0.0
    %v895 = vmax.f32 %v831, 0.0
    %v896 = vmax.f32 %v832, 0.0
    %v897 = vmax.f32 %v833, 0.0
    %v898 = vmax.f32 %v834, 0.0
    %v899 = vmax.f32 %v835, 0.0
    %v900 = vmax.f32 %v836, 0.0
    %v901 = vmax.f32 %v837, 0.0
    %v902 = vmax.f32 %v838, 0.0
    %v903 = vmax.f32 %v839, 0.0
    %v904 = vmax.f32 %v840, 0.0
    %v905 = vmax.f32 %v841, 0.0
    %vm906 = vcmask 261120
    %907 = vst.msk [vmem:[#allocation2] sm:$0xff] %vm906, %v842
    %908 = vst.msk [vmem:[#allocation2 + $0x8] sm:$0xff] %vm906, %v843
    %909 = vst.msk [vmem:[#allocation2 + $0x10] sm:$0xff] %vm906, %v844
    %910 = vst.msk [vmem:[#allocation2 + $0x18] sm:$0xff] %vm906, %v845
    %911 = vst.msk [vmem:[#allocation2 + $0x20] sm:$0xff] %vm906, %v846
    %912 = vst.msk [vmem:[#allocation2 + $0x28] sm:$0xff] %vm906, %v847
    %913 = vst.msk [vmem:[#allocation2 + $0x30] sm:$0xff] %vm906, %v848
    %914 = vst.msk [vmem:[#allocation2 + $0x38] sm:$0xff] %vm906, %v849
    %915 = vst.msk [vmem:[#allocation2 + $0x40] sm:$0xff] %vm906, %v850
    %916 = vst.msk [vmem:[#allocation2 + $0x48] sm:$0xff] %vm906, %v851
    %917 = vst.msk [vmem:[#allocation2 + $0x50] sm:$0xff] %vm906, %v852
    %918 = vst.msk [vmem:[#allocation2 + $0x58] sm:$0xff] %vm906, %v853
    %919 = vst.msk [vmem:[#allocation2 + $0x60] sm:$0xff] %vm906, %v854
    %920 = vst.msk [vmem:[#allocation2 + $0x68] sm:$0xff] %vm906, %v855
    %921 = vst.msk [vmem:[#allocation2 + $0x70] sm:$0xff] %vm906, %v856
    %922 = vst.msk [vmem:[#allocation2 + $0x78] sm:$0xff] %vm906, %v857
    %923 = vst.msk [vmem:[#allocation2 + $0x80] sm:$0xff] %vm906, %v858
    %924 = vst.msk [vmem:[#allocation2 + $0x88] sm:$0xff] %vm906, %v859
    %925 = vst.msk [vmem:[#allocation2 + $0x90] sm:$0xff] %vm906, %v860
    %926 = vst.msk [vmem:[#allocation2 + $0x98] sm:$0xff] %vm906, %v861
    %927 = vst.msk [vmem:[#allocation2 + $0xa0] sm:$0xff] %vm906, %v862
    %928 = vst.msk [vmem:[#allocation2 + $0xa8] sm:$0xff] %vm906, %v863
    %929 = vst.msk [vmem:[#allocation2 + $0xb0] sm:$0xff] %vm906, %v864
    %930 = vst.msk [vmem:[#allocation2 + $0xb8] sm:$0xff] %vm906, %v865
    %931 = vst.msk [vmem:[#allocation2 + $0xc0] sm:$0xff] %vm906, %v866
    %932 = vst.msk [vmem:[#allocation2 + $0xc8] sm:$0xff] %vm906, %v867
    %933 = vst.msk [vmem:[#allocation2 + $0xd0] sm:$0xff] %vm906, %v868
    %934 = vst.msk [vmem:[#allocation2 + $0xd8] sm:$0xff] %vm906, %v869
    %935 = vst.msk [vmem:[#allocation2 + $0xe0] sm:$0xff] %vm906, %v870
    %936 = vst.msk [vmem:[#allocation2 + $0xe8] sm:$0xff] %vm906, %v871
    %937 = vst.msk [vmem:[#allocation2 + $0xf0] sm:$0xff] %vm906, %v872
    %938 = vst.msk [vmem:[#allocation2 + $0xf8] sm:$0xff] %vm906, %v873
    %939 = vst.msk [vmem:[#allocation2 + $0x100] sm:$0xff] %vm906, %v874
    %940 = vst.msk [vmem:[#allocation2 + $0x108] sm:$0xff] %vm906, %v875
    %941 = vst.msk [vmem:[#allocation2 + $0x110] sm:$0xff] %vm906, %v876
    %942 = vst.msk [vmem:[#allocation2 + $0x118] sm:$0xff] %vm906, %v877
    %943 = vst.msk [vmem:[#allocation2 + $0x120] sm:$0xff] %vm906, %v878
    %944 = vst.msk [vmem:[#allocation2 + $0x128] sm:$0xff] %vm906, %v879
    %945 = vst.msk [vmem:[#allocation2 + $0x130] sm:$0xff] %vm906, %v880
    %946 = vst.msk [vmem:[#allocation2 + $0x138] sm:$0xff] %vm906, %v881
    %947 = vst.msk [vmem:[#allocation2 + $0x140] sm:$0xff] %vm906, %v882
    %948 = vst.msk [vmem:[#allocation2 + $0x148] sm:$0xff] %vm906, %v883
    %949 = vst.msk [vmem:[#allocation2 + $0x150] sm:$0xff] %vm906, %v884
    %950 = vst.msk [vmem:[#allocation2 + $0x158] sm:$0xff] %vm906, %v885
    %951 = vst.msk [vmem:[#allocation2 + $0x160] sm:$0xff] %vm906, %v886
    %952 = vst.msk [vmem:[#allocation2 + $0x168] sm:$0xff] %vm906, %v887
    %953 = vst.msk [vmem:[#allocation2 + $0x170] sm:$0xff] %vm906, %v888
    %954 = vst.msk [vmem:[#allocation2 + $0x178] sm:$0xff] %vm906, %v889
    %955 = vst.msk [vmem:[#allocation2 + $0x180] sm:$0xff] %vm906, %v890
    %956 = vst.msk [vmem:[#allocation2 + $0x188] sm:$0xff] %vm906, %v891
    %957 = vst.msk [vmem:[#allocation2 + $0x190] sm:$0xff] %vm906, %v892
    %958 = vst.msk [vmem:[#allocation2 + $0x198] sm:$0xff] %vm906, %v893
    %959 = vst.msk [vmem:[#allocation2 + $0x1a0] sm:$0xff] %vm906, %v894
    %960 = vst.msk [vmem:[#allocation2 + $0x1a8] sm:$0xff] %vm906, %v895
    %961 = vst.msk [vmem:[#allocation2 + $0x1b0] sm:$0xff] %vm906, %v896
    %962 = vst.msk [vmem:[#allocation2 + $0x1b8] sm:$0xff] %vm906, %v897
    %963 = vst.msk [vmem:[#allocation2 + $0x1c0] sm:$0xff] %vm906, %v898
    %964 = vst.msk [vmem:[#allocation2 + $0x1c8] sm:$0xff] %vm906, %v899
    %965 = vst.msk [vmem:[#allocation2 + $0x1d0] sm:$0xff] %vm906, %v900
    %966 = vst.msk [vmem:[#allocation2 + $0x1d8] sm:$0xff] %vm906, %v901
    %967 = vst.msk [vmem:[#allocation2 + $0x1e0] sm:$0xff] %vm906, %v902
    %968 = vst.msk [vmem:[#allocation2 + $0x1e8] sm:$0xff] %vm906, %v903
    %969 = vst.msk [vmem:[#allocation2 + $0x1f0] sm:$0xff] %vm906, %v904
    %970 = vst.msk [vmem:[#allocation2 + $0x1f8] sm:$0xff] %vm906, %v905
    %971 = vst.msk [vmem:[#allocation2 + $0x200] sm:$0xff] %vm906, 0.0
    %972 = vst.msk [vmem:[#allocation2 + $0x208] sm:$0xff] %vm906, 0.0
    %973 = vst.msk [vmem:[#allocation2 + $0x210] sm:$0xff] %vm906, 0.0
    %v974 = vld [vmem:[#allocation2 + $0x1] sm:$0xff]
    %v975 = vld [vmem:[#allocation2 + $0x9] sm:$0xff]
    %v976 = vld [vmem:[#allocation2 + $0x11] sm:$0xff]
    %v977 = vld [vmem:[#allocation2 + $0x19] sm:$0xff]
    %v978 = vld [vmem:[#allocation2 + $0x21] sm:$0xff]
    %v979 = vld [vmem:[#allocation2 + $0x29] sm:$0xff]
    %v980 = vld [vmem:[#allocation2 + $0x31] sm:$0xff]
    %v981 = vld [vmem:[#allocation2 + $0x39] sm:$0xff]
    %v982 = vld [vmem:[#allocation2 + $0x41] sm:$0xff]
    %v983 = vld [vmem:[#allocation2 + $0x49] sm:$0xff]
    %v984 = vld [vmem:[#allocation2 + $0x51] sm:$0xff]
    %v985 = vld [vmem:[#allocation2 + $0x59] sm:$0xff]
    %v986 = vld [vmem:[#allocation2 + $0x61] sm:$0xff]
    %v987 = vld [vmem:[#allocation2 + $0x69] sm:$0xff]
    %v988 = vld [vmem:[#allocation2 + $0x71] sm:$0xff]
    %v989 = vld [vmem:[#allocation2 + $0x79] sm:$0xff]
    %v990 = vld [vmem:[#allocation2 + $0x81] sm:$0xff]
    %v991 = vld [vmem:[#allocation2 + $0x89] sm:$0xff]
    %v992 = vld [vmem:[#allocation2 + $0x91] sm:$0xff]
    %v993 = vld [vmem:[#allocation2 + $0x99] sm:$0xff]
    %v994 = vld [vmem:[#allocation2 + $0xa1] sm:$0xff]
    %v995 = vld [vmem:[#allocation2 + $0xa9] sm:$0xff]
    %v996 = vld [vmem:[#allocation2 + $0xb1] sm:$0xff]
    %v997 = vld [vmem:[#allocation2 + $0xb9] sm:$0xff]
    %v998 = vld [vmem:[#allocation2 + $0xc1] sm:$0xff]
    %v999 = vld [vmem:[#allocation2 + $0xc9] sm:$0xff]
    %v1000 = vld [vmem:[#allocation2 + $0xd1] sm:$0xff]
    %v1001 = vld [vmem:[#allocation2 + $0xd9] sm:$0xff]
    %v1002 = vld [vmem:[#allocation2 + $0xe1] sm:$0xff]
    %v1003 = vld [vmem:[#allocation2 + $0xe9] sm:$0xff]
    %v1004 = vld [vmem:[#allocation2 + $0xf1] sm:$0xff]
    %v1005 = vld [vmem:[#allocation2 + $0xf9] sm:$0xff]
    %v1006 = vld [vmem:[#allocation2 + $0x101] sm:$0xff]
    %v1007 = vld [vmem:[#allocation2 + $0x109] sm:$0xff]
    %v1008 = vld [vmem:[#allocation2 + $0x111] sm:$0xff]
    %v1009 = vld [vmem:[#allocation2 + $0x119] sm:$0xff]
    %v1010 = vld [vmem:[#allocation2 + $0x121] sm:$0xff]
    %v1011 = vld [vmem:[#allocation2 + $0x129] sm:$0xff]
    %v1012 = vld [vmem:[#allocation2 + $0x131] sm:$0xff]
    %v1013 = vld [vmem:[#allocation2 + $0x139] sm:$0xff]
    %v1014 = vld [vmem:[#allocation2 + $0x141] sm:$0xff]
    %v1015 = vld [vmem:[#allocation2 + $0x149] sm:$0xff]
    %v1016 = vld [vmem:[#allocation2 + $0x151] sm:$0xff]
    %v1017 = vld [vmem:[#allocation2 + $0x159] sm:$0xff]
    %v1018 = vld [vmem:[#allocation2 + $0x161] sm:$0xff]
    %v1019 = vld [vmem:[#allocation2 + $0x169] sm:$0xff]
    %v1020 = vld [vmem:[#allocation2 + $0x171] sm:$0xff]
    %v1021 = vld [vmem:[#allocation2 + $0x179] sm:$0xff]
    %v1022 = vld [vmem:[#allocation2 + $0x181] sm:$0xff]
    %v1023 = vld [vmem:[#allocation2 + $0x189] sm:$0xff]
    %v1024 = vld [vmem:[#allocation2 + $0x191] sm:$0xff]
    %v1025 = vld [vmem:[#allocation2 + $0x199] sm:$0xff]
    %v1026 = vld [vmem:[#allocation2 + $0x1a1] sm:$0xff]
    %v1027 = vld [vmem:[#allocation2 + $0x1a9] sm:$0xff]
    %v1028 = vld [vmem:[#allocation2 + $0x1b1] sm:$0xff]
    %v1029 = vld [vmem:[#allocation2 + $0x1b9] sm:$0xff]
    %v1030 = vld [vmem:[#allocation2 + $0x1c1] sm:$0xff]
    %v1031 = vld [vmem:[#allocation2 + $0x1c9] sm:$0xff]
    %v1032 = vld [vmem:[#allocation2 + $0x1d1] sm:$0xff]
    %v1033 = vld [vmem:[#allocation2 + $0x1d9] sm:$0xff]
    %v1034 = vld [vmem:[#allocation2 + $0x1e1] sm:$0xff]
    %v1035 = vld [vmem:[#allocation2 + $0x1e9] sm:$0xff]
    %v1036 = vld [vmem:[#allocation2 + $0x1f1] sm:$0xff]
    %v1037 = vld [vmem:[#allocation2 + $0x1f9] sm:$0xff]
    %v1038 = vmax.f32 %v842, %v974
    %v1039 = vmax.f32 %v843, %v975
    %v1040 = vmax.f32 %v844, %v976
    %v1041 = vmax.f32 %v845, %v977
    %v1042 = vmax.f32 %v846, %v978
    %v1043 = vmax.f32 %v847, %v979
    %v1044 = vmax.f32 %v848, %v980
    %v1045 = vmax.f32 %v849, %v981
    %v1046 = vmax.f32 %v850, %v982
    %v1047 = vmax.f32 %v851, %v983
    %v1048 = vmax.f32 %v852, %v984
    %v1049 = vmax.f32 %v853, %v985
    %v1050 = vmax.f32 %v854, %v986
    %v1051 = vmax.f32 %v855, %v987
    %v1052 = vmax.f32 %v856, %v988
    %v1053 = vmax.f32 %v857, %v989
    %v1054 = vmax.f32 %v858, %v990
    %v1055 = vmax.f32 %v859, %v991
    %v1056 = vmax.f32 %v860, %v992
    %v1057 = vmax.f32 %v861, %v993
    %v1058 = vmax.f32 %v862, %v994
    %v1059 = vmax.f32 %v863, %v995
    %v1060 = vmax.f32 %v864, %v996
    %v1061 = vmax.f32 %v865, %v997
    %v1062 = vmax.f32 %v866, %v998
    %v1063 = vmax.f32 %v867, %v999
    %v1064 = vmax.f32 %v868, %v1000
    %v1065 = vmax.f32 %v869, %v1001
    %v1066 = vmax.f32 %v870, %v1002
    %v1067 = vmax.f32 %v871, %v1003
    %v1068 = vmax.f32 %v872, %v1004
    %v1069 = vmax.f32 %v873, %v1005
    %v1070 = vmax.f32 %v874, %v1006
    %v1071 = vmax.f32 %v875, %v1007
    %v1072 = vmax.f32 %v876, %v1008
    %v1073 = vmax.f32 %v877, %v1009
    %v1074 = vmax.f32 %v878, %v1010
    %v1075 = vmax.f32 %v879, %v1011
    %v1076 = vmax.f32 %v880, %v1012
    %v1077 = vmax.f32 %v881, %v1013
    %v1078 = vmax.f32 %v882, %v1014
    %v1079 = vmax.f32 %v883, %v1015
    %v1080 = vmax.f32 %v884, %v1016
    %v1081 = vmax.f32 %v885, %v1017
    %v1082 = vmax.f32 %v886, %v1018
    %v1083 = vmax.f32 %v887, %v1019
    %v1084 = vmax.f32 %v888, %v1020
    %v1085 = vmax.f32 %v889, %v1021
    %v1086 = vmax.f32 %v890, %v1022
    %v1087 = vmax.f32 %v891, %v1023
    %v1088 = vmax.f32 %v892, %v1024
    %v1089 = vmax.f32 %v893, %v1025
    %v1090 = vmax.f32 %v894, %v1026
    %v1091 = vmax.f32 %v895, %v1027
    %v1092 = vmax.f32 %v896, %v1028
    %v1093 = vmax.f32 %v897, %v1029
    %v1094 = vmax.f32 %v898, %v1030
    %v1095 = vmax.f32 %v899, %v1031
    %v1096 = vmax.f32 %v900, %v1032
    %v1097 = vmax.f32 %v901, %v1033
    %v1098 = vmax.f32 %v902, %v1034
    %v1099 = vmax.f32 %v903, %v1035
    %v1100 = vmax.f32 %v904, %v1036
    %v1101 = vmax.f32 %v905, %v1037
    %v1102 = vld [vmem:[#allocation2 + $0x10] sm:$0xff]
    %v1103 = vld [vmem:[#allocation2 + $0x18] sm:$0xff]
    %v1104 = vld [vmem:[#allocation2 + $0x20] sm:$0xff]
    %v1105 = vld [vmem:[#allocation2 + $0x28] sm:$0xff]
    %v1106 = vld [vmem:[#allocation2 + $0x30] sm:$0xff]
    %v1107 = vld [vmem:[#allocation2 + $0x38] sm:$0xff]
    %v1108 = vld [vmem:[#allocation2 + $0x40] sm:$0xff]
    %v1109 = vld [vmem:[#allocation2 + $0x48] sm:$0xff]
    %v1110 = vld [vmem:[#allocation2 + $0x50] sm:$0xff]
    %v1111 = vld [vmem:[#allocation2 + $0x58] sm:$0xff]
    %v1112 = vld [vmem:[#allocation2 + $0x60] sm:$0xff]
    %v1113 = vld [vmem:[#allocation2 + $0x68] sm:$0xff]
    %v1114 = vld [vmem:[#allocation2 + $0x70] sm:$0xff]
    %v1115 = vld [vmem:[#allocation2 + $0x78] sm:$0xff]
    %v1116 = vld [vmem:[#allocation2 + $0x80] sm:$0xff]
    %v1117 = vld [vmem:[#allocation2 + $0x88] sm:$0xff]
    %v1118 = vld [vmem:[#allocation2 + $0x90] sm:$0xff]
    %v1119 = vld [vmem:[#allocation2 + $0x98] sm:$0xff]
    %v1120 = vld [vmem:[#allocation2 + $0xa0] sm:$0xff]
    %v1121 = vld [vmem:[#allocation2 + $0xa8] sm:$0xff]
    %v1122 = vld [vmem:[#allocation2 + $0xb0] sm:$0xff]
    %v1123 = vld [vmem:[#allocation2 + $0xb8] sm:$0xff]
    %v1124 = vld [vmem:[#allocation2 + $0xc0] sm:$0xff]
    %v1125 = vld [vmem:[#allocation2 + $0xc8] sm:$0xff]
    %v1126 = vld [vmem:[#allocation2 + $0xd0] sm:$0xff]
    %v1127 = vld [vmem:[#allocation2 + $0xd8] sm:$0xff]
    %v1128 = vld [vmem:[#allocation2 + $0xe0] sm:$0xff]
    %v1129 = vld [vmem:[#allocation2 + $0xe8] sm:$0xff]
    %v1130 = vld [vmem:[#allocation2 + $0xf0] sm:$0xff]
    %v1131 = vld [vmem:[#allocation2 + $0xf8] sm:$0xff]
    %v1132 = vld [vmem:[#allocation2 + $0x100] sm:$0xff]
    %v1133 = vld [vmem:[#allocation2 + $0x108] sm:$0xff]
    %v1134 = vld [vmem:[#allocation2 + $0x110] sm:$0xff]
    %v1135 = vld [vmem:[#allocation2 + $0x118] sm:$0xff]
    %v1136 = vld [vmem:[#allocation2 + $0x120] sm:$0xff]
    %v1137 = vld [vmem:[#allocation2 + $0x128] sm:$0xff]
    %v1138 = vld [vmem:[#allocation2 + $0x130] sm:$0xff]
    %v1139 = vld [vmem:[#allocation2 + $0x138] sm:$0xff]
    %v1140 = vld [vmem:[#allocation2 + $0x140] sm:$0xff]
    %v1141 = vld [vmem:[#allocation2 + $0x148] sm:$0xff]
    %v1142 = vld [vmem:[#allocation2 + $0x150] sm:$0xff]
    %v1143 = vld [vmem:[#allocation2 + $0x158] sm:$0xff]
    %v1144 = vld [vmem:[#allocation2 + $0x160] sm:$0xff]
    %v1145 = vld [vmem:[#allocation2 + $0x168] sm:$0xff]
    %v1146 = vld [vmem:[#allocation2 + $0x170] sm:$0xff]
    %v1147 = vld [vmem:[#allocation2 + $0x178] sm:$0xff]
    %v1148 = vld [vmem:[#allocation2 + $0x180] sm:$0xff]
    %v1149 = vld [vmem:[#allocation2 + $0x188] sm:$0xff]
    %v1150 = vld [vmem:[#allocation2 + $0x190] sm:$0xff]
    %v1151 = vld [vmem:[#allocation2 + $0x198] sm:$0xff]
    %v1152 = vld [vmem:[#allocation2 + $0x1a0] sm:$0xff]
    %v1153 = vld [vmem:[#allocation2 + $0x1a8] sm:$0xff]
    %v1154 = vld [vmem:[#allocation2 + $0x1b0] sm:$0xff]
    %v1155 = vld [vmem:[#allocation2 + $0x1b8] sm:$0xff]
    %v1156 = vld [vmem:[#allocation2 + $0x1c0] sm:$0xff]
    %v1157 = vld [vmem:[#allocation2 + $0x1c8] sm:$0xff]
    %v1158 = vld [vmem:[#allocation2 + $0x1d0] sm:$0xff]
    %v1159 = vld [vmem:[#allocation2 + $0x1d8] sm:$0xff]
    %v1160 = vld [vmem:[#allocation2 + $0x1e0] sm:$0xff]
    %v1161 = vld [vmem:[#allocation2 + $0x1e8] sm:$0xff]
    %v1162 = vld [vmem:[#allocation2 + $0x1f0] sm:$0xff]
    %v1163 = vld [vmem:[#allocation2 + $0x1f8] sm:$0xff]
    %v1164 = vld [vmem:[#allocation2 + $0x200] sm:$0xff]
    %v1165 = vld [vmem:[#allocation2 + $0x208] sm:$0xff]
    %v1166 = vld [vmem:[#allocation2 + $0x201] sm:$0xff]
    %v1167 = vld [vmem:[#allocation2 + $0x209] sm:$0xff]
    %v1168 = vmax.f32 %v1102, %v976
    %v1169 = vmax.f32 %v1103, %v977
    %v1170 = vmax.f32 %v1104, %v978
    %v1171 = vmax.f32 %v1105, %v979
    %v1172 = vmax.f32 %v1106, %v980
    %v1173 = vmax.f32 %v1107, %v981
    %v1174 = vmax.f32 %v1108, %v982
    %v1175 = vmax.f32 %v1109, %v983
    %v1176 = vmax.f32 %v1110, %v984
    %v1177 = vmax.f32 %v1111, %v985
    %v1178 = vmax.f32 %v1112, %v986
    %v1179 = vmax.f32 %v1113, %v987
    %v1180 = vmax.f32 %v1114, %v988
    %v1181 = vmax.f32 %v1115, %v989
    %v1182 = vmax.f32 %v1116, %v990
    %v1183 = vmax.f32 %v1117, %v991
    %v1184 = vmax.f32 %v1118, %v992
    %v1185 = vmax.f32 %v1119, %v993
    %v1186 = vmax.f32 %v1120, %v994
    %v1187 = vmax.f32 %v1121, %v995
    %v1188 = vmax.f32 %v1122, %v996
    %v1189 = vmax.f32 %v1123, %v997
    %v1190 = vmax.f32 %v1124, %v998
    %v1191 = vmax.f32 %v1125, %v999
    %v1192 = vmax.f32 %v1126, %v1000
    %v1193 = vmax.f32 %v1127, %v1001
    %v1194 = vmax.f32 %v1128, %v1002
    %v1195 = vmax.f32 %v1129, %v1003
    %v1196 = vmax.f32 %v1130, %v1004
    %v1197 = vmax.f32 %v1131, %v1005
    %v1198 = vmax.f32 %v1132, %v1006
    %v1199 = vmax.f32 %v1133, %v1007
    %v1200 = vmax.f32 %v1134, %v1008
    %v1201 = vmax.f32 %v1135, %v1009
    %v1202 = vmax.f32 %v1136, %v1010
    %v1203 = vmax.f32 %v1137, %v1011
    %v1204 = vmax.f32 %v1138, %v1012
    %v1205 = vmax.f32 %v1139, %v1013
    %v1206 = vmax.f32 %v1140, %v1014
    %v1207 = vmax.f32 %v1141, %v1015
    %v1208 = vmax.f32 %v1142, %v1016
    %v1209 = vmax.f32 %v1143, %v1017
    %v1210 = vmax.f32 %v1144, %v1018
    %v1211 = vmax.f32 %v1145, %v1019
    %v1212 = vmax.f32 %v1146, %v1020
    %v1213 = vmax.f32 %v1147, %v1021
    %v1214 = vmax.f32 %v1148, %v1022
    %v1215 = vmax.f32 %v1149, %v1023
    %v1216 = vmax.f32 %v1150, %v1024
    %v1217 = vmax.f32 %v1151, %v1025
    %v1218 = vmax.f32 %v1152, %v1026
    %v1219 = vmax.f32 %v1153, %v1027
    %v1220 = vmax.f32 %v1154, %v1028
    %v1221 = vmax.f32 %v1155, %v1029
    %v1222 = vmax.f32 %v1156, %v1030
    %v1223 = vmax.f32 %v1157, %v1031
    %v1224 = vmax.f32 %v1158, %v1032
    %v1225 = vmax.f32 %v1159, %v1033
    %v1226 = vmax.f32 %v1160, %v1034
    %v1227 = vmax.f32 %v1161, %v1035
    %v1228 = vmax.f32 %v1162, %v1036
    %v1229 = vmax.f32 %v1163, %v1037
    %v1230 = vmax.f32 %v1164, %v1166
    %v1231 = vmax.f32 %v1165, %v1167
    %v1232 = vmax.f32 %v1038, %v1168
    %v1233 = vmax.f32 %v1039, %v1169
    %v1234 = vmax.f32 %v1040, %v1170
    %v1235 = vmax.f32 %v1041, %v1171
    %v1236 = vmax.f32 %v1042, %v1172
    %v1237 = vmax.f32 %v1043, %v1173
    %v1238 = vmax.f32 %v1044, %v1174
    %v1239 = vmax.f32 %v1045, %v1175
    %v1240 = vmax.f32 %v1046, %v1176
    %v1241 = vmax.f32 %v1047, %v1177
    %v1242 = vmax.f32 %v1048, %v1178
    %v1243 = vmax.f32 %v1049, %v1179
    %v1244 = vmax.f32 %v1050, %v1180
    %v1245 = vmax.f32 %v1051, %v1181
    %v1246 = vmax.f32 %v1052, %v1182
    %v1247 = vmax.f32 %v1053, %v1183
    %v1248 = vmax.f32 %v1054, %v1184
    %v1249 = vmax.f32 %v1055, %v1185
    %v1250 = vmax.f32 %v1056, %v1186
    %v1251 = vmax.f32 %v1057, %v1187
    %v1252 = vmax.f32 %v1058, %v1188
    %v1253 = vmax.f32 %v1059, %v1189
    %v1254 = vmax.f32 %v1060, %v1190
    %v1255 = vmax.f32 %v1061, %v1191
    %v1256 = vmax.f32 %v1062, %v1192
    %v1257 = vmax.f32 %v1063, %v1193
    %v1258 = vmax.f32 %v1064, %v1194
    %v1259 = vmax.f32 %v1065, %v1195
    %v1260 = vmax.f32 %v1066, %v1196
    %v1261 = vmax.f32 %v1067, %v1197
    %v1262 = vmax.f32 %v1068, %v1198
    %v1263 = vmax.f32 %v1069, %v1199
    %v1264 = vmax.f32 %v1070, %v1200
    %v1265 = vmax.f32 %v1071, %v1201
    %v1266 = vmax.f32 %v1072, %v1202
    %v1267 = vmax.f32 %v1073, %v1203
    %v1268 = vmax.f32 %v1074, %v1204
    %v1269 = vmax.f32 %v1075, %v1205
    %v1270 = vmax.f32 %v1076, %v1206
    %v1271 = vmax.f32 %v1077, %v1207
    %v1272 = vmax.f32 %v1078, %v1208
    %v1273 = vmax.f32 %v1079, %v1209
    %v1274 = vmax.f32 %v1080, %v1210
    %v1275 = vmax.f32 %v1081, %v1211
    %v1276 = vmax.f32 %v1082, %v1212
    %v1277 = vmax.f32 %v1083, %v1213
    %v1278 = vmax.f32 %v1084, %v1214
    %v1279 = vmax.f32 %v1085, %v1215
    %v1280 = vmax.f32 %v1086, %v1216
    %v1281 = vmax.f32 %v1087, %v1217
    %v1282 = vmax.f32 %v1088, %v1218
    %v1283 = vmax.f32 %v1089, %v1219
    %v1284 = vmax.f32 %v1090, %v1220
    %v1285 = vmax.f32 %v1091, %v1221
    %v1286 = vmax.f32 %v1092, %v1222
    %v1287 = vmax.f32 %v1093, %v1223
    %v1288 = vmax.f32 %v1094, %v1224
    %v1289 = vmax.f32 %v1095, %v1225
    %v1290 = vmax.f32 %v1096, %v1226
    %v1291 = vmax.f32 %v1097, %v1227
    %v1292 = vmax.f32 %v1098, %v1228
    %v1293 = vmax.f32 %v1099, %v1229
    %v1294 = vmax.f32 %v1100, %v1230
    %v1295 = vmax.f32 %v1101, %v1231
    %v1296 = vld [vmem:[%s14] sm:$0xff]
    %v1297 = vld [vmem:[%s14 + $0x8] sm:$0xff]
    %v1298 = vld [vmem:[%s14 + $0x10] sm:$0xff]
    %v1299 = vld [vmem:[%s14 + $0x18] sm:$0xff]
    %v1300 = vld [vmem:[%s14 + $0x20] sm:$0xff]
    %v1301 = vld [vmem:[%s14 + $0x28] sm:$0xff]
    %v1302 = vld [vmem:[%s14 + $0x30] sm:$0xff]
    %v1303 = vld [vmem:[%s14 + $0x38] sm:$0xff]
    %v1304 = vld [vmem:[%s14 + $0x40] sm:$0xff]
    %v1305 = vld [vmem:[%s14 + $0x48] sm:$0xff]
    %v1306 = vld [vmem:[%s14 + $0x50] sm:$0xff]
    %v1307 = vld [vmem:[%s14 + $0x58] sm:$0xff]
    %v1308 = vld [vmem:[%s14 + $0x60] sm:$0xff]
    %v1309 = vld [vmem:[%s14 + $0x68] sm:$0xff]
    %v1310 = vld [vmem:[%s14 + $0x70] sm:$0xff]
    %v1311 = vld [vmem:[%s14 + $0x78] sm:$0xff]
    %v1312 = vld [vmem:[%s14 + $0x80] sm:$0xff]
    %v1313 = vld [vmem:[%s14 + $0x88] sm:$0xff]
    %v1314 = vld [vmem:[%s14 + $0x90] sm:$0xff]
    %v1315 = vld [vmem:[%s14 + $0x98] sm:$0xff]
    %v1316 = vld [vmem:[%s14 + $0xa0] sm:$0xff]
    %v1317 = vld [vmem:[%s14 + $0xa8] sm:$0xff]
    %v1318 = vld [vmem:[%s14 + $0xb0] sm:$0xff]
    %v1319 = vld [vmem:[%s14 + $0xb8] sm:$0xff]
    %v1320 = vld [vmem:[%s14 + $0xc0] sm:$0xff]
    %v1321 = vld [vmem:[%s14 + $0xc8] sm:$0xff]
    %v1322 = vld [vmem:[%s14 + $0xd0] sm:$0xff]
    %v1323 = vld [vmem:[%s14 + $0xd8] sm:$0xff]
    %v1324 = vld [vmem:[%s14 + $0xe0] sm:$0xff]
    %v1325 = vld [vmem:[%s14 + $0xe8] sm:$0xff]
    %v1326 = vld [vmem:[%s14 + $0xf0] sm:$0xff]
    %v1327 = vld [vmem:[%s14 + $0xf8] sm:$0xff]
    %v1328 = vld [vmem:[%s14 + $0x100] sm:$0xff]
    %v1329 = vld [vmem:[%s14 + $0x108] sm:$0xff]
    %v1330 = vld [vmem:[%s14 + $0x110] sm:$0xff]
    %v1331 = vld [vmem:[%s14 + $0x118] sm:$0xff]
    %v1332 = vld [vmem:[%s14 + $0x120] sm:$0xff]
    %v1333 = vld [vmem:[%s14 + $0x128] sm:$0xff]
    %v1334 = vld [vmem:[%s14 + $0x130] sm:$0xff]
    %v1335 = vld [vmem:[%s14 + $0x138] sm:$0xff]
    %v1336 = vld [vmem:[%s14 + $0x140] sm:$0xff]
    %v1337 = vld [vmem:[%s14 + $0x148] sm:$0xff]
    %v1338 = vld [vmem:[%s14 + $0x150] sm:$0xff]
    %v1339 = vld [vmem:[%s14 + $0x158] sm:$0xff]
    %v1340 = vld [vmem:[%s14 + $0x160] sm:$0xff]
    %v1341 = vld [vmem:[%s14 + $0x168] sm:$0xff]
    %v1342 = vld [vmem:[%s14 + $0x170] sm:$0xff]
    %v1343 = vld [vmem:[%s14 + $0x178] sm:$0xff]
    %v1344 = vld [vmem:[%s14 + $0x180] sm:$0xff]
    %v1345 = vld [vmem:[%s14 + $0x188] sm:$0xff]
    %v1346 = vld [vmem:[%s14 + $0x190] sm:$0xff]
    %v1347 = vld [vmem:[%s14 + $0x198] sm:$0xff]
    %v1348 = vld [vmem:[%s14 + $0x1a0] sm:$0xff]
    %v1349 = vld [vmem:[%s14 + $0x1a8] sm:$0xff]
    %v1350 = vld [vmem:[%s14 + $0x1b0] sm:$0xff]
    %v1351 = vld [vmem:[%s14 + $0x1b8] sm:$0xff]
    %v1352 = vld [vmem:[%s14 + $0x1c0] sm:$0xff]
    %v1353 = vld [vmem:[%s14 + $0x1c8] sm:$0xff]
    %v1354 = vld [vmem:[%s14 + $0x1d0] sm:$0xff]
    %v1355 = vld [vmem:[%s14 + $0x1d8] sm:$0xff]
    %v1356 = vld [vmem:[%s14 + $0x1e0] sm:$0xff]
    %v1357 = vld [vmem:[%s14 + $0x1e8] sm:$0xff]
    %v1358 = vld [vmem:[%s14 + $0x1f0] sm:$0xff]
    %v1359 = vld [vmem:[%s14 + $0x1f8] sm:$0xff]
    %1360 = vmatprep.subr.mxu0 0.0
    %1361 = vmatpush1.msra.mxu0 %v1247
    %1362 = vmatprep.subr.mxu0 0.0
    %1363 = vmatpush1.msra.mxu0 %v1246
    %1364 = vmatprep.subr.mxu0 0.0
    %1365 = vmatpush1.msra.mxu0 %v1245
    %1366 = vmatprep.subr.mxu0 0.0
    %1367 = vmatpush1.msra.mxu0 %v1244
    %1368 = vmatprep.subr.mxu0 0.0
    %1369 = vmatpush1.msra.mxu0 %v1243
    %1370 = vmatprep.subr.mxu0 0.0
    %1371 = vmatpush1.msra.mxu0 %v1242
    %1372 = vmatprep.subr.mxu0 0.0
    %1373 = vmatpush1.msra.mxu0 %v1241
    %1374 = vmatprep.subr.mxu0 0.0
    %1375 = vmatpush1.msra.mxu0 %v1240
    %1376 = vmatprep.subr.mxu0 0.0
    %1377 = vmatpush1.msra.mxu0 %v1239
    %1378 = vmatprep.subr.mxu0 0.0
    %1379 = vmatpush1.msra.mxu0 %v1238
    %1380 = vmatprep.subr.mxu0 0.0
    %1381 = vmatpush1.msra.mxu0 %v1237
    %1382 = vmatprep.subr.mxu0 0.0
    %1383 = vmatpush1.msra.mxu0 %v1236
    %1384 = vmatprep.subr.mxu0 0.0
    %1385 = vmatpush1.msra.mxu0 %v1235
    %1386 = vmatprep.subr.mxu0 0.0
    %1387 = vmatpush1.msra.mxu0 %v1234
    %1388 = vmatprep.subr.mxu0 0.0
    %1389 = vmatpush1.msra.mxu0 %v1233
    %1390 = vmatprep.subr.mxu0 0.0
    %1391 = vmatpush1.msra.mxu0 %v1232
    %1392 = vmatprep.subr.mxu0 0.0
    %1393 = vmatpush2.msra.mxu0 %v1263
    %1394 = vmatprep.subr.mxu0 0.0
    %1395 = vmatpush2.msra.mxu0 %v1262
    %1396 = vmatprep.subr.mxu0 0.0
    %1397 = vmatpush2.msra.mxu0 %v1261
    %1398 = vmatprep.subr.mxu0 0.0
    %1399 = vmatpush2.msra.mxu0 %v1260
    %1400 = vmatprep.subr.mxu0 0.0
    %1401 = vmatpush2.msra.mxu0 %v1259
    %1402 = vmatprep.subr.mxu0 0.0
    %1403 = vmatpush2.msra.mxu0 %v1258
    %1404 = vmatprep.subr.mxu0 0.0
    %1405 = vmatpush2.msra.mxu0 %v1257
    %1406 = vmatprep.subr.mxu0 0.0
    %1407 = vmatpush2.msra.mxu0 %v1256
    %1408 = vmatprep.subr.mxu0 0.0
    %1409 = vmatpush2.msra.mxu0 %v1255
    %1410 = vmatprep.subr.mxu0 0.0
    %1411 = vmatpush2.msra.mxu0 %v1254
    %1412 = vmatprep.subr.mxu0 0.0
    %1413 = vmatpush2.msra.mxu0 %v1253
    %1414 = vmatprep.subr.mxu0 0.0
    %1415 = vmatpush2.msra.mxu0 %v1252
    %1416 = vmatprep.subr.mxu0 0.0
    %1417 = vmatpush2.msra.mxu0 %v1251
    %1418 = vmatprep.subr.mxu0 0.0
    %1419 = vmatpush2.msra.mxu0 %v1250
    %1420 = vmatprep.subr.mxu0 0.0
    %1421 = vmatpush2.msra.mxu0 %v1249
    %1422 = vmatprep.subr.mxu0 0.0
    %1423 = vmatpush2.msra.mxu0 %v1248
    %1424 = vmatprep.mubr.f32.mxu0 %v1297
    %1425 = vmatmul.mubr.f32.gmra.mxu0 %v1296
    %v1426 = vpop.f32.mrf.mxu0
    %v1427 = vadd.f32 0.0, %v1426
    %v1428 = vpop.f32.mrf.mxu0
    %1429 = vmatprep.mubr.f32.mxu0 %v1301
    %1430 = vmatmul.mubr.f32.gmra.mxu0 %v1300
    %v1431 = vpop.f32.mrf.mxu0
    %v1432 = vadd.f32 0.0, %v1431
    %v1433 = vpop.f32.mrf.mxu0
    %1434 = vmatprep.mubr.f32.mxu0 %v1305
    %1435 = vmatmul.mubr.f32.gmra.mxu0 %v1304
    %v1436 = vpop.f32.mrf.mxu0
    %v1437 = vadd.f32 0.0, %v1436
    %v1438 = vpop.f32.mrf.mxu0
    %1439 = vmatprep.mubr.f32.mxu0 %v1309
    %1440 = vmatmul.mubr.f32.gmra.mxu0 %v1308
    %v1441 = vpop.f32.mrf.mxu0
    %v1442 = vadd.f32 0.0, %v1441
    %v1443 = vpop.f32.mrf.mxu0
    %1444 = vmatprep.mubr.f32.mxu0 %v1313
    %1445 = vmatmul.mubr.f32.gmra.mxu0 %v1312
    %v1446 = vpop.f32.mrf.mxu0
    %v1447 = vadd.f32 0.0, %v1446
    %v1448 = vpop.f32.mrf.mxu0
    %1449 = vmatprep.mubr.f32.mxu0 %v1317
    %1450 = vmatmul.mubr.f32.gmra.mxu0 %v1316
    %v1451 = vpop.f32.mrf.mxu0
    %v1452 = vadd.f32 0.0, %v1451
    %v1453 = vpop.f32.mrf.mxu0
    %1454 = vmatprep.mubr.f32.mxu0 %v1321
    %1455 = vmatmul.mubr.f32.gmra.mxu0 %v1320
    %v1456 = vpop.f32.mrf.mxu0
    %v1457 = vadd.f32 0.0, %v1456
    %v1458 = vpop.f32.mrf.mxu0
    %1459 = vmatprep.mubr.f32.mxu0 %v1325
    %1460 = vmatmul.mubr.f32.gmra.mxu0 %v1324
    %v1461 = vpop.f32.mrf.mxu0
    %v1462 = vadd.f32 0.0, %v1461
    %v1463 = vpop.f32.mrf.mxu0
    %1464 = vmatprep.mubr.f32.mxu0 %v1329
    %1465 = vmatmul.mubr.f32.gmra.mxu0 %v1328
    %v1466 = vpop.f32.mrf.mxu0
    %v1467 = vadd.f32 0.0, %v1466
    %v1468 = vpop.f32.mrf.mxu0
    %1469 = vmatprep.mubr.f32.mxu0 %v1333
    %1470 = vmatmul.mubr.f32.gmra.mxu0 %v1332
    %v1471 = vpop.f32.mrf.mxu0
    %v1472 = vadd.f32 0.0, %v1471
    %v1473 = vpop.f32.mrf.mxu0
    %1474 = vmatprep.mubr.f32.mxu0 %v1337
    %1475 = vmatmul.mubr.f32.gmra.mxu0 %v1336
    %v1476 = vpop.f32.mrf.mxu0
    %v1477 = vadd.f32 0.0, %v1476
    %v1478 = vpop.f32.mrf.mxu0
    %1479 = vmatprep.mubr.f32.mxu0 %v1341
    %1480 = vmatmul.mubr.f32.gmra.mxu0 %v1340
    %v1481 = vpop.f32.mrf.mxu0
    %v1482 = vadd.f32 0.0, %v1481
    %v1483 = vpop.f32.mrf.mxu0
    %1484 = vmatprep.mubr.f32.mxu0 %v1345
    %1485 = vmatmul.mubr.f32.gmra.mxu0 %v1344
    %v1486 = vpop.f32.mrf.mxu0
    %v1487 = vadd.f32 0.0, %v1486
    %v1488 = vpop.f32.mrf.mxu0
    %1489 = vmatprep.mubr.f32.mxu0 %v1349
    %1490 = vmatmul.mubr.f32.gmra.mxu0 %v1348
    %v1491 = vpop.f32.mrf.mxu0
    %v1492 = vadd.f32 0.0, %v1491
    %v1493 = vpop.f32.mrf.mxu0
    %1494 = vmatprep.mubr.f32.mxu0 %v1353
    %1495 = vmatmul.mubr.f32.gmra.mxu0 %v1352
    %v1496 = vpop.f32.mrf.mxu0
    %v1497 = vadd.f32 0.0, %v1496
    %v1498 = vpop.f32.mrf.mxu0
    %1499 = vmatprep.mubr.f32.mxu0 %v1357
    %1500 = vmatmul.mubr.f32.gmra.mxu0 %v1356
    %v1501 = vpop.f32.mrf.mxu0
    %v1502 = vadd.f32 0.0, %v1501
    %v1503 = vpop.f32.mrf.mxu0
    %1504 = vdwg.mxu0
    %1505 = vmatprep.subr.mxu0 0.0
    %1506 = vmatpush1.msra.mxu0 %v1279
    %1507 = vmatprep.subr.mxu0 0.0
    %1508 = vmatpush1.msra.mxu0 %v1278
    %1509 = vmatprep.subr.mxu0 0.0
    %1510 = vmatpush1.msra.mxu0 %v1277
    %1511 = vmatprep.subr.mxu0 0.0
    %1512 = vmatpush1.msra.mxu0 %v1276
    %1513 = vmatprep.subr.mxu0 0.0
    %1514 = vmatpush1.msra.mxu0 %v1275
    %1515 = vmatprep.subr.mxu0 0.0
    %1516 = vmatpush1.msra.mxu0 %v1274
    %1517 = vmatprep.subr.mxu0 0.0
    %1518 = vmatpush1.msra.mxu0 %v1273
    %1519 = vmatprep.subr.mxu0 0.0
    %1520 = vmatpush1.msra.mxu0 %v1272
    %1521 = vmatprep.subr.mxu0 0.0
    %1522 = vmatpush1.msra.mxu0 %v1271
    %1523 = vmatprep.subr.mxu0 0.0
    %1524 = vmatpush1.msra.mxu0 %v1270
    %1525 = vmatprep.subr.mxu0 0.0
    %1526 = vmatpush1.msra.mxu0 %v1269
    %1527 = vmatprep.subr.mxu0 0.0
    %1528 = vmatpush1.msra.mxu0 %v1268
    %1529 = vmatprep.subr.mxu0 0.0
    %1530 = vmatpush1.msra.mxu0 %v1267
    %1531 = vmatprep.subr.mxu0 0.0
    %1532 = vmatpush1.msra.mxu0 %v1266
    %1533 = vmatprep.subr.mxu0 0.0
    %1534 = vmatpush1.msra.mxu0 %v1265
    %1535 = vmatprep.subr.mxu0 0.0
    %1536 = vmatpush1.msra.mxu0 %v1264
    %1537 = vmatprep.subr.mxu0 0.0
    %1538 = vmatpush2.msra.mxu0 %v1295
    %1539 = vmatprep.subr.mxu0 0.0
    %1540 = vmatpush2.msra.mxu0 %v1294
    %1541 = vmatprep.subr.mxu0 0.0
    %1542 = vmatpush2.msra.mxu0 %v1293
    %1543 = vmatprep.subr.mxu0 0.0
    %1544 = vmatpush2.msra.mxu0 %v1292
    %1545 = vmatprep.subr.mxu0 0.0
    %1546 = vmatpush2.msra.mxu0 %v1291
    %1547 = vmatprep.subr.mxu0 0.0
    %1548 = vmatpush2.msra.mxu0 %v1290
    %1549 = vmatprep.subr.mxu0 0.0
    %1550 = vmatpush2.msra.mxu0 %v1289
    %1551 = vmatprep.subr.mxu0 0.0
    %1552 = vmatpush2.msra.mxu0 %v1288
    %1553 = vmatprep.subr.mxu0 0.0
    %1554 = vmatpush2.msra.mxu0 %v1287
    %1555 = vmatprep.subr.mxu0 0.0
    %1556 = vmatpush2.msra.mxu0 %v1286
    %1557 = vmatprep.subr.mxu0 0.0
    %1558 = vmatpush2.msra.mxu0 %v1285
    %1559 = vmatprep.subr.mxu0 0.0
    %1560 = vmatpush2.msra.mxu0 %v1284
    %1561 = vmatprep.subr.mxu0 0.0
    %1562 = vmatpush2.msra.mxu0 %v1283
    %1563 = vmatprep.subr.mxu0 0.0
    %1564 = vmatpush2.msra.mxu0 %v1282
    %1565 = vmatprep.subr.mxu0 0.0
    %1566 = vmatpush2.msra.mxu0 %v1281
    %1567 = vmatprep.subr.mxu0 0.0
    %1568 = vmatpush2.msra.mxu0 %v1280
    %1569 = vmatprep.mubr.f32.mxu0 %v1299
    %1570 = vmatmul.mubr.f32.gmra.mxu0 %v1298
    %v1571 = vpop.f32.mrf.mxu0
    %v1572 = vadd.f32 %v1427, %v1571
    %v1573 = vpop.f32.mrf.mxu0
    %1574 = vmatprep.mubr.f32.mxu0 %v1303
    %1575 = vmatmul.mubr.f32.gmra.mxu0 %v1302
    %v1576 = vpop.f32.mrf.mxu0
    %v1577 = vadd.f32 %v1432, %v1576
    %v1578 = vpop.f32.mrf.mxu0
    %1579 = vmatprep.mubr.f32.mxu0 %v1307
    %1580 = vmatmul.mubr.f32.gmra.mxu0 %v1306
    %v1581 = vpop.f32.mrf.mxu0
    %v1582 = vadd.f32 %v1437, %v1581
    %v1583 = vpop.f32.mrf.mxu0
    %1584 = vmatprep.mubr.f32.mxu0 %v1311
    %1585 = vmatmul.mubr.f32.gmra.mxu0 %v1310
    %v1586 = vpop.f32.mrf.mxu0
    %v1587 = vadd.f32 %v1442, %v1586
    %v1588 = vpop.f32.mrf.mxu0
    %1589 = vmatprep.mubr.f32.mxu0 %v1315
    %1590 = vmatmul.mubr.f32.gmra.mxu0 %v1314
    %v1591 = vpop.f32.mrf.mxu0
    %v1592 = vadd.f32 %v1447, %v1591
    %v1593 = vpop.f32.mrf.mxu0
    %1594 = vmatprep.mubr.f32.mxu0 %v1319
    %1595 = vmatmul.mubr.f32.gmra.mxu0 %v1318
    %v1596 = vpop.f32.mrf.mxu0
    %v1597 = vadd.f32 %v1452, %v1596
    %v1598 = vpop.f32.mrf.mxu0
    %1599 = vmatprep.mubr.f32.mxu0 %v1323
    %1600 = vmatmul.mubr.f32.gmra.mxu0 %v1322
    %v1601 = vpop.f32.mrf.mxu0
    %v1602 = vadd.f32 %v1457, %v1601
    %v1603 = vpop.f32.mrf.mxu0
    %1604 = vmatprep.mubr.f32.mxu0 %v1327
    %1605 = vmatmul.mubr.f32.gmra.mxu0 %v1326
    %v1606 = vpop.f32.mrf.mxu0
    %v1607 = vadd.f32 %v1462, %v1606
    %v1608 = vpop.f32.mrf.mxu0
    %1609 = vmatprep.mubr.f32.mxu0 %v1331
    %1610 = vmatmul.mubr.f32.gmra.mxu0 %v1330
    %v1611 = vpop.f32.mrf.mxu0
    %v1612 = vadd.f32 %v1467, %v1611
    %v1613 = vpop.f32.mrf.mxu0
    %1614 = vmatprep.mubr.f32.mxu0 %v1335
    %1615 = vmatmul.mubr.f32.gmra.mxu0 %v1334
    %v1616 = vpop.f32.mrf.mxu0
    %v1617 = vadd.f32 %v1472, %v1616
    %v1618 = vpop.f32.mrf.mxu0
    %1619 = vmatprep.mubr.f32.mxu0 %v1339
    %1620 = vmatmul.mubr.f32.gmra.mxu0 %v1338
    %v1621 = vpop.f32.mrf.mxu0
    %v1622 = vadd.f32 %v1477, %v1621
    %v1623 = vpop.f32.mrf.mxu0
    %1624 = vmatprep.mubr.f32.mxu0 %v1343
    %1625 = vmatmul.mubr.f32.gmra.mxu0 %v1342
    %v1626 = vpop.f32.mrf.mxu0
    %v1627 = vadd.f32 %v1482, %v1626
    %v1628 = vpop.f32.mrf.mxu0
    %1629 = vmatprep.mubr.f32.mxu0 %v1347
    %1630 = vmatmul.mubr.f32.gmra.mxu0 %v1346
    %v1631 = vpop.f32.mrf.mxu0
    %v1632 = vadd.f32 %v1487, %v1631
    %v1633 = vpop.f32.mrf.mxu0
    %1634 = vmatprep.mubr.f32.mxu0 %v1351
    %1635 = vmatmul.mubr.f32.gmra.mxu0 %v1350
    %v1636 = vpop.f32.mrf.mxu0
    %v1637 = vadd.f32 %v1492, %v1636
    %v1638 = vpop.f32.mrf.mxu0
    %1639 = vmatprep.mubr.f32.mxu0 %v1355
    %1640 = vmatmul.mubr.f32.gmra.mxu0 %v1354
    %v1641 = vpop.f32.mrf.mxu0
    %v1642 = vadd.f32 %v1497, %v1641
    %v1643 = vpop.f32.mrf.mxu0
    %1644 = vmatprep.mubr.f32.mxu0 %v1359
    %1645 = vmatmul.mubr.f32.gmra.mxu0 %v1358
    %v1646 = vpop.f32.mrf.mxu0
    %v1647 = vadd.f32 %v1502, %v1646
    %v1648 = vpop.f32.mrf.mxu0
    %1649 = vdwg.mxu0
    %1650 = vst.msk [vmem:[#allocation3] sm:$0xff] %vm906, 0.0
    %1651 = vst.msk [vmem:[#allocation3 + $0x8] sm:$0xff] %vm906, 0.0
    %1652 = vst.msk [vmem:[#allocation3 + $0x10] sm:$0xff] %vm906, %v1572
    %1653 = vst.msk [vmem:[#allocation3 + $0x18] sm:$0xff] %vm906, %v1577
    %1654 = vst.msk [vmem:[#allocation3 + $0x20] sm:$0xff] %vm906, %v1582
    %1655 = vst.msk [vmem:[#allocation3 + $0x28] sm:$0xff] %vm906, %v1587
    %1656 = vst.msk [vmem:[#allocation3 + $0x30] sm:$0xff] %vm906, %v1592
    %1657 = vst.msk [vmem:[#allocation3 + $0x38] sm:$0xff] %vm906, %v1597
    %1658 = vst.msk [vmem:[#allocation3 + $0x40] sm:$0xff] %vm906, %v1602
    %1659 = vst.msk [vmem:[#allocation3 + $0x48] sm:$0xff] %vm906, %v1607
    %1660 = vst.msk [vmem:[#allocation3 + $0x50] sm:$0xff] %vm906, %v1612
    %1661 = vst.msk [vmem:[#allocation3 + $0x58] sm:$0xff] %vm906, %v1617
    %1662 = vst.msk [vmem:[#allocation3 + $0x60] sm:$0xff] %vm906, %v1622
    %1663 = vst.msk [vmem:[#allocation3 + $0x68] sm:$0xff] %vm906, %v1627
    %1664 = vst.msk [vmem:[#allocation3 + $0x70] sm:$0xff] %vm906, %v1632
    %1665 = vst.msk [vmem:[#allocation3 + $0x78] sm:$0xff] %vm906, %v1637
    %1666 = vst.msk [vmem:[#allocation3 + $0x80] sm:$0xff] %vm906, %v1642
    %1667 = vst.msk [vmem:[#allocation3 + $0x88] sm:$0xff] %vm906, %v1647
    %1668 = vst.msk [vmem:[#allocation3 + $0x90] sm:$0xff] %vm906, 0.0
    %1669 = vst.msk [vmem:[#allocation3 + $0x98] sm:$0xff] %vm906, 0.0
    %v1670 = vlaneseq
    %v1671 = vshrl.u32 %v1670, 7
    %v1672 = vadd.s32 %v1671, 8
    %v1673 = vadd.s32 %v1671, 16
    %v1674 = vadd.s32 %v1671, 24
    %v1675 = vadd.s32 %v1671, 32
    %v1676 = vadd.s32 %v1671, 40
    %v1677 = vadd.s32 %v1671, 48
    %v1678 = vadd.s32 %v1671, 56
    %v1679 = vadd.s32 %v1671, 64
    %v1680 = vadd.s32 %v1671, 72
    %v1681 = vadd.s32 %v1671, 80
    %v1682 = vadd.s32 %v1671, 88
    %v1683 = vadd.s32 %v1671, 96
    %v1684 = vadd.s32 %v1671, 104
    %v1685 = vadd.s32 %v1671, 112
    %v1686 = vadd.s32 %v1671, 120
    %v1687 = vand.u32 %v1671, 7
    %v1688 = vand.u32 %v1672, 7
    %v1689 = vand.u32 %v1673, 7
    %v1690 = vand.u32 %v1674, 7
    %v1691 = vand.u32 %v1675, 7
    %v1692 = vand.u32 %v1676, 7
    %v1693 = vand.u32 %v1677, 7
    %v1694 = vand.u32 %v1678, 7
    %v1695 = vand.u32 %v1679, 7
    %v1696 = vand.u32 %v1680, 7
    %v1697 = vand.u32 %v1681, 7
    %v1698 = vand.u32 %v1682, 7
    %v1699 = vand.u32 %v1683, 7
    %v1700 = vand.u32 %v1684, 7
    %v1701 = vand.u32 %v1685, 7
    %v1702 = vand.u32 %v1686, 7
    %v1703 = vshra.s32 %v1671, 3
    %v1704 = vshra.s32 %v1672, 3
    %v1705 = vshra.s32 %v1673, 3
    %v1706 = vshra.s32 %v1674, 3
    %v1707 = vshra.s32 %v1675, 3
    %v1708 = vshra.s32 %v1676, 3
    %v1709 = vshra.s32 %v1677, 3
    %v1710 = vshra.s32 %v1678, 3
    %v1711 = vshra.s32 %v1679, 3
    %v1712 = vshra.s32 %v1680, 3
    %v1713 = vshra.s32 %v1681, 3
    %v1714 = vshra.s32 %v1682, 3
    %v1715 = vshra.s32 %v1683, 3
    %v1716 = vshra.s32 %v1684, 3
    %v1717 = vshra.s32 %v1685, 3
    %v1718 = vshra.s32 %v1686, 3
    %v1719 = vand.u32 %v1703, 7
    %v1720 = vand.u32 %v1704, 7
    %v1721 = vand.u32 %v1705, 7
    %v1722 = vand.u32 %v1706, 7
    %v1723 = vand.u32 %v1707, 7
    %v1724 = vand.u32 %v1708, 7
    %v1725 = vand.u32 %v1709, 7
    %v1726 = vand.u32 %v1710, 7
    %v1727 = vand.u32 %v1711, 7
    %v1728 = vand.u32 %v1712, 7
    %v1729 = vand.u32 %v1713, 7
    %v1730 = vand.u32 %v1714, 7
    %v1731 = vand.u32 %v1715, 7
    %v1732 = vand.u32 %v1716, 7
    %v1733 = vand.u32 %v1717, 7
    %v1734 = vand.u32 %v1718, 7
    %vm1735 = vcmp.ne.s32.totalorder %v1687, 0
    %vm1736 = vcmp.ne.s32.totalorder %v1688, 0
    %vm1737 = vcmp.ne.s32.totalorder %v1689, 0
    %vm1738 = vcmp.ne.s32.totalorder %v1690, 0
    %vm1739 = vcmp.ne.s32.totalorder %v1691, 0
    %vm1740 = vcmp.ne.s32.totalorder %v1692, 0
    %vm1741 = vcmp.ne.s32.totalorder %v1693, 0
    %vm1742 = vcmp.ne.s32.totalorder %v1694, 0
    %vm1743 = vcmp.ne.s32.totalorder %v1695, 0
    %vm1744 = vcmp.ne.s32.totalorder %v1696, 0
    %vm1745 = vcmp.ne.s32.totalorder %v1697, 0
    %vm1746 = vcmp.ne.s32.totalorder %v1698, 0
    %vm1747 = vcmp.ne.s32.totalorder %v1699, 0
    %vm1748 = vcmp.ne.s32.totalorder %v1700, 0
    %vm1749 = vcmp.ne.s32.totalorder %v1701, 0
    %vm1750 = vcmp.ne.s32.totalorder %v1702, 0
    %v1751 = vsel %vm1735, 1, 0
    %v1752 = vsel %vm1736, 1, 0
    %v1753 = vsel %vm1737, 1, 0
    %v1754 = vsel %vm1738, 1, 0
    %v1755 = vsel %vm1739, 1, 0
    %v1756 = vsel %vm1740, 1, 0
    %v1757 = vsel %vm1741, 1, 0
    %v1758 = vsel %vm1742, 1, 0
    %v1759 = vsel %vm1743, 1, 0
    %v1760 = vsel %vm1744, 1, 0
    %v1761 = vsel %vm1745, 1, 0
    %v1762 = vsel %vm1746, 1, 0
    %v1763 = vsel %vm1747, 1, 0
    %v1764 = vsel %vm1748, 1, 0
    %v1765 = vsel %vm1749, 1, 0
    %v1766 = vsel %vm1750, 1, 0
    %v1767 = vcvt.s32.f32 %v1751
    %v1768 = vcvt.s32.f32 %v1752
    %v1769 = vcvt.s32.f32 %v1753
    %v1770 = vcvt.s32.f32 %v1754
    %v1771 = vcvt.s32.f32 %v1755
    %v1772 = vcvt.s32.f32 %v1756
    %v1773 = vcvt.s32.f32 %v1757
    %v1774 = vcvt.s32.f32 %v1758
    %v1775 = vcvt.s32.f32 %v1759
    %v1776 = vcvt.s32.f32 %v1760
    %v1777 = vcvt.s32.f32 %v1761
    %v1778 = vcvt.s32.f32 %v1762
    %v1779 = vcvt.s32.f32 %v1763
    %v1780 = vcvt.s32.f32 %v1764
    %v1781 = vcvt.s32.f32 %v1765
    %v1782 = vcvt.s32.f32 %v1766
    %vm1783 = vcmp.ne.s32.totalorder %v1687, 7
    %vm1784 = vcmp.ne.s32.totalorder %v1688, 7
    %vm1785 = vcmp.ne.s32.totalorder %v1689, 7
    %vm1786 = vcmp.ne.s32.totalorder %v1690, 7
    %vm1787 = vcmp.ne.s32.totalorder %v1691, 7
    %vm1788 = vcmp.ne.s32.totalorder %v1692, 7
    %vm1789 = vcmp.ne.s32.totalorder %v1693, 7
    %vm1790 = vcmp.ne.s32.totalorder %v1694, 7
    %vm1791 = vcmp.ne.s32.totalorder %v1695, 7
    %vm1792 = vcmp.ne.s32.totalorder %v1696, 7
    %vm1793 = vcmp.ne.s32.totalorder %v1697, 7
    %vm1794 = vcmp.ne.s32.totalorder %v1698, 7
    %vm1795 = vcmp.ne.s32.totalorder %v1699, 7
    %vm1796 = vcmp.ne.s32.totalorder %v1700, 7
    %vm1797 = vcmp.ne.s32.totalorder %v1701, 7
    %vm1798 = vcmp.ne.s32.totalorder %v1702, 7
    %v1799 = vsel %vm1783, 1, 0
    %v1800 = vsel %vm1784, 1, 0
    %v1801 = vsel %vm1785, 1, 0
    %v1802 = vsel %vm1786, 1, 0
    %v1803 = vsel %vm1787, 1, 0
    %v1804 = vsel %vm1788, 1, 0
    %v1805 = vsel %vm1789, 1, 0
    %v1806 = vsel %vm1790, 1, 0
    %v1807 = vsel %vm1791, 1, 0
    %v1808 = vsel %vm1792, 1, 0
    %v1809 = vsel %vm1793, 1, 0
    %v1810 = vsel %vm1794, 1, 0
    %v1811 = vsel %vm1795, 1, 0
    %v1812 = vsel %vm1796, 1, 0
    %v1813 = vsel %vm1797, 1, 0
    %v1814 = vsel %vm1798, 1, 0
    %v1815 = vcvt.s32.f32 %v1799
    %v1816 = vcvt.s32.f32 %v1800
    %v1817 = vcvt.s32.f32 %v1801
    %v1818 = vcvt.s32.f32 %v1802
    %v1819 = vcvt.s32.f32 %v1803
    %v1820 = vcvt.s32.f32 %v1804
    %v1821 = vcvt.s32.f32 %v1805
    %v1822 = vcvt.s32.f32 %v1806
    %v1823 = vcvt.s32.f32 %v1807
    %v1824 = vcvt.s32.f32 %v1808
    %v1825 = vcvt.s32.f32 %v1809
    %v1826 = vcvt.s32.f32 %v1810
    %v1827 = vcvt.s32.f32 %v1811
    %v1828 = vcvt.s32.f32 %v1812
    %v1829 = vcvt.s32.f32 %v1813
    %v1830 = vcvt.s32.f32 %v1814
    %vm1831 = vcmp.ne.s32.totalorder %v1719, 0
    %vm1832 = vcmp.ne.s32.totalorder %v1720, 0
    %vm1833 = vcmp.ne.s32.totalorder %v1721, 0
    %vm1834 = vcmp.ne.s32.totalorder %v1722, 0
    %vm1835 = vcmp.ne.s32.totalorder %v1723, 0
    %vm1836 = vcmp.ne.s32.totalorder %v1724, 0
    %vm1837 = vcmp.ne.s32.totalorder %v1725, 0
    %vm1838 = vcmp.ne.s32.totalorder %v1726, 0
    %vm1839 = vcmp.ne.s32.totalorder %v1727, 0
    %vm1840 = vcmp.ne.s32.totalorder %v1728, 0
    %vm1841 = vcmp.ne.s32.totalorder %v1729, 0
    %vm1842 = vcmp.ne.s32.totalorder %v1730, 0
    %vm1843 = vcmp.ne.s32.totalorder %v1731, 0
    %vm1844 = vcmp.ne.s32.totalorder %v1732, 0
    %vm1845 = vcmp.ne.s32.totalorder %v1733, 0
    %vm1846 = vcmp.ne.s32.totalorder %v1734, 0
    %v1847 = vsel %vm1831, 1, 0
    %v1848 = vsel %vm1832, 1, 0
    %v1849 = vsel %vm1833, 1, 0
    %v1850 = vsel %vm1834, 1, 0
    %v1851 = vsel %vm1835, 1, 0
    %v1852 = vsel %vm1836, 1, 0
    %v1853 = vsel %vm1837, 1, 0
    %v1854 = vsel %vm1838, 1, 0
    %v1855 = vsel %vm1839, 1, 0
    %v1856 = vsel %vm1840, 1, 0
    %v1857 = vsel %vm1841, 1, 0
    %v1858 = vsel %vm1842, 1, 0
    %v1859 = vsel %vm1843, 1, 0
    %v1860 = vsel %vm1844, 1, 0
    %v1861 = vsel %vm1845, 1, 0
    %v1862 = vsel %vm1846, 1, 0
    %v1863 = vcvt.s32.f32 %v1847
    %v1864 = vcvt.s32.f32 %v1848
    %v1865 = vcvt.s32.f32 %v1849
    %v1866 = vcvt.s32.f32 %v1850
    %v1867 = vcvt.s32.f32 %v1851
    %v1868 = vcvt.s32.f32 %v1852
    %v1869 = vcvt.s32.f32 %v1853
    %v1870 = vcvt.s32.f32 %v1854
    %v1871 = vcvt.s32.f32 %v1855
    %v1872 = vcvt.s32.f32 %v1856
    %v1873 = vcvt.s32.f32 %v1857
    %v1874 = vcvt.s32.f32 %v1858
    %v1875 = vcvt.s32.f32 %v1859
    %v1876 = vcvt.s32.f32 %v1860
    %v1877 = vcvt.s32.f32 %v1861
    %v1878 = vcvt.s32.f32 %v1862
    %vm1879 = vcmp.ne.s32.totalorder %v1719, 7
    %vm1880 = vcmp.ne.s32.totalorder %v1720, 7
    %vm1881 = vcmp.ne.s32.totalorder %v1721, 7
    %vm1882 = vcmp.ne.s32.totalorder %v1722, 7
    %vm1883 = vcmp.ne.s32.totalorder %v1723, 7
    %vm1884 = vcmp.ne.s32.totalorder %v1724, 7
    %vm1885 = vcmp.ne.s32.totalorder %v1725, 7
    %vm1886 = vcmp.ne.s32.totalorder %v1726, 7
    %vm1887 = vcmp.ne.s32.totalorder %v1727, 7
    %vm1888 = vcmp.ne.s32.totalorder %v1728, 7
    %vm1889 = vcmp.ne.s32.totalorder %v1729, 7
    %vm1890 = vcmp.ne.s32.totalorder %v1730, 7
    %vm1891 = vcmp.ne.s32.totalorder %v1731, 7
    %vm1892 = vcmp.ne.s32.totalorder %v1732, 7
    %vm1893 = vcmp.ne.s32.totalorder %v1733, 7
    %vm1894 = vcmp.ne.s32.totalorder %v1734, 7
    %v1895 = vsel %vm1879, 1, 0
    %v1896 = vsel %vm1880, 1, 0
    %v1897 = vsel %vm1881, 1, 0
    %v1898 = vsel %vm1882, 1, 0
    %v1899 = vsel %vm1883, 1, 0
    %v1900 = vsel %vm1884, 1, 0
    %v1901 = vsel %vm1885, 1, 0
    %v1902 = vsel %vm1886, 1, 0
    %v1903 = vsel %vm1887, 1, 0
    %v1904 = vsel %vm1888, 1, 0
    %v1905 = vsel %vm1889, 1, 0
    %v1906 = vsel %vm1890, 1, 0
    %v1907 = vsel %vm1891, 1, 0
    %v1908 = vsel %vm1892, 1, 0
    %v1909 = vsel %vm1893, 1, 0
    %v1910 = vsel %vm1894, 1, 0
    %v1911 = vcvt.s32.f32 %v1895
    %v1912 = vcvt.s32.f32 %v1896
    %v1913 = vcvt.s32.f32 %v1897
    %v1914 = vcvt.s32.f32 %v1898
    %v1915 = vcvt.s32.f32 %v1899
    %v1916 = vcvt.s32.f32 %v1900
    %v1917 = vcvt.s32.f32 %v1901
    %v1918 = vcvt.s32.f32 %v1902
    %v1919 = vcvt.s32.f32 %v1903
    %v1920 = vcvt.s32.f32 %v1904
    %v1921 = vcvt.s32.f32 %v1905
    %v1922 = vcvt.s32.f32 %v1906
    %v1923 = vcvt.s32.f32 %v1907
    %v1924 = vcvt.s32.f32 %v1908
    %v1925 = vcvt.s32.f32 %v1909
    %v1926 = vcvt.s32.f32 %v1910
    %v1927 = vmul.f32 %v1863, %v1767
    %v1928 = vmul.f32 %v1864, %v1768
    %v1929 = vmul.f32 %v1865, %v1769
    %v1930 = vmul.f32 %v1866, %v1770
    %v1931 = vmul.f32 %v1867, %v1771
    %v1932 = vmul.f32 %v1868, %v1772
    %v1933 = vmul.f32 %v1869, %v1773
    %v1934 = vmul.f32 %v1870, %v1774
    %v1935 = vmul.f32 %v1871, %v1775
    %v1936 = vmul.f32 %v1872, %v1776
    %v1937 = vmul.f32 %v1873, %v1777
    %v1938 = vmul.f32 %v1874, %v1778
    %v1939 = vmul.f32 %v1875, %v1779
    %v1940 = vmul.f32 %v1876, %v1780
    %v1941 = vmul.f32 %v1877, %v1781
    %v1942 = vmul.f32 %v1878, %v1782
    %v1943 = vmul.f32 %v1863, %v1815
    %v1944 = vmul.f32 %v1864, %v1816
    %v1945 = vmul.f32 %v1865, %v1817
    %v1946 = vmul.f32 %v1866, %v1818
    %v1947 = vmul.f32 %v1867, %v1819
    %v1948 = vmul.f32 %v1868, %v1820
    %v1949 = vmul.f32 %v1869, %v1821
    %v1950 = vmul.f32 %v1870, %v1822
    %v1951 = vmul.f32 %v1871, %v1823
    %v1952 = vmul.f32 %v1872, %v1824
    %v1953 = vmul.f32 %v1873, %v1825
    %v1954 = vmul.f32 %v1874, %v1826
    %v1955 = vmul.f32 %v1875, %v1827
    %v1956 = vmul.f32 %v1876, %v1828
    %v1957 = vmul.f32 %v1877, %v1829
    %v1958 = vmul.f32 %v1878, %v1830
    %v1959 = vmul.f32 %v1911, %v1767
    %v1960 = vmul.f32 %v1912, %v1768
    %v1961 = vmul.f32 %v1913, %v1769
    %v1962 = vmul.f32 %v1914, %v1770
    %v1963 = vmul.f32 %v1915, %v1771
    %v1964 = vmul.f32 %v1916, %v1772
    %v1965 = vmul.f32 %v1917, %v1773
    %v1966 = vmul.f32 %v1918, %v1774
    %v1967 = vmul.f32 %v1919, %v1775
    %v1968 = vmul.f32 %v1920, %v1776
    %v1969 = vmul.f32 %v1921, %v1777
    %v1970 = vmul.f32 %v1922, %v1778
    %v1971 = vmul.f32 %v1923, %v1779
    %v1972 = vmul.f32 %v1924, %v1780
    %v1973 = vmul.f32 %v1925, %v1781
    %v1974 = vmul.f32 %v1926, %v1782
    %v1975 = vmul.f32 %v1911, %v1815
    %v1976 = vmul.f32 %v1912, %v1816
    %v1977 = vmul.f32 %v1913, %v1817
    %v1978 = vmul.f32 %v1914, %v1818
    %v1979 = vmul.f32 %v1915, %v1819
    %v1980 = vmul.f32 %v1916, %v1820
    %v1981 = vmul.f32 %v1917, %v1821
    %v1982 = vmul.f32 %v1918, %v1822
    %v1983 = vmul.f32 %v1919, %v1823
    %v1984 = vmul.f32 %v1920, %v1824
    %v1985 = vmul.f32 %v1921, %v1825
    %v1986 = vmul.f32 %v1922, %v1826
    %v1987 = vmul.f32 %v1923, %v1827
    %v1988 = vmul.f32 %v1924, %v1828
    %v1989 = vmul.f32 %v1925, %v1829
    %v1990 = vmul.f32 %v1926, %v1830
    %v1991 = vld [vmem:[#allocation3 + $0x7] sm:$0xff]
    %v1992 = vld [vmem:[#allocation3 + $0xf] sm:$0xff]
    %v1993 = vld [vmem:[#allocation3 + $0x17] sm:$0xff]
    %v1994 = vld [vmem:[#allocation3 + $0x1f] sm:$0xff]
    %v1995 = vld [vmem:[#allocation3 + $0x27] sm:$0xff]
    %v1996 = vld [vmem:[#allocation3 + $0x2f] sm:$0xff]
    %v1997 = vld [vmem:[#allocation3 + $0x37] sm:$0xff]
    %v1998 = vld [vmem:[#allocation3 + $0x3f] sm:$0xff]
    %v1999 = vld [vmem:[#allocation3 + $0x47] sm:$0xff]
    %v2000 = vld [vmem:[#allocation3 + $0x4f] sm:$0xff]
    %v2001 = vld [vmem:[#allocation3 + $0x57] sm:$0xff]
    %v2002 = vld [vmem:[#allocation3 + $0x5f] sm:$0xff]
    %v2003 = vld [vmem:[#allocation3 + $0x67] sm:$0xff]
    %v2004 = vld [vmem:[#allocation3 + $0x6f] sm:$0xff]
    %v2005 = vld [vmem:[#allocation3 + $0x77] sm:$0xff]
    %v2006 = vld [vmem:[#allocation3 + $0x7f] sm:$0xff]
    %v2007 = vmul.f32 %v1991, %v1927
    %v2008 = vmul.f32 %v1992, %v1928
    %v2009 = vmul.f32 %v1993, %v1929
    %v2010 = vmul.f32 %v1994, %v1930
    %v2011 = vmul.f32 %v1995, %v1931
    %v2012 = vmul.f32 %v1996, %v1932
    %v2013 = vmul.f32 %v1997, %v1933
    %v2014 = vmul.f32 %v1998, %v1934
    %v2015 = vmul.f32 %v1999, %v1935
    %v2016 = vmul.f32 %v2000, %v1936
    %v2017 = vmul.f32 %v2001, %v1937
    %v2018 = vmul.f32 %v2002, %v1938
    %v2019 = vmul.f32 %v2003, %v1939
    %v2020 = vmul.f32 %v2004, %v1940
    %v2021 = vmul.f32 %v2005, %v1941
    %v2022 = vmul.f32 %v2006, %v1942
    %v2023 = vld [vmem:[#allocation3 + $0x8] sm:$0xff]
    %v2024 = vld [vmem:[#allocation3 + $0x10] sm:$0xff]
    %v2025 = vld [vmem:[#allocation3 + $0x18] sm:$0xff]
    %v2026 = vld [vmem:[#allocation3 + $0x20] sm:$0xff]
    %v2027 = vld [vmem:[#allocation3 + $0x28] sm:$0xff]
    %v2028 = vld [vmem:[#allocation3 + $0x30] sm:$0xff]
    %v2029 = vld [vmem:[#allocation3 + $0x38] sm:$0xff]
    %v2030 = vld [vmem:[#allocation3 + $0x40] sm:$0xff]
    %v2031 = vld [vmem:[#allocation3 + $0x48] sm:$0xff]
    %v2032 = vld [vmem:[#allocation3 + $0x50] sm:$0xff]
    %v2033 = vld [vmem:[#allocation3 + $0x58] sm:$0xff]
    %v2034 = vld [vmem:[#allocation3 + $0x60] sm:$0xff]
    %v2035 = vld [vmem:[#allocation3 + $0x68] sm:$0xff]
    %v2036 = vld [vmem:[#allocation3 + $0x70] sm:$0xff]
    %v2037 = vld [vmem:[#allocation3 + $0x78] sm:$0xff]
    %v2038 = vld [vmem:[#allocation3 + $0x80] sm:$0xff]
    %v2039 = vmul.f32 %v2023, %v1863
    %v2040 = vmul.f32 %v2024, %v1864
    %v2041 = vmul.f32 %v2025, %v1865
    %v2042 = vmul.f32 %v2026, %v1866
    %v2043 = vmul.f32 %v2027, %v1867
    %v2044 = vmul.f32 %v2028, %v1868
    %v2045 = vmul.f32 %v2029, %v1869
    %v2046 = vmul.f32 %v2030, %v1870
    %v2047 = vmul.f32 %v2031, %v1871
    %v2048 = vmul.f32 %v2032, %v1872
    %v2049 = vmul.f32 %v2033, %v1873
    %v2050 = vmul.f32 %v2034, %v1874
    %v2051 = vmul.f32 %v2035, %v1875
    %v2052 = vmul.f32 %v2036, %v1876
    %v2053 = vmul.f32 %v2037, %v1877
    %v2054 = vmul.f32 %v2038, %v1878
    %v2055 = vld [vmem:[#allocation3 + $0x9] sm:$0xff]
    %v2056 = vld [vmem:[#allocation3 + $0x11] sm:$0xff]
    %v2057 = vld [vmem:[#allocation3 + $0x19] sm:$0xff]
    %v2058 = vld [vmem:[#allocation3 + $0x21] sm:$0xff]
    %v2059 = vld [vmem:[#allocation3 + $0x29] sm:$0xff]
    %v2060 = vld [vmem:[#allocation3 + $0x31] sm:$0xff]
    %v2061 = vld [vmem:[#allocation3 + $0x39] sm:$0xff]
    %v2062 = vld [vmem:[#allocation3 + $0x41] sm:$0xff]
    %v2063 = vld [vmem:[#allocation3 + $0x49] sm:$0xff]
    %v2064 = vld [vmem:[#allocation3 + $0x51] sm:$0xff]
    %v2065 = vld [vmem:[#allocation3 + $0x59] sm:$0xff]
    %v2066 = vld [vmem:[#allocation3 + $0x61] sm:$0xff]
    %v2067 = vld [vmem:[#allocation3 + $0x69] sm:$0xff]
    %v2068 = vld [vmem:[#allocation3 + $0x71] sm:$0xff]
    %v2069 = vld [vmem:[#allocation3 + $0x79] sm:$0xff]
    %v2070 = vld [vmem:[#allocation3 + $0x81] sm:$0xff]
    %v2071 = vmul.f32 %v2055, %v1943
    %v2072 = vmul.f32 %v2056, %v1944
    %v2073 = vmul.f32 %v2057, %v1945
    %v2074 = vmul.f32 %v2058, %v1946
    %v2075 = vmul.f32 %v2059, %v1947
    %v2076 = vmul.f32 %v2060, %v1948
    %v2077 = vmul.f32 %v2061, %v1949
    %v2078 = vmul.f32 %v2062, %v1950
    %v2079 = vmul.f32 %v2063, %v1951
    %v2080 = vmul.f32 %v2064, %v1952
    %v2081 = vmul.f32 %v2065, %v1953
    %v2082 = vmul.f32 %v2066, %v1954
    %v2083 = vmul.f32 %v2067, %v1955
    %v2084 = vmul.f32 %v2068, %v1956
    %v2085 = vmul.f32 %v2069, %v1957
    %v2086 = vmul.f32 %v2070, %v1958
    %v2087 = vld [vmem:[#allocation3 + $0x87] sm:$0xff]
    %v2088 = vmul.f32 %v1992, %v1767
    %v2089 = vmul.f32 %v1993, %v1768
    %v2090 = vmul.f32 %v1994, %v1769
    %v2091 = vmul.f32 %v1995, %v1770
    %v2092 = vmul.f32 %v1996, %v1771
    %v2093 = vmul.f32 %v1997, %v1772
    %v2094 = vmul.f32 %v1998, %v1773
    %v2095 = vmul.f32 %v1999, %v1774
    %v2096 = vmul.f32 %v2000, %v1775
    %v2097 = vmul.f32 %v2001, %v1776
    %v2098 = vmul.f32 %v2002, %v1777
    %v2099 = vmul.f32 %v2003, %v1778
    %v2100 = vmul.f32 %v2004, %v1779
    %v2101 = vmul.f32 %v2005, %v1780
    %v2102 = vmul.f32 %v2006, %v1781
    %v2103 = vmul.f32 %v2087, %v1782
    %v2104 = vld [vmem:[#allocation3 + $0x88] sm:$0xff]
    %v2105 = vld [vmem:[#allocation3 + $0x89] sm:$0xff]
    %v2106 = vmul.f32 %v2056, %v1815
    %v2107 = vmul.f32 %v2057, %v1816
    %v2108 = vmul.f32 %v2058, %v1817
    %v2109 = vmul.f32 %v2059, %v1818
    %v2110 = vmul.f32 %v2060, %v1819
    %v2111 = vmul.f32 %v2061, %v1820
    %v2112 = vmul.f32 %v2062, %v1821
    %v2113 = vmul.f32 %v2063, %v1822
    %v2114 = vmul.f32 %v2064, %v1823
    %v2115 = vmul.f32 %v2065, %v1824
    %v2116 = vmul.f32 %v2066, %v1825
    %v2117 = vmul.f32 %v2067, %v1826
    %v2118 = vmul.f32 %v2068, %v1827
    %v2119 = vmul.f32 %v2069, %v1828
    %v2120 = vmul.f32 %v2070, %v1829
    %v2121 = vmul.f32 %v2105, %v1830
    %v2122 = vld [vmem:[#allocation3 + $0x8f] sm:$0xff]
    %v2123 = vmul.f32 %v1993, %v1959
    %v2124 = vmul.f32 %v1994, %v1960
    %v2125 = vmul.f32 %v1995, %v1961
    %v2126 = vmul.f32 %v1996, %v1962
    %v2127 = vmul.f32 %v1997, %v1963
    %v2128 = vmul.f32 %v1998, %v1964
    %v2129 = vmul.f32 %v1999, %v1965
    %v2130 = vmul.f32 %v2000, %v1966
    %v2131 = vmul.f32 %v2001, %v1967
    %v2132 = vmul.f32 %v2002, %v1968
    %v2133 = vmul.f32 %v2003, %v1969
    %v2134 = vmul.f32 %v2004, %v1970
    %v2135 = vmul.f32 %v2005, %v1971
    %v2136 = vmul.f32 %v2006, %v1972
    %v2137 = vmul.f32 %v2087, %v1973
    %v2138 = vmul.f32 %v2122, %v1974
    %v2139 = vld [vmem:[#allocation3 + $0x90] sm:$0xff]
    %v2140 = vmul.f32 %v2025, %v1911
    %v2141 = vmul.f32 %v2026, %v1912
    %v2142 = vmul.f32 %v2027, %v1913
    %v2143 = vmul.f32 %v2028, %v1914
    %v2144 = vmul.f32 %v2029, %v1915
    %v2145 = vmul.f32 %v2030, %v1916
    %v2146 = vmul.f32 %v2031, %v1917
    %v2147 = vmul.f32 %v2032, %v1918
    %v2148 = vmul.f32 %v2033, %v1919
    %v2149 = vmul.f32 %v2034, %v1920
    %v2150 = vmul.f32 %v2035, %v1921
    %v2151 = vmul.f32 %v2036, %v1922
    %v2152 = vmul.f32 %v2037, %v1923
    %v2153 = vmul.f32 %v2038, %v1924
    %v2154 = vmul.f32 %v2104, %v1925
    %v2155 = vmul.f32 %v2139, %v1926
    %v2156 = vld [vmem:[#allocation3 + $0x91] sm:$0xff]
    %v2157 = vmul.f32 %v2057, %v1975
    %v2158 = vmul.f32 %v2058, %v1976
    %v2159 = vmul.f32 %v2059, %v1977
    %v2160 = vmul.f32 %v2060, %v1978
    %v2161 = vmul.f32 %v2061, %v1979
    %v2162 = vmul.f32 %v2062, %v1980
    %v2163 = vmul.f32 %v2063, %v1981
    %v2164 = vmul.f32 %v2064, %v1982
    %v2165 = vmul.f32 %v2065, %v1983
    %v2166 = vmul.f32 %v2066, %v1984
    %v2167 = vmul.f32 %v2067, %v1985
    %v2168 = vmul.f32 %v2068, %v1986
    %v2169 = vmul.f32 %v2069, %v1987
    %v2170 = vmul.f32 %v2070, %v1988
    %v2171 = vmul.f32 %v2105, %v1989
    %v2172 = vmul.f32 %v2156, %v1990
    %2189 = vrot.lane.b32.xlu0 %v2039, 32
    %v2190 = vpop.permute.xlu0 %2189
    %2191 = vrot.lane.b32.xlu0 %v2040, 32
    %v2192 = vpop.permute.xlu0 %2191
    %2193 = vrot.lane.b32.xlu0 %v2041, 32
    %v2194 = vpop.permute.xlu0 %2193
    %2195 = vrot.lane.b32.xlu0 %v2042, 32
    %v2196 = vpop.permute.xlu0 %2195
    %2197 = vrot.lane.b32.xlu0 %v2043, 32
    %v2198 = vpop.permute.xlu0 %2197
    %2199 = vrot.lane.b32.xlu0 %v2044, 32
    %v2200 = vpop.permute.xlu0 %2199
    %2201 = vrot.lane.b32.xlu0 %v2045, 32
    %v2202 = vpop.permute.xlu0 %2201
    %2203 = vrot.lane.b32.xlu0 %v2046, 32
    %v2204 = vpop.permute.xlu0 %2203
    %2205 = vrot.lane.b32.xlu0 %v2047, 32
    %v2206 = vpop.permute.xlu0 %2205
    %2207 = vrot.lane.b32.xlu0 %v2048, 32
    %v2208 = vpop.permute.xlu0 %2207
    %2209 = vrot.lane.b32.xlu0 %v2049, 32
    %v2210 = vpop.permute.xlu0 %2209
    %2211 = vrot.lane.b32.xlu0 %v2050, 32
    %v2212 = vpop.permute.xlu0 %2211
    %2213 = vrot.lane.b32.xlu0 %v2051, 32
    %v2214 = vpop.permute.xlu0 %2213
    %2215 = vrot.lane.b32.xlu0 %v2052, 32
    %v2216 = vpop.permute.xlu0 %2215
    %2217 = vrot.lane.b32.xlu0 %v2053, 32
    %v2218 = vpop.permute.xlu0 %2217
    %2219 = vrot.lane.b32.xlu0 %v2054, 32
    %v2220 = vpop.permute.xlu0 %2219
    %2253 = vrot.lane.b32.xlu0 %v2071, 64
    %v2254 = vpop.permute.xlu0 %2253
    %2255 = vrot.lane.b32.xlu0 %v2072, 64
    %v2256 = vpop.permute.xlu0 %2255
    %2257 = vrot.lane.b32.xlu0 %v2073, 64
    %v2258 = vpop.permute.xlu0 %2257
    %2259 = vrot.lane.b32.xlu0 %v2074, 64
    %v2260 = vpop.permute.xlu0 %2259
    %2261 = vrot.lane.b32.xlu0 %v2075, 64
    %v2262 = vpop.permute.xlu0 %2261
    %2263 = vrot.lane.b32.xlu0 %v2076, 64
    %v2264 = vpop.permute.xlu0 %2263
    %2265 = vrot.lane.b32.xlu0 %v2077, 64
    %v2266 = vpop.permute.xlu0 %2265
    %2267 = vrot.lane.b32.xlu0 %v2078, 64
    %v2268 = vpop.permute.xlu0 %2267
    %2269 = vrot.lane.b32.xlu0 %v2079, 64
    %v2270 = vpop.permute.xlu0 %2269
    %2271 = vrot.lane.b32.xlu0 %v2080, 64
    %v2272 = vpop.permute.xlu0 %2271
    %2273 = vrot.lane.b32.xlu0 %v2081, 64
    %v2274 = vpop.permute.xlu0 %2273
    %2275 = vrot.lane.b32.xlu0 %v2082, 64
    %v2276 = vpop.permute.xlu0 %2275
    %2277 = vrot.lane.b32.xlu0 %v2083, 64
    %v2278 = vpop.permute.xlu0 %2277
    %2279 = vrot.lane.b32.xlu0 %v2084, 64
    %v2280 = vpop.permute.xlu0 %2279
    %2281 = vrot.lane.b32.xlu0 %v2085, 64
    %v2282 = vpop.permute.xlu0 %2281
    %2283 = vrot.lane.b32.xlu0 %v2086, 64
    %v2284 = vpop.permute.xlu0 %2283
    %2317 = vrot.lane.b32.xlu0 %v2088, 96
    %v2318 = vpop.permute.xlu0 %2317
    %2319 = vrot.lane.b32.xlu0 %v2089, 96
    %v2320 = vpop.permute.xlu0 %2319
    %2321 = vrot.lane.b32.xlu0 %v2090, 96
    %v2322 = vpop.permute.xlu0 %2321
    %2323 = vrot.lane.b32.xlu0 %v2091, 96
    %v2324 = vpop.permute.xlu0 %2323
    %2325 = vrot.lane.b32.xlu0 %v2092, 96
    %v2326 = vpop.permute.xlu0 %2325
    %2327 = vrot.lane.b32.xlu0 %v2093, 96
    %v2328 = vpop.permute.xlu0 %2327
    %2329 = vrot.lane.b32.xlu0 %v2094, 96
    %v2330 = vpop.permute.xlu0 %2329
    %2331 = vrot.lane.b32.xlu0 %v2095, 96
    %v2332 = vpop.permute.xlu0 %2331
    %2333 = vrot.lane.b32.xlu0 %v2096, 96
    %v2334 = vpop.permute.xlu0 %2333
    %2335 = vrot.lane.b32.xlu0 %v2097, 96
    %v2336 = vpop.permute.xlu0 %2335
    %2337 = vrot.lane.b32.xlu0 %v2098, 96
    %v2338 = vpop.permute.xlu0 %2337
    %2339 = vrot.lane.b32.xlu0 %v2099, 96
    %v2340 = vpop.permute.xlu0 %2339
    %2341 = vrot.lane.b32.xlu0 %v2100, 96
    %v2342 = vpop.permute.xlu0 %2341
    %2343 = vrot.lane.b32.xlu0 %v2101, 96
    %v2344 = vpop.permute.xlu0 %2343
    %2345 = vrot.lane.b32.xlu0 %v2102, 96
    %v2346 = vpop.permute.xlu0 %2345
    %2347 = vrot.lane.b32.xlu0 %v2103, 96
    %v2348 = vpop.permute.xlu0 %2347
    %2381 = vrot.lane.b32.xlu0 %v2106, 32
    %v2382 = vpop.permute.xlu0 %2381
    %2383 = vrot.lane.b32.xlu0 %v2107, 32
    %v2384 = vpop.permute.xlu0 %2383
    %2385 = vrot.lane.b32.xlu0 %v2108, 32
    %v2386 = vpop.permute.xlu0 %2385
    %2387 = vrot.lane.b32.xlu0 %v2109, 32
    %v2388 = vpop.permute.xlu0 %2387
    %2389 = vrot.lane.b32.xlu0 %v2110, 32
    %v2390 = vpop.permute.xlu0 %2389
    %2391 = vrot.lane.b32.xlu0 %v2111, 32
    %v2392 = vpop.permute.xlu0 %2391
    %2393 = vrot.lane.b32.xlu0 %v2112, 32
    %v2394 = vpop.permute.xlu0 %2393
    %2395 = vrot.lane.b32.xlu0 %v2113, 32
    %v2396 = vpop.permute.xlu0 %2395
    %2397 = vrot.lane.b32.xlu0 %v2114, 32
    %v2398 = vpop.permute.xlu0 %2397
    %2399 = vrot.lane.b32.xlu0 %v2115, 32
    %v2400 = vpop.permute.xlu0 %2399
    %2401 = vrot.lane.b32.xlu0 %v2116, 32
    %v2402 = vpop.permute.xlu0 %2401
    %2403 = vrot.lane.b32.xlu0 %v2117, 32
    %v2404 = vpop.permute.xlu0 %2403
    %2405 = vrot.lane.b32.xlu0 %v2118, 32
    %v2406 = vpop.permute.xlu0 %2405
    %2407 = vrot.lane.b32.xlu0 %v2119, 32
    %v2408 = vpop.permute.xlu0 %2407
    %2409 = vrot.lane.b32.xlu0 %v2120, 32
    %v2410 = vpop.permute.xlu0 %2409
    %2411 = vrot.lane.b32.xlu0 %v2121, 32
    %v2412 = vpop.permute.xlu0 %2411
    %2445 = vrot.lane.b32.xlu0 %v2123, 64
    %v2446 = vpop.permute.xlu0 %2445
    %2447 = vrot.lane.b32.xlu0 %v2124, 64
    %v2448 = vpop.permute.xlu0 %2447
    %2449 = vrot.lane.b32.xlu0 %v2125, 64
    %v2450 = vpop.permute.xlu0 %2449
    %2451 = vrot.lane.b32.xlu0 %v2126, 64
    %v2452 = vpop.permute.xlu0 %2451
    %2453 = vrot.lane.b32.xlu0 %v2127, 64
    %v2454 = vpop.permute.xlu0 %2453
    %2455 = vrot.lane.b32.xlu0 %v2128, 64
    %v2456 = vpop.permute.xlu0 %2455
    %2457 = vrot.lane.b32.xlu0 %v2129, 64
    %v2458 = vpop.permute.xlu0 %2457
    %2459 = vrot.lane.b32.xlu0 %v2130, 64
    %v2460 = vpop.permute.xlu0 %2459
    %2461 = vrot.lane.b32.xlu0 %v2131, 64
    %v2462 = vpop.permute.xlu0 %2461
    %2463 = vrot.lane.b32.xlu0 %v2132, 64
    %v2464 = vpop.permute.xlu0 %2463
    %2465 = vrot.lane.b32.xlu0 %v2133, 64
    %v2466 = vpop.permute.xlu0 %2465
    %2467 = vrot.lane.b32.xlu0 %v2134, 64
    %v2468 = vpop.permute.xlu0 %2467
    %2469 = vrot.lane.b32.xlu0 %v2135, 64
    %v2470 = vpop.permute.xlu0 %2469
    %2471 = vrot.lane.b32.xlu0 %v2136, 64
    %v2472 = vpop.permute.xlu0 %2471
    %2473 = vrot.lane.b32.xlu0 %v2137, 64
    %v2474 = vpop.permute.xlu0 %2473
    %2475 = vrot.lane.b32.xlu0 %v2138, 64
    %v2476 = vpop.permute.xlu0 %2475
    %2509 = vrot.lane.b32.xlu0 %v2140, 96
    %v2510 = vpop.permute.xlu0 %2509
    %2511 = vrot.lane.b32.xlu0 %v2141, 96
    %v2512 = vpop.permute.xlu0 %2511
    %2513 = vrot.lane.b32.xlu0 %v2142, 96
    %v2514 = vpop.permute.xlu0 %2513
    %2515 = vrot.lane.b32.xlu0 %v2143, 96
    %v2516 = vpop.permute.xlu0 %2515
    %2517 = vrot.lane.b32.xlu0 %v2144, 96
    %v2518 = vpop.permute.xlu0 %2517
    %2519 = vrot.lane.b32.xlu0 %v2145, 96
    %v2520 = vpop.permute.xlu0 %2519
    %2521 = vrot.lane.b32.xlu0 %v2146, 96
    %v2522 = vpop.permute.xlu0 %2521
    %2523 = vrot.lane.b32.xlu0 %v2147, 96
    %v2524 = vpop.permute.xlu0 %2523
    %2525 = vrot.lane.b32.xlu0 %v2148, 96
    %v2526 = vpop.permute.xlu0 %2525
    %2527 = vrot.lane.b32.xlu0 %v2149, 96
    %v2528 = vpop.permute.xlu0 %2527
    %2529 = vrot.lane.b32.xlu0 %v2150, 96
    %v2530 = vpop.permute.xlu0 %2529
    %2531 = vrot.lane.b32.xlu0 %v2151, 96
    %v2532 = vpop.permute.xlu0 %2531
    %2533 = vrot.lane.b32.xlu0 %v2152, 96
    %v2534 = vpop.permute.xlu0 %2533
    %2535 = vrot.lane.b32.xlu0 %v2153, 96
    %v2536 = vpop.permute.xlu0 %2535
    %2537 = vrot.lane.b32.xlu0 %v2154, 96
    %v2538 = vpop.permute.xlu0 %2537
    %2539 = vrot.lane.b32.xlu0 %v2155, 96
    %v2540 = vpop.permute.xlu0 %2539
    %v2557 = vsel %vm906, %v2007, %v2190
    %v2558 = vsel %vm906, %v2008, %v2192
    %v2559 = vsel %vm906, %v2009, %v2194
    %v2560 = vsel %vm906, %v2010, %v2196
    %v2561 = vsel %vm906, %v2011, %v2198
    %v2562 = vsel %vm906, %v2012, %v2200
    %v2563 = vsel %vm906, %v2013, %v2202
    %v2564 = vsel %vm906, %v2014, %v2204
    %v2565 = vsel %vm906, %v2015, %v2206
    %v2566 = vsel %vm906, %v2016, %v2208
    %v2567 = vsel %vm906, %v2017, %v2210
    %v2568 = vsel %vm906, %v2018, %v2212
    %v2569 = vsel %vm906, %v2019, %v2214
    %v2570 = vsel %vm906, %v2020, %v2216
    %v2571 = vsel %vm906, %v2021, %v2218
    %v2572 = vsel %vm906, %v2022, %v2220
    %vm2573 = vcmask 523264
    %v2574 = vsel %vm2573, %v2557, %v2254
    %v2575 = vsel %vm2573, %v2558, %v2256
    %v2576 = vsel %vm2573, %v2559, %v2258
    %v2577 = vsel %vm2573, %v2560, %v2260
    %v2578 = vsel %vm2573, %v2561, %v2262
    %v2579 = vsel %vm2573, %v2562, %v2264
    %v2580 = vsel %vm2573, %v2563, %v2266
    %v2581 = vsel %vm2573, %v2564, %v2268
    %v2582 = vsel %vm2573, %v2565, %v2270
    %v2583 = vsel %vm2573, %v2566, %v2272
    %v2584 = vsel %vm2573, %v2567, %v2274
    %v2585 = vsel %vm2573, %v2568, %v2276
    %v2586 = vsel %vm2573, %v2569, %v2278
    %v2587 = vsel %vm2573, %v2570, %v2280
    %v2588 = vsel %vm2573, %v2571, %v2282
    %v2589 = vsel %vm2573, %v2572, %v2284
    %vm2590 = vcmask 785408
    %v2591 = vsel %vm2590, %v2574, %v2318
    %v2592 = vsel %vm2590, %v2575, %v2320
    %v2593 = vsel %vm2590, %v2576, %v2322
    %v2594 = vsel %vm2590, %v2577, %v2324
    %v2595 = vsel %vm2590, %v2578, %v2326
    %v2596 = vsel %vm2590, %v2579, %v2328
    %v2597 = vsel %vm2590, %v2580, %v2330
    %v2598 = vsel %vm2590, %v2581, %v2332
    %v2599 = vsel %vm2590, %v2582, %v2334
    %v2600 = vsel %vm2590, %v2583, %v2336
    %v2601 = vsel %vm2590, %v2584, %v2338
    %v2602 = vsel %vm2590, %v2585, %v2340
    %v2603 = vsel %vm2590, %v2586, %v2342
    %v2604 = vsel %vm2590, %v2587, %v2344
    %v2605 = vsel %vm2590, %v2588, %v2346
    %v2606 = vsel %vm2590, %v2589, %v2348
    %v2607 = vsel %vm906, %v2024, %v2382
    %v2608 = vsel %vm906, %v2025, %v2384
    %v2609 = vsel %vm906, %v2026, %v2386
    %v2610 = vsel %vm906, %v2027, %v2388
    %v2611 = vsel %vm906, %v2028, %v2390
    %v2612 = vsel %vm906, %v2029, %v2392
    %v2613 = vsel %vm906, %v2030, %v2394
    %v2614 = vsel %vm906, %v2031, %v2396
    %v2615 = vsel %vm906, %v2032, %v2398
    %v2616 = vsel %vm906, %v2033, %v2400
    %v2617 = vsel %vm906, %v2034, %v2402
    %v2618 = vsel %vm906, %v2035, %v2404
    %v2619 = vsel %vm906, %v2036, %v2406
    %v2620 = vsel %vm906, %v2037, %v2408
    %v2621 = vsel %vm906, %v2038, %v2410
    %v2622 = vsel %vm906, %v2104, %v2412
    %v2623 = vsel %vm2573, %v2607, %v2446
    %v2624 = vsel %vm2573, %v2608, %v2448
    %v2625 = vsel %vm2573, %v2609, %v2450
    %v2626 = vsel %vm2573, %v2610, %v2452
    %v2627 = vsel %vm2573, %v2611, %v2454
    %v2628 = vsel %vm2573, %v2612, %v2456
    %v2629 = vsel %vm2573, %v2613, %v2458
    %v2630 = vsel %vm2573, %v2614, %v2460
    %v2631 = vsel %vm2573, %v2615, %v2462
    %v2632 = vsel %vm2573, %v2616, %v2464
    %v2633 = vsel %vm2573, %v2617, %v2466
    %v2634 = vsel %vm2573, %v2618, %v2468
    %v2635 = vsel %vm2573, %v2619, %v2470
    %v2636 = vsel %vm2573, %v2620, %v2472
    %v2637 = vsel %vm2573, %v2621, %v2474
    %v2638 = vsel %vm2573, %v2622, %v2476
    %v2639 = vsel %vm2590, %v2623, %v2510
    %v2640 = vsel %vm2590, %v2624, %v2512
    %v2641 = vsel %vm2590, %v2625, %v2514
    %v2642 = vsel %vm2590, %v2626, %v2516
    %v2643 = vsel %vm2590, %v2627, %v2518
    %v2644 = vsel %vm2590, %v2628, %v2520
    %v2645 = vsel %vm2590, %v2629, %v2522
    %v2646 = vsel %vm2590, %v2630, %v2524
    %v2647 = vsel %vm2590, %v2631, %v2526
    %v2648 = vsel %vm2590, %v2632, %v2528
    %v2649 = vsel %vm2590, %v2633, %v2530
    %v2650 = vsel %vm2590, %v2634, %v2532
    %v2651 = vsel %vm2590, %v2635, %v2534
    %v2652 = vsel %vm2590, %v2636, %v2536
    %v2653 = vsel %vm2590, %v2637, %v2538
    %v2654 = vsel %vm2590, %v2638, %v2540
    %v2655 = vld [vmem:[%s4] sm:$0xff]
    %v2656 = vld [vmem:[%s4 + $0x8] sm:$0xff]
    %v2657 = vld [vmem:[%s4 + $0x10] sm:$0xff]
    %v2658 = vld [vmem:[%s4 + $0x18] sm:$0xff]
    %v2659 = vld [vmem:[%s4 + $0x20] sm:$0xff]
    %v2660 = vld [vmem:[%s4 + $0x28] sm:$0xff]
    %v2661 = vld [vmem:[%s4 + $0x30] sm:$0xff]
    %v2662 = vld [vmem:[%s4 + $0x38] sm:$0xff]
    %v2663 = vld [vmem:[%s4 + $0x40] sm:$0xff]
    %v2664 = vld [vmem:[%s4 + $0x48] sm:$0xff]
    %v2665 = vld [vmem:[%s4 + $0x50] sm:$0xff]
    %v2666 = vld [vmem:[%s4 + $0x58] sm:$0xff]
    %v2667 = vld [vmem:[%s4 + $0x60] sm:$0xff]
    %v2668 = vld [vmem:[%s4 + $0x68] sm:$0xff]
    %v2669 = vld [vmem:[%s4 + $0x70] sm:$0xff]
    %v2670 = vld [vmem:[%s4 + $0x78] sm:$0xff]
    %v2671 = vld [vmem:[%s4 + $0x80] sm:$0xff]
    %v2672 = vld [vmem:[%s4 + $0x88] sm:$0xff]
    %v2673 = vld [vmem:[%s4 + $0x90] sm:$0xff]
    %v2674 = vld [vmem:[%s4 + $0x98] sm:$0xff]
    %v2675 = vld [vmem:[%s4 + $0xa0] sm:$0xff]
    %v2676 = vld [vmem:[%s4 + $0xa8] sm:$0xff]
    %v2677 = vld [vmem:[%s4 + $0xb0] sm:$0xff]
    %v2678 = vld [vmem:[%s4 + $0xb8] sm:$0xff]
    %v2679 = vld [vmem:[%s4 + $0xc0] sm:$0xff]
    %v2680 = vld [vmem:[%s4 + $0xc8] sm:$0xff]
    %v2681 = vld [vmem:[%s4 + $0xd0] sm:$0xff]
    %v2682 = vld [vmem:[%s4 + $0xd8] sm:$0xff]
    %v2683 = vld [vmem:[%s4 + $0xe0] sm:$0xff]
    %v2684 = vld [vmem:[%s4 + $0xe8] sm:$0xff]
    %v2685 = vld [vmem:[%s4 + $0xf0] sm:$0xff]
    %v2686 = vld [vmem:[%s4 + $0xf8] sm:$0xff]
    %v2687 = vld [vmem:[%s4 + $0x100] sm:$0xff]
    %v2688 = vld [vmem:[%s4 + $0x108] sm:$0xff]
    %v2689 = vld [vmem:[%s4 + $0x110] sm:$0xff]
    %v2690 = vld [vmem:[%s4 + $0x118] sm:$0xff]
    %v2692 = vsel %vm906, %v2157, 0
    %v2695 = vsel %vm906, %v2158, 0
    %v2698 = vsel %vm906, %v2159, 0
    %v2701 = vsel %vm906, %v2160, 0
    %v2704 = vsel %vm906, %v2161, 0
    %v2707 = vsel %vm906, %v2162, 0
    %v2710 = vsel %vm906, %v2163, 0
    %v2713 = vsel %vm906, %v2164, 0
    %v2716 = vsel %vm906, %v2165, 0
    %v2719 = vsel %vm906, %v2166, 0
    %v2722 = vsel %vm906, %v2167, 0
    %v2725 = vsel %vm906, %v2168, 0
    %v2728 = vsel %vm906, %v2169, 0
    %v2731 = vsel %vm906, %v2170, 0
    %v2734 = vsel %vm906, %v2171, 0
    %v2737 = vsel %vm906, %v2172, 0
    %2739 = vmatprep.subr.mxu0 0.0
    %2740 = vmatpush1.msra.mxu0 %v2670
    %2741 = vmatprep.subr.mxu0 0.0
    %2742 = vmatpush1.msra.mxu0 %v2669
    %2743 = vmatprep.subr.mxu0 0.0
    %2744 = vmatpush1.msra.mxu0 %v2668
    %2745 = vmatprep.subr.mxu0 0.0
    %2746 = vmatpush1.msra.mxu0 %v2667
    %2747 = vmatprep.subr.mxu0 0.0
    %2748 = vmatpush1.msra.mxu0 %v2666
    %2749 = vmatprep.subr.mxu0 0.0
    %2750 = vmatpush1.msra.mxu0 %v2665
    %2751 = vmatprep.subr.mxu0 0.0
    %2752 = vmatpush1.msra.mxu0 %v2664
    %2753 = vmatprep.subr.mxu0 0.0
    %2754 = vmatpush1.msra.mxu0 %v2663
    %2755 = vmatprep.subr.mxu0 0.0
    %2756 = vmatpush1.msra.mxu0 %v2662
    %2757 = vmatprep.subr.mxu0 0.0
    %2758 = vmatpush1.msra.mxu0 %v2661
    %2759 = vmatprep.subr.mxu0 0.0
    %2760 = vmatpush1.msra.mxu0 %v2660
    %2761 = vmatprep.subr.mxu0 0.0
    %2762 = vmatpush1.msra.mxu0 %v2659
    %2763 = vmatprep.subr.mxu0 0.0
    %2764 = vmatpush1.msra.mxu0 %v2658
    %2765 = vmatprep.subr.mxu0 0.0
    %2766 = vmatpush1.msra.mxu0 %v2657
    %2767 = vmatprep.subr.mxu0 0.0
    %2768 = vmatpush1.msra.mxu0 %v2656
    %2769 = vmatprep.subr.mxu0 0.0
    %2770 = vmatpush1.msra.mxu0 %v2655
    %2771 = vmatprep.subr.mxu0 0.0
    %2772 = vmatpush2.msra.mxu0 %v2686
    %2773 = vmatprep.subr.mxu0 0.0
    %2774 = vmatpush2.msra.mxu0 %v2685
    %2775 = vmatprep.subr.mxu0 0.0
    %2776 = vmatpush2.msra.mxu0 %v2684
    %2777 = vmatprep.subr.mxu0 0.0
    %2778 = vmatpush2.msra.mxu0 %v2683
    %2779 = vmatprep.subr.mxu0 0.0
    %2780 = vmatpush2.msra.mxu0 %v2682
    %2781 = vmatprep.subr.mxu0 0.0
    %2782 = vmatpush2.msra.mxu0 %v2681
    %2783 = vmatprep.subr.mxu0 0.0
    %2784 = vmatpush2.msra.mxu0 %v2680
    %2785 = vmatprep.subr.mxu0 0.0
    %2786 = vmatpush2.msra.mxu0 %v2679
    %2787 = vmatprep.subr.mxu0 0.0
    %2788 = vmatpush2.msra.mxu0 %v2678
    %2789 = vmatprep.subr.mxu0 0.0
    %2790 = vmatpush2.msra.mxu0 %v2677
    %2791 = vmatprep.subr.mxu0 0.0
    %2792 = vmatpush2.msra.mxu0 %v2676
    %2793 = vmatprep.subr.mxu0 0.0
    %2794 = vmatpush2.msra.mxu0 %v2675
    %2795 = vmatprep.subr.mxu0 0.0
    %2796 = vmatpush2.msra.mxu0 %v2674
    %2797 = vmatprep.subr.mxu0 0.0
    %2798 = vmatpush2.msra.mxu0 %v2673
    %2799 = vmatprep.subr.mxu0 0.0
    %2800 = vmatpush2.msra.mxu0 %v2672
    %2801 = vmatprep.subr.mxu0 0.0
    %2802 = vmatpush2.msra.mxu0 %v2671
    %2803 = vmatprep.mubr.f32.mxu0 %v2639
    %2804 = vmatmul.mubr.f32.gmra.mxu0 %v2591
    %v2805 = vpop.f32.mrf.mxu0
    %v2806 = vadd.f32 0.0, %v2805
    %v2807 = vpop.f32.mrf.mxu0
    %2808 = vmatprep.mubr.f32.mxu0 %v2640
    %2809 = vmatmul.mubr.f32.gmra.mxu0 %v2592
    %v2810 = vpop.f32.mrf.mxu0
    %v2811 = vadd.f32 0.0, %v2810
    %v2812 = vpop.f32.mrf.mxu0
    %2813 = vmatprep.mubr.f32.mxu0 %v2641
    %2814 = vmatmul.mubr.f32.gmra.mxu0 %v2593
    %v2815 = vpop.f32.mrf.mxu0
    %v2816 = vadd.f32 0.0, %v2815
    %v2817 = vpop.f32.mrf.mxu0
    %2818 = vmatprep.mubr.f32.mxu0 %v2642
    %2819 = vmatmul.mubr.f32.gmra.mxu0 %v2594
    %v2820 = vpop.f32.mrf.mxu0
    %v2821 = vadd.f32 0.0, %v2820
    %v2822 = vpop.f32.mrf.mxu0
    %2823 = vmatprep.mubr.f32.mxu0 %v2643
    %2824 = vmatmul.mubr.f32.gmra.mxu0 %v2595
    %v2825 = vpop.f32.mrf.mxu0
    %v2826 = vadd.f32 0.0, %v2825
    %v2827 = vpop.f32.mrf.mxu0
    %2828 = vmatprep.mubr.f32.mxu0 %v2644
    %2829 = vmatmul.mubr.f32.gmra.mxu0 %v2596
    %v2830 = vpop.f32.mrf.mxu0
    %v2831 = vadd.f32 0.0, %v2830
    %v2832 = vpop.f32.mrf.mxu0
    %2833 = vmatprep.mubr.f32.mxu0 %v2645
    %2834 = vmatmul.mubr.f32.gmra.mxu0 %v2597
    %v2835 = vpop.f32.mrf.mxu0
    %v2836 = vadd.f32 0.0, %v2835
    %v2837 = vpop.f32.mrf.mxu0
    %2838 = vmatprep.mubr.f32.mxu0 %v2646
    %2839 = vmatmul.mubr.f32.gmra.mxu0 %v2598
    %v2840 = vpop.f32.mrf.mxu0
    %v2841 = vadd.f32 0.0, %v2840
    %v2842 = vpop.f32.mrf.mxu0
    %2843 = vmatprep.mubr.f32.mxu0 %v2647
    %2844 = vmatmul.mubr.f32.gmra.mxu0 %v2599
    %v2845 = vpop.f32.mrf.mxu0
    %v2846 = vadd.f32 0.0, %v2845
    %v2847 = vpop.f32.mrf.mxu0
    %2848 = vmatprep.mubr.f32.mxu0 %v2648
    %2849 = vmatmul.mubr.f32.gmra.mxu0 %v2600
    %v2850 = vpop.f32.mrf.mxu0
    %v2851 = vadd.f32 0.0, %v2850
    %v2852 = vpop.f32.mrf.mxu0
    %2853 = vmatprep.mubr.f32.mxu0 %v2649
    %2854 = vmatmul.mubr.f32.gmra.mxu0 %v2601
    %v2855 = vpop.f32.mrf.mxu0
    %v2856 = vadd.f32 0.0, %v2855
    %v2857 = vpop.f32.mrf.mxu0
    %2858 = vmatprep.mubr.f32.mxu0 %v2650
    %2859 = vmatmul.mubr.f32.gmra.mxu0 %v2602
    %v2860 = vpop.f32.mrf.mxu0
    %v2861 = vadd.f32 0.0, %v2860
    %v2862 = vpop.f32.mrf.mxu0
    %2863 = vmatprep.mubr.f32.mxu0 %v2651
    %2864 = vmatmul.mubr.f32.gmra.mxu0 %v2603
    %v2865 = vpop.f32.mrf.mxu0
    %v2866 = vadd.f32 0.0, %v2865
    %v2867 = vpop.f32.mrf.mxu0
    %2868 = vmatprep.mubr.f32.mxu0 %v2652
    %2869 = vmatmul.mubr.f32.gmra.mxu0 %v2604
    %v2870 = vpop.f32.mrf.mxu0
    %v2871 = vadd.f32 0.0, %v2870
    %v2872 = vpop.f32.mrf.mxu0
    %2873 = vmatprep.mubr.f32.mxu0 %v2653
    %2874 = vmatmul.mubr.f32.gmra.mxu0 %v2605
    %v2875 = vpop.f32.mrf.mxu0
    %v2876 = vadd.f32 0.0, %v2875
    %v2877 = vpop.f32.mrf.mxu0
    %2878 = vmatprep.mubr.f32.mxu0 %v2654
    %2879 = vmatmul.mubr.f32.gmra.mxu0 %v2606
    %v2880 = vpop.f32.mrf.mxu0
    %v2881 = vadd.f32 0.0, %v2880
    %v2882 = vpop.f32.mrf.mxu0
    %2883 = vdwg.mxu0
    %2884 = vmatprep.subr.mxu0 0.0
    %2885 = vmatpush1.msra.mxu0 0.0
    %2886 = vmatprep.subr.mxu0 0.0
    %2887 = vmatpush1.msra.mxu0 0.0
    %2888 = vmatprep.subr.mxu0 0.0
    %2889 = vmatpush1.msra.mxu0 0.0
    %2890 = vmatprep.subr.mxu0 0.0
    %2891 = vmatpush1.msra.mxu0 0.0
    %2892 = vmatprep.subr.mxu0 0.0
    %2893 = vmatpush1.msra.mxu0 0.0
    %2894 = vmatprep.subr.mxu0 0.0
    %2895 = vmatpush1.msra.mxu0 0.0
    %2896 = vmatprep.subr.mxu0 0.0
    %2897 = vmatpush1.msra.mxu0 0.0
    %2898 = vmatprep.subr.mxu0 0.0
    %2899 = vmatpush1.msra.mxu0 0.0
    %2900 = vmatprep.subr.mxu0 0.0
    %2901 = vmatpush1.msra.mxu0 0.0
    %2902 = vmatprep.subr.mxu0 0.0
    %2903 = vmatpush1.msra.mxu0 0.0
    %2904 = vmatprep.subr.mxu0 0.0
    %2905 = vmatpush1.msra.mxu0 0.0
    %2906 = vmatprep.subr.mxu0 0.0
    %2907 = vmatpush1.msra.mxu0 0.0
    %2908 = vmatprep.subr.mxu0 0.0
    %2909 = vmatpush1.msra.mxu0 %v2690
    %2910 = vmatprep.subr.mxu0 0.0
    %2911 = vmatpush1.msra.mxu0 %v2689
    %2912 = vmatprep.subr.mxu0 0.0
    %2913 = vmatpush1.msra.mxu0 %v2688
    %2914 = vmatprep.subr.mxu0 0.0
    %2915 = vmatpush1.msra.mxu0 %v2687
    %2916 = vmatprep.subr.mxu0 0.0
    %2917 = vmatpush2.msra.mxu0 0.0
    %2918 = vmatprep.subr.mxu0 0.0
    %2919 = vmatpush2.msra.mxu0 0.0
    %2920 = vmatprep.subr.mxu0 0.0
    %2921 = vmatpush2.msra.mxu0 0.0
    %2922 = vmatprep.subr.mxu0 0.0
    %2923 = vmatpush2.msra.mxu0 0.0
    %2924 = vmatprep.subr.mxu0 0.0
    %2925 = vmatpush2.msra.mxu0 0.0
    %2926 = vmatprep.subr.mxu0 0.0
    %2927 = vmatpush2.msra.mxu0 0.0
    %2928 = vmatprep.subr.mxu0 0.0
    %2929 = vmatpush2.msra.mxu0 0.0
    %2930 = vmatprep.subr.mxu0 0.0
    %2931 = vmatpush2.msra.mxu0 0.0
    %2932 = vmatprep.subr.mxu0 0.0
    %2933 = vmatpush2.msra.mxu0 0.0
    %2934 = vmatprep.subr.mxu0 0.0
    %2935 = vmatpush2.msra.mxu0 0.0
    %2936 = vmatprep.subr.mxu0 0.0
    %2937 = vmatpush2.msra.mxu0 0.0
    %2938 = vmatprep.subr.mxu0 0.0
    %2939 = vmatpush2.msra.mxu0 0.0
    %2940 = vmatprep.subr.mxu0 0.0
    %2941 = vmatpush2.msra.mxu0 0.0
    %2942 = vmatprep.subr.mxu0 0.0
    %2943 = vmatpush2.msra.mxu0 0.0
    %2944 = vmatprep.subr.mxu0 0.0
    %2945 = vmatpush2.msra.mxu0 0.0
    %2946 = vmatprep.subr.mxu0 0.0
    %2947 = vmatpush2.msra.mxu0 0.0
    %2948 = vmatprep.mubr.f32.mxu0 0.0
    %2949 = vmatmul.mubr.f32.gmra.mxu0 %v2692
    %v2950 = vpop.f32.mrf.mxu0
    %v2951 = vadd.f32 %v2806, %v2950
    %v2952 = vpop.f32.mrf.mxu0
    %2953 = vmatprep.mubr.f32.mxu0 0.0
    %2954 = vmatmul.mubr.f32.gmra.mxu0 %v2695
    %v2955 = vpop.f32.mrf.mxu0
    %v2956 = vadd.f32 %v2811, %v2955
    %v2957 = vpop.f32.mrf.mxu0
    %2958 = vmatprep.mubr.f32.mxu0 0.0
    %2959 = vmatmul.mubr.f32.gmra.mxu0 %v2698
    %v2960 = vpop.f32.mrf.mxu0
    %v2961 = vadd.f32 %v2816, %v2960
    %v2962 = vpop.f32.mrf.mxu0
    %2963 = vmatprep.mubr.f32.mxu0 0.0
    %2964 = vmatmul.mubr.f32.gmra.mxu0 %v2701
    %v2965 = vpop.f32.mrf.mxu0
    %v2966 = vadd.f32 %v2821, %v2965
    %v2967 = vpop.f32.mrf.mxu0
    %2968 = vmatprep.mubr.f32.mxu0 0.0
    %2969 = vmatmul.mubr.f32.gmra.mxu0 %v2704
    %v2970 = vpop.f32.mrf.mxu0
    %v2971 = vadd.f32 %v2826, %v2970
    %v2972 = vpop.f32.mrf.mxu0
    %2973 = vmatprep.mubr.f32.mxu0 0.0
    %2974 = vmatmul.mubr.f32.gmra.mxu0 %v2707
    %v2975 = vpop.f32.mrf.mxu0
    %v2976 = vadd.f32 %v2831, %v2975
    %v2977 = vpop.f32.mrf.mxu0
    %2978 = vmatprep.mubr.f32.mxu0 0.0
    %2979 = vmatmul.mubr.f32.gmra.mxu0 %v2710
    %v2980 = vpop.f32.mrf.mxu0
    %v2981 = vadd.f32 %v2836, %v2980
    %v2982 = vpop.f32.mrf.mxu0
    %2983 = vmatprep.mubr.f32.mxu0 0.0
    %2984 = vmatmul.mubr.f32.gmra.mxu0 %v2713
    %v2985 = vpop.f32.mrf.mxu0
    %v2986 = vadd.f32 %v2841, %v2985
    %v2987 = vpop.f32.mrf.mxu0
    %2988 = vmatprep.mubr.f32.mxu0 0.0
    %2989 = vmatmul.mubr.f32.gmra.mxu0 %v2716
    %v2990 = vpop.f32.mrf.mxu0
    %v2991 = vadd.f32 %v2846, %v2990
    %v2992 = vpop.f32.mrf.mxu0
    %2993 = vmatprep.mubr.f32.mxu0 0.0
    %2994 = vmatmul.mubr.f32.gmra.mxu0 %v2719
    %v2995 = vpop.f32.mrf.mxu0
    %v2996 = vadd.f32 %v2851, %v2995
    %v2997 = vpop.f32.mrf.mxu0
    %2998 = vmatprep.mubr.f32.mxu0 0.0
    %2999 = vmatmul.mubr.f32.gmra.mxu0 %v2722
    %v3000 = vpop.f32.mrf.mxu0
    %v3001 = vadd.f32 %v2856, %v3000
    %v3002 = vpop.f32.mrf.mxu0
    %3003 = vmatprep.mubr.f32.mxu0 0.0
    %3004 = vmatmul.mubr.f32.gmra.mxu0 %v2725
    %v3005 = vpop.f32.mrf.mxu0
    %v3006 = vadd.f32 %v2861, %v3005
    %v3007 = vpop.f32.mrf.mxu0
    %3008 = vmatprep.mubr.f32.mxu0 0.0
    %3009 = vmatmul.mubr.f32.gmra.mxu0 %v2728
    %v3010 = vpop.f32.mrf.mxu0
    %v3011 = vadd.f32 %v2866, %v3010
    %v3012 = vpop.f32.mrf.mxu0
    %3013 = vmatprep.mubr.f32.mxu0 0.0
    %3014 = vmatmul.mubr.f32.gmra.mxu0 %v2731
    %v3015 = vpop.f32.mrf.mxu0
    %v3016 = vadd.f32 %v2871, %v3015
    %v3017 = vpop.f32.mrf.mxu0
    %3018 = vmatprep.mubr.f32.mxu0 0.0
    %3019 = vmatmul.mubr.f32.gmra.mxu0 %v2734
    %v3020 = vpop.f32.mrf.mxu0
    %v3021 = vadd.f32 %v2876, %v3020
    %v3022 = vpop.f32.mrf.mxu0
    %3023 = vmatprep.mubr.f32.mxu0 0.0
    %3024 = vmatmul.mubr.f32.gmra.mxu0 %v2737
    %v3025 = vpop.f32.mrf.mxu0
    %v3026 = vadd.f32 %v2881, %v3025
    %v3027 = vpop.f32.mrf.mxu0
    %3028 = vdwg.mxu0
    %v3029 = vld [vmem:[%s5] sm:$0x1]
    %v3031 = vlaneseq
    %v3032 = vshrl.u32 %v3031, 7
    %v3033 = vsub.s32 0, %v3032
    %v3034 = vrot.slane %v3029, %v3033
    %v3036 = vmul.f32 %v2951, %v3034
    %v3037 = vmul.f32 %v2956, %v3034
    %v3038 = vmul.f32 %v2961, %v3034
    %v3039 = vmul.f32 %v2966, %v3034
    %v3040 = vmul.f32 %v2971, %v3034
    %v3041 = vmul.f32 %v2976, %v3034
    %v3042 = vmul.f32 %v2981, %v3034
    %v3043 = vmul.f32 %v2986, %v3034
    %v3044 = vmul.f32 %v2991, %v3034
    %v3045 = vmul.f32 %v2996, %v3034
    %v3046 = vmul.f32 %v3001, %v3034
    %v3047 = vmul.f32 %v3006, %v3034
    %v3048 = vmul.f32 %v3011, %v3034
    %v3049 = vmul.f32 %v3016, %v3034
    %v3050 = vmul.f32 %v3021, %v3034
    %v3051 = vmul.f32 %v3026, %v3034
    %v3052 = vld [vmem:[%s6] sm:$0x1]
    %v3054 = vlaneseq
    %v3055 = vshrl.u32 %v3054, 7
    %v3056 = vsub.s32 0, %v3055
    %v3057 = vrot.slane %v3052, %v3056
    %v3059 = vadd.f32 %v3036, %v3057
    %v3060 = vadd.f32 %v3037, %v3057
    %v3061 = vadd.f32 %v3038, %v3057
    %v3062 = vadd.f32 %v3039, %v3057
    %v3063 = vadd.f32 %v3040, %v3057
    %v3064 = vadd.f32 %v3041, %v3057
    %v3065 = vadd.f32 %v3042, %v3057
    %v3066 = vadd.f32 %v3043, %v3057
    %v3067 = vadd.f32 %v3044, %v3057
    %v3068 = vadd.f32 %v3045, %v3057
    %v3069 = vadd.f32 %v3046, %v3057
    %v3070 = vadd.f32 %v3047, %v3057
    %v3071 = vadd.f32 %v3048, %v3057
    %v3072 = vadd.f32 %v3049, %v3057
    %v3073 = vadd.f32 %v3050, %v3057
    %v3074 = vadd.f32 %v3051, %v3057
    %v3075 = vmax.f32 %v3059, 0.0
    %v3076 = vmax.f32 %v3060, 0.0
    %v3077 = vmax.f32 %v3061, 0.0
    %v3078 = vmax.f32 %v3062, 0.0
    %v3079 = vmax.f32 %v3063, 0.0
    %v3080 = vmax.f32 %v3064, 0.0
    %v3081 = vmax.f32 %v3065, 0.0
    %v3082 = vmax.f32 %v3066, 0.0
    %v3083 = vmax.f32 %v3067, 0.0
    %v3084 = vmax.f32 %v3068, 0.0
    %v3085 = vmax.f32 %v3069, 0.0
    %v3086 = vmax.f32 %v3070, 0.0
    %v3087 = vmax.f32 %v3071, 0.0
    %v3088 = vmax.f32 %v3072, 0.0
    %v3089 = vmax.f32 %v3073, 0.0
    %v3090 = vmax.f32 %v3074, 0.0
    %3091 = vst.msk [vmem:[#allocation4] sm:$0xff] %vm122, %v3075
    %3092 = vst.msk [vmem:[#allocation4 + $0x8] sm:$0xff] %vm122, %v3076
    %3093 = vst.msk [vmem:[#allocation4 + $0x10] sm:$0xff] %vm122, %v3077
    %3094 = vst.msk [vmem:[#allocation4 + $0x18] sm:$0xff] %vm122, %v3078
    %3095 = vst.msk [vmem:[#allocation4 + $0x20] sm:$0xff] %vm122, %v3079
    %3096 = vst.msk [vmem:[#allocation4 + $0x28] sm:$0xff] %vm122, %v3080
    %3097 = vst.msk [vmem:[#allocation4 + $0x30] sm:$0xff] %vm122, %v3081
    %3098 = vst.msk [vmem:[#allocation4 + $0x38] sm:$0xff] %vm122, %v3082
    %3099 = vst.msk [vmem:[#allocation4 + $0x40] sm:$0xff] %vm122, %v3083
    %3100 = vst.msk [vmem:[#allocation4 + $0x48] sm:$0xff] %vm122, %v3084
    %3101 = vst.msk [vmem:[#allocation4 + $0x50] sm:$0xff] %vm122, %v3085
    %3102 = vst.msk [vmem:[#allocation4 + $0x58] sm:$0xff] %vm122, %v3086
    %3103 = vst.msk [vmem:[#allocation4 + $0x60] sm:$0xff] %vm122, %v3087
    %3104 = vst.msk [vmem:[#allocation4 + $0x68] sm:$0xff] %vm122, %v3088
    %3105 = vst.msk [vmem:[#allocation4 + $0x70] sm:$0xff] %vm122, %v3089
    %3106 = vst.msk [vmem:[#allocation4 + $0x78] sm:$0xff] %vm122, %v3090
    %3107 = vst.msk [vmem:[#allocation4 + $0x80] sm:$0xff] %vm122, 0.0
    %3108 = vst.msk [vmem:[#allocation4 + $0x88] sm:$0xff] %vm122, 0.0
    %v3109 = vld [vmem:[#allocation4 + $0x1] sm:$0xff]
    %v3110 = vld [vmem:[#allocation4 + $0x9] sm:$0xff]
    %v3111 = vld [vmem:[#allocation4 + $0x11] sm:$0xff]
    %v3112 = vld [vmem:[#allocation4 + $0x19] sm:$0xff]
    %v3113 = vld [vmem:[#allocation4 + $0x21] sm:$0xff]
    %v3114 = vld [vmem:[#allocation4 + $0x29] sm:$0xff]
    %v3115 = vld [vmem:[#allocation4 + $0x31] sm:$0xff]
    %v3116 = vld [vmem:[#allocation4 + $0x39] sm:$0xff]
    %v3117 = vld [vmem:[#allocation4 + $0x41] sm:$0xff]
    %v3118 = vld [vmem:[#allocation4 + $0x49] sm:$0xff]
    %v3119 = vld [vmem:[#allocation4 + $0x51] sm:$0xff]
    %v3120 = vld [vmem:[#allocation4 + $0x59] sm:$0xff]
    %v3121 = vld [vmem:[#allocation4 + $0x61] sm:$0xff]
    %v3122 = vld [vmem:[#allocation4 + $0x69] sm:$0xff]
    %v3123 = vld [vmem:[#allocation4 + $0x71] sm:$0xff]
    %v3124 = vld [vmem:[#allocation4 + $0x79] sm:$0xff]
    %v3125 = vmax.f32 %v3075, %v3109
    %v3126 = vmax.f32 %v3076, %v3110
    %v3127 = vmax.f32 %v3077, %v3111
    %v3128 = vmax.f32 %v3078, %v3112
    %v3129 = vmax.f32 %v3079, %v3113
    %v3130 = vmax.f32 %v3080, %v3114
    %v3131 = vmax.f32 %v3081, %v3115
    %v3132 = vmax.f32 %v3082, %v3116
    %v3133 = vmax.f32 %v3083, %v3117
    %v3134 = vmax.f32 %v3084, %v3118
    %v3135 = vmax.f32 %v3085, %v3119
    %v3136 = vmax.f32 %v3086, %v3120
    %v3137 = vmax.f32 %v3087, %v3121
    %v3138 = vmax.f32 %v3088, %v3122
    %v3139 = vmax.f32 %v3089, %v3123
    %v3140 = vmax.f32 %v3090, %v3124
    %v3141 = vld [vmem:[#allocation4 + $0x8] sm:$0xff]
    %v3142 = vld [vmem:[#allocation4 + $0x10] sm:$0xff]
    %v3143 = vld [vmem:[#allocation4 + $0x18] sm:$0xff]
    %v3144 = vld [vmem:[#allocation4 + $0x20] sm:$0xff]
    %v3145 = vld [vmem:[#allocation4 + $0x28] sm:$0xff]
    %v3146 = vld [vmem:[#allocation4 + $0x30] sm:$0xff]
    %v3147 = vld [vmem:[#allocation4 + $0x38] sm:$0xff]
    %v3148 = vld [vmem:[#allocation4 + $0x40] sm:$0xff]
    %v3149 = vld [vmem:[#allocation4 + $0x48] sm:$0xff]
    %v3150 = vld [vmem:[#allocation4 + $0x50] sm:$0xff]
    %v3151 = vld [vmem:[#allocation4 + $0x58] sm:$0xff]
    %v3152 = vld [vmem:[#allocation4 + $0x60] sm:$0xff]
    %v3153 = vld [vmem:[#allocation4 + $0x68] sm:$0xff]
    %v3154 = vld [vmem:[#allocation4 + $0x70] sm:$0xff]
    %v3155 = vld [vmem:[#allocation4 + $0x78] sm:$0xff]
    %v3156 = vld [vmem:[#allocation4 + $0x80] sm:$0xff]
    %v3157 = vld [vmem:[#allocation4 + $0x81] sm:$0xff]
    %v3158 = vmax.f32 %v3141, %v3110
    %v3159 = vmax.f32 %v3142, %v3111
    %v3160 = vmax.f32 %v3143, %v3112
    %v3161 = vmax.f32 %v3144, %v3113
    %v3162 = vmax.f32 %v3145, %v3114
    %v3163 = vmax.f32 %v3146, %v3115
    %v3164 = vmax.f32 %v3147, %v3116
    %v3165 = vmax.f32 %v3148, %v3117
    %v3166 = vmax.f32 %v3149, %v3118
    %v3167 = vmax.f32 %v3150, %v3119
    %v3168 = vmax.f32 %v3151, %v3120
    %v3169 = vmax.f32 %v3152, %v3121
    %v3170 = vmax.f32 %v3153, %v3122
    %v3171 = vmax.f32 %v3154, %v3123
    %v3172 = vmax.f32 %v3155, %v3124
    %v3173 = vmax.f32 %v3156, %v3157
    %v3174 = vmax.f32 %v3125, %v3158
    %v3175 = vmax.f32 %v3126, %v3159
    %v3176 = vmax.f32 %v3127, %v3160
    %v3177 = vmax.f32 %v3128, %v3161
    %v3178 = vmax.f32 %v3129, %v3162
    %v3179 = vmax.f32 %v3130, %v3163
    %v3180 = vmax.f32 %v3131, %v3164
    %v3181 = vmax.f32 %v3132, %v3165
    %v3182 = vmax.f32 %v3133, %v3166
    %v3183 = vmax.f32 %v3134, %v3167
    %v3184 = vmax.f32 %v3135, %v3168
    %v3185 = vmax.f32 %v3136, %v3169
    %v3186 = vmax.f32 %v3137, %v3170
    %v3187 = vmax.f32 %v3138, %v3171
    %v3188 = vmax.f32 %v3139, %v3172
    %v3189 = vmax.f32 %v3140, %v3173
    %v3190 = vld [vmem:[%s15] sm:$0xff]
    %v3191 = vld [vmem:[%s15 + $0x8] sm:$0xff]
    %v3192 = vld [vmem:[%s15 + $0x10] sm:$0xff]
    %v3193 = vld [vmem:[%s15 + $0x18] sm:$0xff]
    %3194 = vmatprep.subr.mxu0 0.0
    %3195 = vmatpush1.msra.mxu0 %v3189
    %3196 = vmatprep.subr.mxu0 0.0
    %3197 = vmatpush1.msra.mxu0 %v3188
    %3198 = vmatprep.subr.mxu0 0.0
    %3199 = vmatpush1.msra.mxu0 %v3187
    %3200 = vmatprep.subr.mxu0 0.0
    %3201 = vmatpush1.msra.mxu0 %v3186
    %3202 = vmatprep.subr.mxu0 0.0
    %3203 = vmatpush1.msra.mxu0 %v3185
    %3204 = vmatprep.subr.mxu0 0.0
    %3205 = vmatpush1.msra.mxu0 %v3184
    %3206 = vmatprep.subr.mxu0 0.0
    %3207 = vmatpush1.msra.mxu0 %v3183
    %3208 = vmatprep.subr.mxu0 0.0
    %3209 = vmatpush1.msra.mxu0 %v3182
    %3210 = vmatprep.subr.mxu0 0.0
    %3211 = vmatpush1.msra.mxu0 %v3181
    %3212 = vmatprep.subr.mxu0 0.0
    %3213 = vmatpush1.msra.mxu0 %v3180
    %3214 = vmatprep.subr.mxu0 0.0
    %3215 = vmatpush1.msra.mxu0 %v3179
    %3216 = vmatprep.subr.mxu0 0.0
    %3217 = vmatpush1.msra.mxu0 %v3178
    %3218 = vmatprep.subr.mxu0 0.0
    %3219 = vmatpush1.msra.mxu0 %v3177
    %3220 = vmatprep.subr.mxu0 0.0
    %3221 = vmatpush1.msra.mxu0 %v3176
    %3222 = vmatprep.subr.mxu0 0.0
    %3223 = vmatpush1.msra.mxu0 %v3175
    %3224 = vmatprep.subr.mxu0 0.0
    %3225 = vmatpush1.msra.mxu0 %v3174
    %3226 = vmatprep.subr.mxu0 0.0
    %3227 = vmatpush2.msra.mxu0 0.0
    %3228 = vmatprep.subr.mxu0 0.0
    %3229 = vmatpush2.msra.mxu0 0.0
    %3230 = vmatprep.subr.mxu0 0.0
    %3231 = vmatpush2.msra.mxu0 0.0
    %3232 = vmatprep.subr.mxu0 0.0
    %3233 = vmatpush2.msra.mxu0 0.0
    %3234 = vmatprep.subr.mxu0 0.0
    %3235 = vmatpush2.msra.mxu0 0.0
    %3236 = vmatprep.subr.mxu0 0.0
    %3237 = vmatpush2.msra.mxu0 0.0
    %3238 = vmatprep.subr.mxu0 0.0
    %3239 = vmatpush2.msra.mxu0 0.0
    %3240 = vmatprep.subr.mxu0 0.0
    %3241 = vmatpush2.msra.mxu0 0.0
    %3242 = vmatprep.subr.mxu0 0.0
    %3243 = vmatpush2.msra.mxu0 0.0
    %3244 = vmatprep.subr.mxu0 0.0
    %3245 = vmatpush2.msra.mxu0 0.0
    %3246 = vmatprep.subr.mxu0 0.0
    %3247 = vmatpush2.msra.mxu0 0.0
    %3248 = vmatprep.subr.mxu0 0.0
    %3249 = vmatpush2.msra.mxu0 0.0
    %3250 = vmatprep.subr.mxu0 0.0
    %3251 = vmatpush2.msra.mxu0 0.0
    %3252 = vmatprep.subr.mxu0 0.0
    %3253 = vmatpush2.msra.mxu0 0.0
    %3254 = vmatprep.subr.mxu0 0.0
    %3255 = vmatpush2.msra.mxu0 0.0
    %3256 = vmatprep.subr.mxu0 0.0
    %3257 = vmatpush2.msra.mxu0 0.0
    %3258 = vmatprep.mubr.f32.mxu0 0.0
    %3259 = vmatmul.mubr.f32.gmra.mxu0 %v3190
    %v3260 = vpop.f32.mrf.mxu0
    %v3261 = vadd.f32 0.0, %v3260
    %v3262 = vpop.f32.mrf.mxu0
    %3263 = vmatprep.mubr.f32.mxu0 0.0
    %3264 = vmatmul.mubr.f32.gmra.mxu0 %v3191
    %v3265 = vpop.f32.mrf.mxu0
    %v3266 = vadd.f32 0.0, %v3265
    %v3267 = vpop.f32.mrf.mxu0
    %3268 = vmatprep.mubr.f32.mxu0 0.0
    %3269 = vmatmul.mubr.f32.gmra.mxu0 %v3192
    %v3270 = vpop.f32.mrf.mxu0
    %v3271 = vadd.f32 0.0, %v3270
    %v3272 = vpop.f32.mrf.mxu0
    %3273 = vmatprep.mubr.f32.mxu0 0.0
    %3274 = vmatmul.mubr.f32.gmra.mxu0 %v3193
    %v3275 = vpop.f32.mrf.mxu0
    %v3276 = vadd.f32 0.0, %v3275
    %v3277 = vpop.f32.mrf.mxu0
    %3278 = vdwg.mxu0
    %v3279 = vld [vmem:[%s7] sm:$0xff]
    %v3280 = vld [vmem:[%s7 + $0x8] sm:$0xff]
    %v3281 = vld [vmem:[%s8] sm:$0x1]
    %v3283 = vlaneseq
    %v3284 = vshrl.u32 %v3283, 7
    %v3285 = vsub.s32 0, %v3284
    %v3286 = vrot.slane %v3281, %v3285
    %v3289 = vsel %vm122, %v3261, 0
    %v3292 = vsel %vm122, %v3266, 0
    %v3295 = vsel %vm122, %v3271, 0
    %v3298 = vsel %vm122, %v3276, 0
    %3300 = vmatprep.subr.mxu0 0.0
    %3301 = vmatpush1.msra.mxu0 0.0
    %3302 = vmatprep.subr.mxu0 0.0
    %3303 = vmatpush1.msra.mxu0 0.0
    %3304 = vmatprep.subr.mxu0 0.0
    %3305 = vmatpush1.msra.mxu0 0.0
    %3306 = vmatprep.subr.mxu0 0.0
    %3307 = vmatpush1.msra.mxu0 0.0
    %3308 = vmatprep.subr.mxu0 0.0
    %3309 = vmatpush1.msra.mxu0 0.0
    %3310 = vmatprep.subr.mxu0 0.0
    %3311 = vmatpush1.msra.mxu0 0.0
    %3312 = vmatprep.subr.mxu0 0.0
    %3313 = vmatpush1.msra.mxu0 0.0
    %3314 = vmatprep.subr.mxu0 0.0
    %3315 = vmatpush1.msra.mxu0 0.0
    %3316 = vmatprep.subr.mxu0 0.0
    %3317 = vmatpush1.msra.mxu0 0.0
    %3318 = vmatprep.subr.mxu0 0.0
    %3319 = vmatpush1.msra.mxu0 0.0
    %3320 = vmatprep.subr.mxu0 0.0
    %3321 = vmatpush1.msra.mxu0 0.0
    %3322 = vmatprep.subr.mxu0 0.0
    %3323 = vmatpush1.msra.mxu0 0.0
    %3324 = vmatprep.subr.mxu0 0.0
    %3325 = vmatpush1.msra.mxu0 0.0
    %3326 = vmatprep.subr.mxu0 0.0
    %3327 = vmatpush1.msra.mxu0 0.0
    %3328 = vmatprep.subr.mxu0 0.0
    %3329 = vmatpush1.msra.mxu0 %v3280
    %3330 = vmatprep.subr.mxu0 0.0
    %3331 = vmatpush1.msra.mxu0 %v3279
    %3332 = vmatprep.subr.mxu0 0.0
    %3333 = vmatpush2.msra.mxu0 0.0
    %3334 = vmatprep.subr.mxu0 0.0
    %3335 = vmatpush2.msra.mxu0 0.0
    %3336 = vmatprep.subr.mxu0 0.0
    %3337 = vmatpush2.msra.mxu0 0.0
    %3338 = vmatprep.subr.mxu0 0.0
    %3339 = vmatpush2.msra.mxu0 0.0
    %3340 = vmatprep.subr.mxu0 0.0
    %3341 = vmatpush2.msra.mxu0 0.0
    %3342 = vmatprep.subr.mxu0 0.0
    %3343 = vmatpush2.msra.mxu0 0.0
    %3344 = vmatprep.subr.mxu0 0.0
    %3345 = vmatpush2.msra.mxu0 0.0
    %3346 = vmatprep.subr.mxu0 0.0
    %3347 = vmatpush2.msra.mxu0 0.0
    %3348 = vmatprep.subr.mxu0 0.0
    %3349 = vmatpush2.msra.mxu0 0.0
    %3350 = vmatprep.subr.mxu0 0.0
    %3351 = vmatpush2.msra.mxu0 0.0
    %3352 = vmatprep.subr.mxu0 0.0
    %3353 = vmatpush2.msra.mxu0 0.0
    %3354 = vmatprep.subr.mxu0 0.0
    %3355 = vmatpush2.msra.mxu0 0.0
    %3356 = vmatprep.subr.mxu0 0.0
    %3357 = vmatpush2.msra.mxu0 0.0
    %3358 = vmatprep.subr.mxu0 0.0
    %3359 = vmatpush2.msra.mxu0 0.0
    %3360 = vmatprep.subr.mxu0 0.0
    %3361 = vmatpush2.msra.mxu0 0.0
    %3362 = vmatprep.subr.mxu0 0.0
    %3363 = vmatpush2.msra.mxu0 0.0
    %3364 = vmatprep.mubr.f32.mxu0 0.0
    %3365 = vmatmul.mubr.f32.gmra.mxu0 %v3289
    %v3366 = vpop.f32.mrf.mxu0
    %v3367 = vadd.f32 %v3286, %v3366
    %v3368 = vpop.f32.mrf.mxu0
    %3369 = vmatprep.mubr.f32.mxu0 0.0
    %3370 = vmatmul.mubr.f32.gmra.mxu0 %v3292
    %v3371 = vpop.f32.mrf.mxu0
    %v3372 = vadd.f32 %v3286, %v3371
    %v3373 = vpop.f32.mrf.mxu0
    %3374 = vmatprep.mubr.f32.mxu0 0.0
    %3375 = vmatmul.mubr.f32.gmra.mxu0 %v3295
    %v3376 = vpop.f32.mrf.mxu0
    %v3377 = vadd.f32 %v3286, %v3376
    %v3378 = vpop.f32.mrf.mxu0
    %3379 = vmatprep.mubr.f32.mxu0 0.0
    %3380 = vmatmul.mubr.f32.gmra.mxu0 %v3298
    %v3381 = vpop.f32.mrf.mxu0
    %v3382 = vadd.f32 %v3286, %v3381
    %v3383 = vpop.f32.mrf.mxu0
    %3384 = vdwg.mxu0
    %vm3385 = vcmask 31744
    %3386 = vst.msk [vmem:[%s17] sm:$0xff] %vm3385, %v3367
    %3387 = vst.msk [vmem:[%s17 + $0x8] sm:$0xff] %vm3385, %v3372
    %3388 = vst.msk [vmem:[%s17 + $0x10] sm:$0xff] %vm3385, %v3377
    %3389 = vst.msk [vmem:[%s17 + $0x18] sm:$0xff] %vm3385, %v3382
    %v3390 = vld [vmem:[%s9] sm:$0x1]
    %v3391 = vld [vmem:[%s10] sm:$0xf]
    %v3392 = vld [vmem:[%s11] sm:$0x1]
    %v3393 = vlaneseq
    %v3394 = vand.u32 %v3393, 127
    %v3396 = vlaneseq
    %v3397 = vshrl.u32 %v3396, 7
    %v3398 = vsub.s32 0, %v3397
    %v3399 = vrot.slane %v3390, %v3398
    %v3401 = vadd.f32 %v3399, %v3367
    %v3404 = vunpack.c.l.s4 1966171168
    %v3405 = vunpack.c.0.s8 %v3404
    %v3406 = vlaneseq
    %v3407 = vshrl.u32 %v3406, 7
    %v3408 = vsub.s32 %v3405, %v3407
    %v3409 = vrot.slane %v3401, %v3408
    %v3410 = vcombine.high %v3409, %v3409
    %v3412 = vunpack.c.l.s4 1966171168
    %v3413 = vunpack.c.0.s8 %v3412
    %v3414 = vlaneseq
    %v3415 = vshrl.u32 %v3414, 7
    %v3416 = vsub.s32 %v3413, %v3415
    %v3417 = vrot.slane %v3409, %v3416
    %v3419 = vunpack.c.l.s4 1966171168
    %v3420 = vunpack.c.0.s8 %v3419
    %v3421 = vlaneseq
    %v3422 = vshrl.u32 %v3421, 7
    %v3423 = vsub.s32 %v3420, %v3422
    %v3424 = vrot.slane %v3410, %v3423
    %v3425 = vlaneseq
    %v3426 = vshrl.u32 %v3425, 7
    %v3427 = vsub.s32 0, %v3426
    %v3428 = vrot.slane %v3417, %v3427
    %v3429 = vlaneseq
    %v3430 = vshrl.u32 %v3429, 7
    %v3431 = vsub.s32 0, %v3430
    %v3432 = vrot.slane %v3424, %v3431
    %v3435 = vadd.f32 %v3391, %v3428
    %v3436 = vadd.f32 %v3391, %v3432
    %vm3437 = vcmask 27648
    %v3438 = vsel %vm3437, %v3435, -inf
    %3439 = vmax.xlane.f32.xlu0 %v3438
    %v3440 = vpop.xlane.xlu0 %3439
    %v3441 = vsel %vm3437, %v3436, -inf
    %3442 = vmax.xlane.f32.xlu0 %v3441
    %v3443 = vpop.xlane.xlu0 %3442
    %vm3444 = vcmp.eq.f32.partialorder %v3435, %v3440
    %vm3445 = vcmp.eq.f32.partialorder %v3436, %v3443
    %v3446 = vsel %vm3444, %v3394, 4
    %v3447 = vsel %vm3445, %v3394, 4
    %v3448 = vsel %vm3437, %v3446, 2147483647
    %v3449 = vand.u32 %v3448, 65535
    %v3450 = vshra.s32 %v3448, 16
    %v3451 = vcvt.s32.f32 %v3449
    %v3452 = vcvt.s32.f32 %v3450
    %3453 = vmin.xlane.f32.xlu0 %v3452
    %v3454 = vpop.xlane.xlu0 %3453
    %vm3455 = vcmp.eq.f32.partialorder %v3452, %v3454
    %v3456 = vsel %vm3455, %v3451, inf
    %3457 = vmin.xlane.f32.xlu0 %v3456
    %v3458 = vpop.xlane.xlu0 %3457
    %v3459 = vcvt.f32.s32 %v3458
    %v3460 = vcvt.f32.s32 %v3454
    %v3461 = vshll.u32 %v3460, 16
    %v3462 = vadd.s32 %v3461, %v3459
    %v3463 = vsel %vm3437, %v3447, 2147483647
    %v3464 = vand.u32 %v3463, 65535
    %v3465 = vshra.s32 %v3463, 16
    %v3466 = vcvt.s32.f32 %v3464
    %v3467 = vcvt.s32.f32 %v3465
    %3468 = vmin.xlane.f32.xlu0 %v3467
    %v3469 = vpop.xlane.xlu0 %3468
    %vm3470 = vcmp.eq.f32.partialorder %v3467, %v3469
    %v3471 = vsel %vm3470, %v3466, inf
    %3472 = vmin.xlane.f32.xlu0 %v3471
    %v3473 = vpop.xlane.xlu0 %3472
    %v3474 = vcvt.f32.s32 %v3473
    %v3475 = vcvt.f32.s32 %v3469
    %v3476 = vshll.u32 %v3475, 16
    %v3477 = vadd.s32 %v3476, %v3474
    %v3478 = vlaneseq
    %v3479 = vshrl.u32 %v3478, 7
    %v3480 = vsub.s32 %v3394, %v3479
    %v3481 = vrot.slane %v3462, %v3480
    %v3482 = vlaneseq
    %v3483 = vshrl.u32 %v3482, 7
    %v3484 = vsub.s32 %v3394, %v3483
    %v3485 = vrot.slane %v3477, %v3484
    %vm3486 = vcmask 1041409
    %v3487 = vsel %vm3486, %v3485, %v3481
    %s3488 = scalar_lea.vmem [#allocation5], 2
    %vm3489 = vcmask 25600
    %3490 = vst.msk [vmem:[%s3488] sm:$0x3] %vm3489, %v3487
    %v3492 = vlaneseq
    %v3493 = vshrl.u32 %v3492, 7
    %v3494 = vsub.s32 2, %v3493
    %v3495 = vrot.slane %v3367, %v3494
    %3497 = vbcast.lane.b32.xlu0 %v3495, 256
    %v3498 = vpop.permute.xlu0 %3497
    %v3499 = vlaneseq
    %v3500 = vshrl.u32 %v3499, 7
    %v3501 = vsub.s32 3, %v3500
    %v3502 = vrot.slane %v3367, %v3501
    %3504 = vbcast.lane.b32.xlu0 %v3502, 256
    %v3505 = vpop.permute.xlu0 %3504
    %v3508 = vadd.f32 %v3440, %v3498
    %v3509 = vadd.f32 %v3443, %v3505
    %3512 = vset.pattern.permute.xlu0 0
    %3513 = vperm.xlu0 %3512, %v3508
    %v3514 = vpop.permute.xlu0 %3513
    %3515 = vset.pattern.permute.xlu0 0
    %3516 = vperm.xlu0 %3515, %v3509
    %v3517 = vpop.permute.xlu0 %3516
    %v3518 = vlaneseq
    %v3519 = vshrl.u32 %v3518, 7
    %v3520 = vsub.s32 %v3394, %v3519
    %v3521 = vrot.slane %v3514, %v3520
    %v3522 = vlaneseq
    %v3523 = vshrl.u32 %v3522, 7
    %v3524 = vsub.s32 %v3394, %v3523
    %v3525 = vrot.slane %v3517, %v3524
    %vm3526 = vcmask 1042434
    %v3527 = vsel %vm3526, %v3521, %v3521
    %vm3528 = vcmask 1043459
    %v3529 = vsel %vm3528, %v3521, %v3527
    %v3530 = vsel %vm3526, %v3525, %v3525
    %v3531 = vsel %vm3528, %v3525, %v3530
    %v3534 = vadd.f32 %v3391, %v3529
    %v3535 = vadd.f32 %v3391, %v3531
    %v3536 = vsel %vm3437, %v3534, -inf
    %3537 = vmax.xlane.f32.xlu0 %v3536
    %v3538 = vpop.xlane.xlu0 %3537
    %v3539 = vsel %vm3437, %v3535, -inf
    %3540 = vmax.xlane.f32.xlu0 %v3539
    %v3541 = vpop.xlane.xlu0 %3540
    %vm3542 = vcmp.eq.f32.partialorder %v3534, %v3538
    %vm3543 = vcmp.eq.f32.partialorder %v3535, %v3541
    %v3544 = vsel %vm3542, %v3394, 4
    %v3545 = vsel %vm3543, %v3394, 4
    %v3546 = vsel %vm3437, %v3544, 2147483647
    %v3547 = vand.u32 %v3546, 65535
    %v3548 = vshra.s32 %v3546, 16
    %v3549 = vcvt.s32.f32 %v3547
    %v3550 = vcvt.s32.f32 %v3548
    %3551 = vmin.xlane.f32.xlu0 %v3550
    %v3552 = vpop.xlane.xlu0 %3551
    %vm3553 = vcmp.eq.f32.partialorder %v3550, %v3552
    %v3554 = vsel %vm3553, %v3549, inf
    %3555 = vmin.xlane.f32.xlu0 %v3554
    %v3556 = vpop.xlane.xlu0 %3555
    %v3557 = vcvt.f32.s32 %v3556
    %v3558 = vcvt.f32.s32 %v3552
    %v3559 = vshll.u32 %v3558, 16
    %v3560 = vadd.s32 %v3559, %v3557
    %v3561 = vsel %vm3437, %v3545, 2147483647
    %v3562 = vand.u32 %v3561, 65535
    %v3563 = vshra.s32 %v3561, 16
    %v3564 = vcvt.s32.f32 %v3562
    %v3565 = vcvt.s32.f32 %v3563
    %3566 = vmin.xlane.f32.xlu0 %v3565
    %v3567 = vpop.xlane.xlu0 %3566
    %vm3568 = vcmp.eq.f32.partialorder %v3565, %v3567
    %v3569 = vsel %vm3568, %v3564, inf
    %3570 = vmin.xlane.f32.xlu0 %v3569
    %v3571 = vpop.xlane.xlu0 %3570
    %v3572 = vcvt.f32.s32 %v3571
    %v3573 = vcvt.f32.s32 %v3567
    %v3574 = vshll.u32 %v3573, 16
    %v3575 = vadd.s32 %v3574, %v3572
    %v3576 = vlaneseq
    %v3577 = vshrl.u32 %v3576, 7
    %v3578 = vsub.s32 %v3394, %v3577
    %v3579 = vrot.slane %v3560, %v3578
    %v3580 = vlaneseq
    %v3581 = vshrl.u32 %v3580, 7
    %v3582 = vsub.s32 %v3394, %v3581
    %v3583 = vrot.slane %v3575, %v3582
    %v3584 = vsel %vm3486, %v3583, %v3579
    %s3585 = scalar_lea.vmem [#allocation5], 4
    %3586 = vst.msk [vmem:[%s3585] sm:$0x3] %vm3489, %v3584
    %v3587 = vlaneseq
    %v3588 = vshrl.u32 %v3587, 7
    %v3589 = vsub.s32 4, %v3588
    %v3590 = vrot.slane %v3367, %v3589
    %3592 = vbcast.lane.b32.xlu0 %v3590, 256
    %v3593 = vpop.permute.xlu0 %3592
    %v3594 = vlaneseq
    %v3595 = vshrl.u32 %v3594, 7
    %v3596 = vsub.s32 5, %v3595
    %v3597 = vrot.slane %v3367, %v3596
    %3599 = vbcast.lane.b32.xlu0 %v3597, 256
    %v3600 = vpop.permute.xlu0 %3599
    %v3603 = vadd.f32 %v3538, %v3593
    %v3604 = vadd.f32 %v3541, %v3600
    %3607 = vset.pattern.permute.xlu0 0
    %3608 = vperm.xlu0 %3607, %v3603
    %v3609 = vpop.permute.xlu0 %3608
    %3610 = vset.pattern.permute.xlu0 0
    %3611 = vperm.xlu0 %3610, %v3604
    %v3612 = vpop.permute.xlu0 %3611
    %v3613 = vlaneseq
    %v3614 = vshrl.u32 %v3613, 7
    %v3615 = vsub.s32 %v3394, %v3614
    %v3616 = vrot.slane %v3609, %v3615
    %v3617 = vlaneseq
    %v3618 = vshrl.u32 %v3617, 7
    %v3619 = vsub.s32 %v3394, %v3618
    %v3620 = vrot.slane %v3612, %v3619
    %v3621 = vsel %vm3526, %v3616, %v3616
    %v3622 = vsel %vm3528, %v3616, %v3621
    %v3623 = vsel %vm3526, %v3620, %v3620
    %v3624 = vsel %vm3528, %v3620, %v3623
    %v3627 = vadd.f32 %v3391, %v3622
    %v3628 = vadd.f32 %v3391, %v3624
    %v3629 = vsel %vm3437, %v3627, -inf
    %3630 = vmax.xlane.f32.xlu0 %v3629
    %v3631 = vpop.xlane.xlu0 %3630
    %v3632 = vsel %vm3437, %v3628, -inf
    %3633 = vmax.xlane.f32.xlu0 %v3632
    %v3634 = vpop.xlane.xlu0 %3633
    %vm3635 = vcmp.eq.f32.partialorder %v3627, %v3631
    %vm3636 = vcmp.eq.f32.partialorder %v3628, %v3634
    %v3637 = vsel %vm3635, %v3394, 4
    %v3638 = vsel %vm3636, %v3394, 4
    %v3639 = vsel %vm3437, %v3637, 2147483647
    %v3640 = vand.u32 %v3639, 65535
    %v3641 = vshra.s32 %v3639, 16
    %v3642 = vcvt.s32.f32 %v3640
    %v3643 = vcvt.s32.f32 %v3641
    %3644 = vmin.xlane.f32.xlu0 %v3643
    %v3645 = vpop.xlane.xlu0 %3644
    %vm3646 = vcmp.eq.f32.partialorder %v3643, %v3645
    %v3647 = vsel %vm3646, %v3642, inf
    %3648 = vmin.xlane.f32.xlu0 %v3647
    %v3649 = vpop.xlane.xlu0 %3648
    %v3650 = vcvt.f32.s32 %v3649
    %v3651 = vcvt.f32.s32 %v3645
    %v3652 = vshll.u32 %v3651, 16
    %v3653 = vadd.s32 %v3652, %v3650
    %v3654 = vsel %vm3437, %v3638, 2147483647
    %v3655 = vand.u32 %v3654, 65535
    %v3656 = vshra.s32 %v3654, 16
    %v3657 = vcvt.s32.f32 %v3655
    %v3658 = vcvt.s32.f32 %v3656
    %3659 = vmin.xlane.f32.xlu0 %v3658
    %v3660 = vpop.xlane.xlu0 %3659
    %vm3661 = vcmp.eq.f32.partialorder %v3658, %v3660
    %v3662 = vsel %vm3661, %v3657, inf
    %3663 = vmin.xlane.f32.xlu0 %v3662
    %v3664 = vpop.xlane.xlu0 %3663
    %v3665 = vcvt.f32.s32 %v3664
    %v3666 = vcvt.f32.s32 %v3660
    %v3667 = vshll.u32 %v3666, 16
    %v3668 = vadd.s32 %v3667, %v3665
    %v3669 = vlaneseq
    %v3670 = vshrl.u32 %v3669, 7
    %v3671 = vsub.s32 %v3394, %v3670
    %v3672 = vrot.slane %v3653, %v3671
    %v3673 = vlaneseq
    %v3674 = vshrl.u32 %v3673, 7
    %v3675 = vsub.s32 %v3394, %v3674
    %v3676 = vrot.slane %v3668, %v3675
    %v3677 = vsel %vm3486, %v3676, %v3672
    %s3678 = scalar_lea.vmem [#allocation5], 6
    %3679 = vst.msk [vmem:[%s3678] sm:$0x3] %vm3489, %v3677
    %v3680 = vlaneseq
    %v3681 = vshrl.u32 %v3680, 7
    %v3682 = vsub.s32 6, %v3681
    %v3683 = vrot.slane %v3367, %v3682
    %3685 = vbcast.lane.b32.xlu0 %v3683, 256
    %v3686 = vpop.permute.xlu0 %3685
    %v3687 = vlaneseq
    %v3688 = vshrl.u32 %v3687, 7
    %v3689 = vsub.s32 7, %v3688
    %v3690 = vrot.slane %v3367, %v3689
    %3692 = vbcast.lane.b32.xlu0 %v3690, 256
    %v3693 = vpop.permute.xlu0 %3692
    %v3696 = vadd.f32 %v3631, %v3686
    %v3697 = vadd.f32 %v3634, %v3693
    %3700 = vset.pattern.permute.xlu0 0
    %3701 = vperm.xlu0 %3700, %v3696
    %v3702 = vpop.permute.xlu0 %3701
    %3703 = vset.pattern.permute.xlu0 0
    %3704 = vperm.xlu0 %3703, %v3697
    %v3705 = vpop.permute.xlu0 %3704
    %v3706 = vlaneseq
    %v3707 = vshrl.u32 %v3706, 7
    %v3708 = vsub.s32 %v3394, %v3707
    %v3709 = vrot.slane %v3702, %v3708
    %v3710 = vlaneseq
    %v3711 = vshrl.u32 %v3710, 7
    %v3712 = vsub.s32 %v3394, %v3711
    %v3713 = vrot.slane %v3705, %v3712
    %v3714 = vsel %vm3526, %v3709, %v3709
    %v3715 = vsel %vm3528, %v3709, %v3714
    %v3716 = vsel %vm3526, %v3713, %v3713
    %v3717 = vsel %vm3528, %v3713, %v3716
    %v3720 = vadd.f32 %v3391, %v3715
    %v3721 = vadd.f32 %v3391, %v3717
    %v3722 = vsel %vm3437, %v3720, -inf
    %3723 = vmax.xlane.f32.xlu0 %v3722
    %v3724 = vpop.xlane.xlu0 %3723
    %v3725 = vsel %vm3437, %v3721, -inf
    %3726 = vmax.xlane.f32.xlu0 %v3725
    %v3727 = vpop.xlane.xlu0 %3726
    %vm3728 = vcmp.eq.f32.partialorder %v3720, %v3724
    %vm3729 = vcmp.eq.f32.partialorder %v3721, %v3727
    %v3730 = vsel %vm3728, %v3394, 4
    %v3731 = vsel %vm3729, %v3394, 4
    %v3732 = vsel %vm3437, %v3730, 2147483647
    %v3733 = vand.u32 %v3732, 65535
    %v3734 = vshra.s32 %v3732, 16
    %v3735 = vcvt.s32.f32 %v3733
    %v3736 = vcvt.s32.f32 %v3734
    %3737 = vmin.xlane.f32.xlu0 %v3736
    %v3738 = vpop.xlane.xlu0 %3737
    %vm3739 = vcmp.eq.f32.partialorder %v3736, %v3738
    %v3740 = vsel %vm3739, %v3735, inf
    %3741 = vmin.xlane.f32.xlu0 %v3740
    %v3742 = vpop.xlane.xlu0 %3741
    %v3743 = vcvt.f32.s32 %v3742
    %v3744 = vcvt.f32.s32 %v3738
    %v3745 = vshll.u32 %v3744, 16
    %v3746 = vadd.s32 %v3745, %v3743
    %v3747 = vsel %vm3437, %v3731, 2147483647
    %v3748 = vand.u32 %v3747, 65535
    %v3749 = vshra.s32 %v3747, 16
    %v3750 = vcvt.s32.f32 %v3748
    %v3751 = vcvt.s32.f32 %v3749
    %3752 = vmin.xlane.f32.xlu0 %v3751
    %v3753 = vpop.xlane.xlu0 %3752
    %vm3754 = vcmp.eq.f32.partialorder %v3751, %v3753
    %v3755 = vsel %vm3754, %v3750, inf
    %3756 = vmin.xlane.f32.xlu0 %v3755
    %v3757 = vpop.xlane.xlu0 %3756
    %v3758 = vcvt.f32.s32 %v3757
    %v3759 = vcvt.f32.s32 %v3753
    %v3760 = vshll.u32 %v3759, 16
    %v3761 = vadd.s32 %v3760, %v3758
    %v3762 = vlaneseq
    %v3763 = vshrl.u32 %v3762, 7
    %v3764 = vsub.s32 %v3394, %v3763
    %v3765 = vrot.slane %v3746, %v3764
    %v3766 = vlaneseq
    %v3767 = vshrl.u32 %v3766, 7
    %v3768 = vsub.s32 %v3394, %v3767
    %v3769 = vrot.slane %v3761, %v3768
    %v3770 = vsel %vm3486, %v3769, %v3765
    %s3771 = scalar_lea.vmem [#allocation5], 8
    %3772 = vst.msk [vmem:[%s3771] sm:$0x3] %vm3489, %v3770
    %v3774 = vlaneseq
    %v3775 = vshrl.u32 %v3774, 7
    %v3776 = vsub.s32 0, %v3775
    %v3777 = vrot.slane %v3372, %v3776
    %3779 = vbcast.lane.b32.xlu0 %v3777, 256
    %v3780 = vpop.permute.xlu0 %3779
    %v3781 = vlaneseq
    %v3782 = vshrl.u32 %v3781, 7
    %v3783 = vsub.s32 1, %v3782
    %v3784 = vrot.slane %v3372, %v3783
    %3786 = vbcast.lane.b32.xlu0 %v3784, 256
    %v3787 = vpop.permute.xlu0 %3786
    %v3790 = vadd.f32 %v3724, %v3780
    %v3791 = vadd.f32 %v3727, %v3787
    %3794 = vset.pattern.permute.xlu0 0
    %3795 = vperm.xlu0 %3794, %v3790
    %v3796 = vpop.permute.xlu0 %3795
    %3797 = vset.pattern.permute.xlu0 0
    %3798 = vperm.xlu0 %3797, %v3791
    %v3799 = vpop.permute.xlu0 %3798
    %v3800 = vlaneseq
    %v3801 = vshrl.u32 %v3800, 7
    %v3802 = vsub.s32 %v3394, %v3801
    %v3803 = vrot.slane %v3796, %v3802
    %v3804 = vlaneseq
    %v3805 = vshrl.u32 %v3804, 7
    %v3806 = vsub.s32 %v3394, %v3805
    %v3807 = vrot.slane %v3799, %v3806
    %v3808 = vsel %vm3526, %v3803, %v3803
    %v3809 = vsel %vm3528, %v3803, %v3808
    %v3810 = vsel %vm3526, %v3807, %v3807
    %v3811 = vsel %vm3528, %v3807, %v3810
    %v3814 = vadd.f32 %v3391, %v3809
    %v3815 = vadd.f32 %v3391, %v3811
    %v3816 = vsel %vm3437, %v3814, -inf
    %3817 = vmax.xlane.f32.xlu0 %v3816
    %v3818 = vpop.xlane.xlu0 %3817
    %v3819 = vsel %vm3437, %v3815, -inf
    %3820 = vmax.xlane.f32.xlu0 %v3819
    %v3821 = vpop.xlane.xlu0 %3820
    %vm3822 = vcmp.eq.f32.partialorder %v3814, %v3818
    %vm3823 = vcmp.eq.f32.partialorder %v3815, %v3821
    %v3824 = vsel %vm3822, %v3394, 4
    %v3825 = vsel %vm3823, %v3394, 4
    %v3826 = vsel %vm3437, %v3824, 2147483647
    %v3827 = vand.u32 %v3826, 65535
    %v3828 = vshra.s32 %v3826, 16
    %v3829 = vcvt.s32.f32 %v3827
    %v3830 = vcvt.s32.f32 %v3828
    %3831 = vmin.xlane.f32.xlu0 %v3830
    %v3832 = vpop.xlane.xlu0 %3831
    %vm3833 = vcmp.eq.f32.partialorder %v3830, %v3832
    %v3834 = vsel %vm3833, %v3829, inf
    %3835 = vmin.xlane.f32.xlu0 %v3834
    %v3836 = vpop.xlane.xlu0 %3835
    %v3837 = vcvt.f32.s32 %v3836
    %v3838 = vcvt.f32.s32 %v3832
    %v3839 = vshll.u32 %v3838, 16
    %v3840 = vadd.s32 %v3839, %v3837
    %v3841 = vsel %vm3437, %v3825, 2147483647
    %v3842 = vand.u32 %v3841, 65535
    %v3843 = vshra.s32 %v3841, 16
    %v3844 = vcvt.s32.f32 %v3842
    %v3845 = vcvt.s32.f32 %v3843
    %3846 = vmin.xlane.f32.xlu0 %v3845
    %v3847 = vpop.xlane.xlu0 %3846
    %vm3848 = vcmp.eq.f32.partialorder %v3845, %v3847
    %v3849 = vsel %vm3848, %v3844, inf
    %3850 = vmin.xlane.f32.xlu0 %v3849
    %v3851 = vpop.xlane.xlu0 %3850
    %v3852 = vcvt.f32.s32 %v3851
    %v3853 = vcvt.f32.s32 %v3847
    %v3854 = vshll.u32 %v3853, 16
    %v3855 = vadd.s32 %v3854, %v3852
    %v3856 = vlaneseq
    %v3857 = vshrl.u32 %v3856, 7
    %v3858 = vsub.s32 %v3394, %v3857
    %v3859 = vrot.slane %v3840, %v3858
    %v3860 = vlaneseq
    %v3861 = vshrl.u32 %v3860, 7
    %v3862 = vsub.s32 %v3394, %v3861
    %v3863 = vrot.slane %v3855, %v3862
    %v3864 = vsel %vm3486, %v3863, %v3859
    %s3865 = scalar_lea.vmem [#allocation5], 10
    %3866 = vst.msk [vmem:[%s3865] sm:$0x3] %vm3489, %v3864
    %v3867 = vlaneseq
    %v3868 = vshrl.u32 %v3867, 7
    %v3869 = vsub.s32 2, %v3868
    %v3870 = vrot.slane %v3372, %v3869
    %3872 = vbcast.lane.b32.xlu0 %v3870, 256
    %v3873 = vpop.permute.xlu0 %3872
    %v3874 = vlaneseq
    %v3875 = vshrl.u32 %v3874, 7
    %v3876 = vsub.s32 3, %v3875
    %v3877 = vrot.slane %v3372, %v3876
    %3879 = vbcast.lane.b32.xlu0 %v3877, 256
    %v3880 = vpop.permute.xlu0 %3879
    %v3883 = vadd.f32 %v3818, %v3873
    %v3884 = vadd.f32 %v3821, %v3880
    %3887 = vset.pattern.permute.xlu0 0
    %3888 = vperm.xlu0 %3887, %v3883
    %v3889 = vpop.permute.xlu0 %3888
    %3890 = vset.pattern.permute.xlu0 0
    %3891 = vperm.xlu0 %3890, %v3884
    %v3892 = vpop.permute.xlu0 %3891
    %v3893 = vlaneseq
    %v3894 = vshrl.u32 %v3893, 7
    %v3895 = vsub.s32 %v3394, %v3894
    %v3896 = vrot.slane %v3889, %v3895
    %v3897 = vlaneseq
    %v3898 = vshrl.u32 %v3897, 7
    %v3899 = vsub.s32 %v3394, %v3898
    %v3900 = vrot.slane %v3892, %v3899
    %v3901 = vsel %vm3526, %v3896, %v3896
    %v3902 = vsel %vm3528, %v3896, %v3901
    %v3903 = vsel %vm3526, %v3900, %v3900
    %v3904 = vsel %vm3528, %v3900, %v3903
    %v3907 = vadd.f32 %v3391, %v3902
    %v3908 = vadd.f32 %v3391, %v3904
    %v3909 = vsel %vm3437, %v3907, -inf
    %3910 = vmax.xlane.f32.xlu0 %v3909
    %v3911 = vpop.xlane.xlu0 %3910
    %v3912 = vsel %vm3437, %v3908, -inf
    %3913 = vmax.xlane.f32.xlu0 %v3912
    %v3914 = vpop.xlane.xlu0 %3913
    %vm3915 = vcmp.eq.f32.partialorder %v3907, %v3911
    %vm3916 = vcmp.eq.f32.partialorder %v3908, %v3914
    %v3917 = vsel %vm3915, %v3394, 4
    %v3918 = vsel %vm3916, %v3394, 4
    %v3919 = vsel %vm3437, %v3917, 2147483647
    %v3920 = vand.u32 %v3919, 65535
    %v3921 = vshra.s32 %v3919, 16
    %v3922 = vcvt.s32.f32 %v3920
    %v3923 = vcvt.s32.f32 %v3921
    %3924 = vmin.xlane.f32.xlu0 %v3923
    %v3925 = vpop.xlane.xlu0 %3924
    %vm3926 = vcmp.eq.f32.partialorder %v3923, %v3925
    %v3927 = vsel %vm3926, %v3922, inf
    %3928 = vmin.xlane.f32.xlu0 %v3927
    %v3929 = vpop.xlane.xlu0 %3928
    %v3930 = vcvt.f32.s32 %v3929
    %v3931 = vcvt.f32.s32 %v3925
    %v3932 = vshll.u32 %v3931, 16
    %v3933 = vadd.s32 %v3932, %v3930
    %v3934 = vsel %vm3437, %v3918, 2147483647
    %v3935 = vand.u32 %v3934, 65535
    %v3936 = vshra.s32 %v3934, 16
    %v3937 = vcvt.s32.f32 %v3935
    %v3938 = vcvt.s32.f32 %v3936
    %3939 = vmin.xlane.f32.xlu0 %v3938
    %v3940 = vpop.xlane.xlu0 %3939
    %vm3941 = vcmp.eq.f32.partialorder %v3938, %v3940
    %v3942 = vsel %vm3941, %v3937, inf
    %3943 = vmin.xlane.f32.xlu0 %v3942
    %v3944 = vpop.xlane.xlu0 %3943
    %v3945 = vcvt.f32.s32 %v3944
    %v3946 = vcvt.f32.s32 %v3940
    %v3947 = vshll.u32 %v3946, 16
    %v3948 = vadd.s32 %v3947, %v3945
    %v3949 = vlaneseq
    %v3950 = vshrl.u32 %v3949, 7
    %v3951 = vsub.s32 %v3394, %v3950
    %v3952 = vrot.slane %v3933, %v3951
    %v3953 = vlaneseq
    %v3954 = vshrl.u32 %v3953, 7
    %v3955 = vsub.s32 %v3394, %v3954
    %v3956 = vrot.slane %v3948, %v3955
    %v3957 = vsel %vm3486, %v3956, %v3952
    %s3958 = scalar_lea.vmem [#allocation5], 12
    %3959 = vst.msk [vmem:[%s3958] sm:$0x3] %vm3489, %v3957
    %v3960 = vlaneseq
    %v3961 = vshrl.u32 %v3960, 7
    %v3962 = vsub.s32 4, %v3961
    %v3963 = vrot.slane %v3372, %v3962
    %3965 = vbcast.lane.b32.xlu0 %v3963, 256
    %v3966 = vpop.permute.xlu0 %3965
    %v3967 = vlaneseq
    %v3968 = vshrl.u32 %v3967, 7
    %v3969 = vsub.s32 5, %v3968
    %v3970 = vrot.slane %v3372, %v3969
    %3972 = vbcast.lane.b32.xlu0 %v3970, 256
    %v3973 = vpop.permute.xlu0 %3972
    %v3976 = vadd.f32 %v3911, %v3966
    %v3977 = vadd.f32 %v3914, %v3973
    %3980 = vset.pattern.permute.xlu0 0
    %3981 = vperm.xlu0 %3980, %v3976
    %v3982 = vpop.permute.xlu0 %3981
    %3983 = vset.pattern.permute.xlu0 0
    %3984 = vperm.xlu0 %3983, %v3977
    %v3985 = vpop.permute.xlu0 %3984
    %v3986 = vlaneseq
    %v3987 = vshrl.u32 %v3986, 7
    %v3988 = vsub.s32 %v3394, %v3987
    %v3989 = vrot.slane %v3982, %v3988
    %v3990 = vlaneseq
    %v3991 = vshrl.u32 %v3990, 7
    %v3992 = vsub.s32 %v3394, %v3991
    %v3993 = vrot.slane %v3985, %v3992
    %v3994 = vsel %vm3526, %v3989, %v3989
    %v3995 = vsel %vm3528, %v3989, %v3994
    %v3996 = vsel %vm3526, %v3993, %v3993
    %v3997 = vsel %vm3528, %v3993, %v3996
    %v4000 = vadd.f32 %v3391, %v3995
    %v4001 = vadd.f32 %v3391, %v3997
    %v4002 = vsel %vm3437, %v4000, -inf
    %4003 = vmax.xlane.f32.xlu0 %v4002
    %v4004 = vpop.xlane.xlu0 %4003
    %v4005 = vsel %vm3437, %v4001, -inf
    %4006 = vmax.xlane.f32.xlu0 %v4005
    %v4007 = vpop.xlane.xlu0 %4006
    %vm4008 = vcmp.eq.f32.partialorder %v4000, %v4004
    %vm4009 = vcmp.eq.f32.partialorder %v4001, %v4007
    %v4010 = vsel %vm4008, %v3394, 4
    %v4011 = vsel %vm4009, %v3394, 4
    %v4012 = vsel %vm3437, %v4010, 2147483647
    %v4013 = vand.u32 %v4012, 65535
    %v4014 = vshra.s32 %v4012, 16
    %v4015 = vcvt.s32.f32 %v4013
    %v4016 = vcvt.s32.f32 %v4014
    %4017 = vmin.xlane.f32.xlu0 %v4016
    %v4018 = vpop.xlane.xlu0 %4017
    %vm4019 = vcmp.eq.f32.partialorder %v4016, %v4018
    %v4020 = vsel %vm4019, %v4015, inf
    %4021 = vmin.xlane.f32.xlu0 %v4020
    %v4022 = vpop.xlane.xlu0 %4021
    %v4023 = vcvt.f32.s32 %v4022
    %v4024 = vcvt.f32.s32 %v4018
    %v4025 = vshll.u32 %v4024, 16
    %v4026 = vadd.s32 %v4025, %v4023
    %v4027 = vsel %vm3437, %v4011, 2147483647
    %v4028 = vand.u32 %v4027, 65535
    %v4029 = vshra.s32 %v4027, 16
    %v4030 = vcvt.s32.f32 %v4028
    %v4031 = vcvt.s32.f32 %v4029
    %4032 = vmin.xlane.f32.xlu0 %v4031
    %v4033 = vpop.xlane.xlu0 %4032
    %vm4034 = vcmp.eq.f32.partialorder %v4031, %v4033
    %v4035 = vsel %vm4034, %v4030, inf
    %4036 = vmin.xlane.f32.xlu0 %v4035
    %v4037 = vpop.xlane.xlu0 %4036
    %v4038 = vcvt.f32.s32 %v4037
    %v4039 = vcvt.f32.s32 %v4033
    %v4040 = vshll.u32 %v4039, 16
    %v4041 = vadd.s32 %v4040, %v4038
    %v4042 = vlaneseq
    %v4043 = vshrl.u32 %v4042, 7
    %v4044 = vsub.s32 %v3394, %v4043
    %v4045 = vrot.slane %v4026, %v4044
    %v4046 = vlaneseq
    %v4047 = vshrl.u32 %v4046, 7
    %v4048 = vsub.s32 %v3394, %v4047
    %v4049 = vrot.slane %v4041, %v4048
    %v4050 = vsel %vm3486, %v4049, %v4045
    %s4051 = scalar_lea.vmem [#allocation5], 14
    %4052 = vst.msk [vmem:[%s4051] sm:$0x3] %vm3489, %v4050
    %v4053 = vlaneseq
    %v4054 = vshrl.u32 %v4053, 7
    %v4055 = vsub.s32 6, %v4054
    %v4056 = vrot.slane %v3372, %v4055
    %4058 = vbcast.lane.b32.xlu0 %v4056, 256
    %v4059 = vpop.permute.xlu0 %4058
    %v4060 = vlaneseq
    %v4061 = vshrl.u32 %v4060, 7
    %v4062 = vsub.s32 7, %v4061
    %v4063 = vrot.slane %v3372, %v4062
    %4065 = vbcast.lane.b32.xlu0 %v4063, 256
    %v4066 = vpop.permute.xlu0 %4065
    %v4069 = vadd.f32 %v4004, %v4059
    %v4070 = vadd.f32 %v4007, %v4066
    %4073 = vset.pattern.permute.xlu0 0
    %4074 = vperm.xlu0 %4073, %v4069
    %v4075 = vpop.permute.xlu0 %4074
    %4076 = vset.pattern.permute.xlu0 0
    %4077 = vperm.xlu0 %4076, %v4070
    %v4078 = vpop.permute.xlu0 %4077
    %v4079 = vlaneseq
    %v4080 = vshrl.u32 %v4079, 7
    %v4081 = vsub.s32 %v3394, %v4080
    %v4082 = vrot.slane %v4075, %v4081
    %v4083 = vlaneseq
    %v4084 = vshrl.u32 %v4083, 7
    %v4085 = vsub.s32 %v3394, %v4084
    %v4086 = vrot.slane %v4078, %v4085
    %v4087 = vsel %vm3526, %v4082, %v4082
    %v4088 = vsel %vm3528, %v4082, %v4087
    %v4089 = vsel %vm3526, %v4086, %v4086
    %v4090 = vsel %vm3528, %v4086, %v4089
    %v4093 = vadd.f32 %v3391, %v4088
    %v4094 = vadd.f32 %v3391, %v4090
    %v4095 = vsel %vm3437, %v4093, -inf
    %4096 = vmax.xlane.f32.xlu0 %v4095
    %v4097 = vpop.xlane.xlu0 %4096
    %v4098 = vsel %vm3437, %v4094, -inf
    %4099 = vmax.xlane.f32.xlu0 %v4098
    %v4100 = vpop.xlane.xlu0 %4099
    %vm4101 = vcmp.eq.f32.partialorder %v4093, %v4097
    %vm4102 = vcmp.eq.f32.partialorder %v4094, %v4100
    %v4103 = vsel %vm4101, %v3394, 4
    %v4104 = vsel %vm4102, %v3394, 4
    %v4105 = vsel %vm3437, %v4103, 2147483647
    %v4106 = vand.u32 %v4105, 65535
    %v4107 = vshra.s32 %v4105, 16
    %v4108 = vcvt.s32.f32 %v4106
    %v4109 = vcvt.s32.f32 %v4107
    %4110 = vmin.xlane.f32.xlu0 %v4109
    %v4111 = vpop.xlane.xlu0 %4110
    %vm4112 = vcmp.eq.f32.partialorder %v4109, %v4111
    %v4113 = vsel %vm4112, %v4108, inf
    %4114 = vmin.xlane.f32.xlu0 %v4113
    %v4115 = vpop.xlane.xlu0 %4114
    %v4116 = vcvt.f32.s32 %v4115
    %v4117 = vcvt.f32.s32 %v4111
    %v4118 = vshll.u32 %v4117, 16
    %v4119 = vadd.s32 %v4118, %v4116
    %v4120 = vsel %vm3437, %v4104, 2147483647
    %v4121 = vand.u32 %v4120, 65535
    %v4122 = vshra.s32 %v4120, 16
    %v4123 = vcvt.s32.f32 %v4121
    %v4124 = vcvt.s32.f32 %v4122
    %4125 = vmin.xlane.f32.xlu0 %v4124
    %v4126 = vpop.xlane.xlu0 %4125
    %vm4127 = vcmp.eq.f32.partialorder %v4124, %v4126
    %v4128 = vsel %vm4127, %v4123, inf
    %4129 = vmin.xlane.f32.xlu0 %v4128
    %v4130 = vpop.xlane.xlu0 %4129
    %v4131 = vcvt.f32.s32 %v4130
    %v4132 = vcvt.f32.s32 %v4126
    %v4133 = vshll.u32 %v4132, 16
    %v4134 = vadd.s32 %v4133, %v4131
    %v4135 = vlaneseq
    %v4136 = vshrl.u32 %v4135, 7
    %v4137 = vsub.s32 %v3394, %v4136
    %v4138 = vrot.slane %v4119, %v4137
    %v4139 = vlaneseq
    %v4140 = vshrl.u32 %v4139, 7
    %v4141 = vsub.s32 %v3394, %v4140
    %v4142 = vrot.slane %v4134, %v4141
    %v4143 = vsel %vm3486, %v4142, %v4138
    %s4144 = scalar_lea.vmem [#allocation5], 16
    %4145 = vst.msk [vmem:[%s4144] sm:$0x3] %vm3489, %v4143
    %v4147 = vlaneseq
    %v4148 = vshrl.u32 %v4147, 7
    %v4149 = vsub.s32 0, %v4148
    %v4150 = vrot.slane %v3377, %v4149
    %4152 = vbcast.lane.b32.xlu0 %v4150, 256
    %v4153 = vpop.permute.xlu0 %4152
    %v4154 = vlaneseq
    %v4155 = vshrl.u32 %v4154, 7
    %v4156 = vsub.s32 1, %v4155
    %v4157 = vrot.slane %v3377, %v4156
    %4159 = vbcast.lane.b32.xlu0 %v4157, 256
    %v4160 = vpop.permute.xlu0 %4159
    %v4163 = vadd.f32 %v4097, %v4153
    %v4164 = vadd.f32 %v4100, %v4160
    %4167 = vset.pattern.permute.xlu0 0
    %4168 = vperm.xlu0 %4167, %v4163
    %v4169 = vpop.permute.xlu0 %4168
    %4170 = vset.pattern.permute.xlu0 0
    %4171 = vperm.xlu0 %4170, %v4164
    %v4172 = vpop.permute.xlu0 %4171
    %v4173 = vlaneseq
    %v4174 = vshrl.u32 %v4173, 7
    %v4175 = vsub.s32 %v3394, %v4174
    %v4176 = vrot.slane %v4169, %v4175
    %v4177 = vlaneseq
    %v4178 = vshrl.u32 %v4177, 7
    %v4179 = vsub.s32 %v3394, %v4178
    %v4180 = vrot.slane %v4172, %v4179
    %v4181 = vsel %vm3526, %v4176, %v4176
    %v4182 = vsel %vm3528, %v4176, %v4181
    %v4183 = vsel %vm3526, %v4180, %v4180
    %v4184 = vsel %vm3528, %v4180, %v4183
    %v4187 = vadd.f32 %v3391, %v4182
    %v4188 = vadd.f32 %v3391, %v4184
    %v4189 = vsel %vm3437, %v4187, -inf
    %4190 = vmax.xlane.f32.xlu0 %v4189
    %v4191 = vpop.xlane.xlu0 %4190
    %v4192 = vsel %vm3437, %v4188, -inf
    %4193 = vmax.xlane.f32.xlu0 %v4192
    %v4194 = vpop.xlane.xlu0 %4193
    %vm4195 = vcmp.eq.f32.partialorder %v4187, %v4191
    %vm4196 = vcmp.eq.f32.partialorder %v4188, %v4194
    %v4197 = vsel %vm4195, %v3394, 4
    %v4198 = vsel %vm4196, %v3394, 4
    %v4199 = vsel %vm3437, %v4197, 2147483647
    %v4200 = vand.u32 %v4199, 65535
    %v4201 = vshra.s32 %v4199, 16
    %v4202 = vcvt.s32.f32 %v4200
    %v4203 = vcvt.s32.f32 %v4201
    %4204 = vmin.xlane.f32.xlu0 %v4203
    %v4205 = vpop.xlane.xlu0 %4204
    %vm4206 = vcmp.eq.f32.partialorder %v4203, %v4205
    %v4207 = vsel %vm4206, %v4202, inf
    %4208 = vmin.xlane.f32.xlu0 %v4207
    %v4209 = vpop.xlane.xlu0 %4208
    %v4210 = vcvt.f32.s32 %v4209
    %v4211 = vcvt.f32.s32 %v4205
    %v4212 = vshll.u32 %v4211, 16
    %v4213 = vadd.s32 %v4212, %v4210
    %v4214 = vsel %vm3437, %v4198, 2147483647
    %v4215 = vand.u32 %v4214, 65535
    %v4216 = vshra.s32 %v4214, 16
    %v4217 = vcvt.s32.f32 %v4215
    %v4218 = vcvt.s32.f32 %v4216
    %4219 = vmin.xlane.f32.xlu0 %v4218
    %v4220 = vpop.xlane.xlu0 %4219
    %vm4221 = vcmp.eq.f32.partialorder %v4218, %v4220
    %v4222 = vsel %vm4221, %v4217, inf
    %4223 = vmin.xlane.f32.xlu0 %v4222
    %v4224 = vpop.xlane.xlu0 %4223
    %v4225 = vcvt.f32.s32 %v4224
    %v4226 = vcvt.f32.s32 %v4220
    %v4227 = vshll.u32 %v4226, 16
    %v4228 = vadd.s32 %v4227, %v4225
    %v4229 = vlaneseq
    %v4230 = vshrl.u32 %v4229, 7
    %v4231 = vsub.s32 %v3394, %v4230
    %v4232 = vrot.slane %v4213, %v4231
    %v4233 = vlaneseq
    %v4234 = vshrl.u32 %v4233, 7
    %v4235 = vsub.s32 %v3394, %v4234
    %v4236 = vrot.slane %v4228, %v4235
    %v4237 = vsel %vm3486, %v4236, %v4232
    %s4238 = scalar_lea.vmem [#allocation5], 18
    %4239 = vst.msk [vmem:[%s4238] sm:$0x3] %vm3489, %v4237
    %v4240 = vlaneseq
    %v4241 = vshrl.u32 %v4240, 7
    %v4242 = vsub.s32 2, %v4241
    %v4243 = vrot.slane %v3377, %v4242
    %4245 = vbcast.lane.b32.xlu0 %v4243, 256
    %v4246 = vpop.permute.xlu0 %4245
    %v4247 = vlaneseq
    %v4248 = vshrl.u32 %v4247, 7
    %v4249 = vsub.s32 3, %v4248
    %v4250 = vrot.slane %v3377, %v4249
    %4252 = vbcast.lane.b32.xlu0 %v4250, 256
    %v4253 = vpop.permute.xlu0 %4252
    %v4256 = vadd.f32 %v4191, %v4246
    %v4257 = vadd.f32 %v4194, %v4253
    %4260 = vset.pattern.permute.xlu0 0
    %4261 = vperm.xlu0 %4260, %v4256
    %v4262 = vpop.permute.xlu0 %4261
    %4263 = vset.pattern.permute.xlu0 0
    %4264 = vperm.xlu0 %4263, %v4257
    %v4265 = vpop.permute.xlu0 %4264
    %v4266 = vlaneseq
    %v4267 = vshrl.u32 %v4266, 7
    %v4268 = vsub.s32 %v3394, %v4267
    %v4269 = vrot.slane %v4262, %v4268
    %v4270 = vlaneseq
    %v4271 = vshrl.u32 %v4270, 7
    %v4272 = vsub.s32 %v3394, %v4271
    %v4273 = vrot.slane %v4265, %v4272
    %v4274 = vsel %vm3526, %v4269, %v4269
    %v4275 = vsel %vm3528, %v4269, %v4274
    %v4276 = vsel %vm3526, %v4273, %v4273
    %v4277 = vsel %vm3528, %v4273, %v4276
    %v4280 = vadd.f32 %v3391, %v4275
    %v4281 = vadd.f32 %v3391, %v4277
    %v4282 = vsel %vm3437, %v4280, -inf
    %4283 = vmax.xlane.f32.xlu0 %v4282
    %v4284 = vpop.xlane.xlu0 %4283
    %v4285 = vsel %vm3437, %v4281, -inf
    %4286 = vmax.xlane.f32.xlu0 %v4285
    %v4287 = vpop.xlane.xlu0 %4286
    %vm4288 = vcmp.eq.f32.partialorder %v4280, %v4284
    %vm4289 = vcmp.eq.f32.partialorder %v4281, %v4287
    %v4290 = vsel %vm4288, %v3394, 4
    %v4291 = vsel %vm4289, %v3394, 4
    %v4292 = vsel %vm3437, %v4290, 2147483647
    %v4293 = vand.u32 %v4292, 65535
    %v4294 = vshra.s32 %v4292, 16
    %v4295 = vcvt.s32.f32 %v4293
    %v4296 = vcvt.s32.f32 %v4294
    %4297 = vmin.xlane.f32.xlu0 %v4296
    %v4298 = vpop.xlane.xlu0 %4297
    %vm4299 = vcmp.eq.f32.partialorder %v4296, %v4298
    %v4300 = vsel %vm4299, %v4295, inf
    %4301 = vmin.xlane.f32.xlu0 %v4300
    %v4302 = vpop.xlane.xlu0 %4301
    %v4303 = vcvt.f32.s32 %v4302
    %v4304 = vcvt.f32.s32 %v4298
    %v4305 = vshll.u32 %v4304, 16
    %v4306 = vadd.s32 %v4305, %v4303
    %v4307 = vsel %vm3437, %v4291, 2147483647
    %v4308 = vand.u32 %v4307, 65535
    %v4309 = vshra.s32 %v4307, 16
    %v4310 = vcvt.s32.f32 %v4308
    %v4311 = vcvt.s32.f32 %v4309
    %4312 = vmin.xlane.f32.xlu0 %v4311
    %v4313 = vpop.xlane.xlu0 %4312
    %vm4314 = vcmp.eq.f32.partialorder %v4311, %v4313
    %v4315 = vsel %vm4314, %v4310, inf
    %4316 = vmin.xlane.f32.xlu0 %v4315
    %v4317 = vpop.xlane.xlu0 %4316
    %v4318 = vcvt.f32.s32 %v4317
    %v4319 = vcvt.f32.s32 %v4313
    %v4320 = vshll.u32 %v4319, 16
    %v4321 = vadd.s32 %v4320, %v4318
    %v4322 = vlaneseq
    %v4323 = vshrl.u32 %v4322, 7
    %v4324 = vsub.s32 %v3394, %v4323
    %v4325 = vrot.slane %v4306, %v4324
    %v4326 = vlaneseq
    %v4327 = vshrl.u32 %v4326, 7
    %v4328 = vsub.s32 %v3394, %v4327
    %v4329 = vrot.slane %v4321, %v4328
    %v4330 = vsel %vm3486, %v4329, %v4325
    %s4331 = scalar_lea.vmem [#allocation5], 20
    %4332 = vst.msk [vmem:[%s4331] sm:$0x3] %vm3489, %v4330
    %v4333 = vlaneseq
    %v4334 = vshrl.u32 %v4333, 7
    %v4335 = vsub.s32 4, %v4334
    %v4336 = vrot.slane %v3377, %v4335
    %4338 = vbcast.lane.b32.xlu0 %v4336, 256
    %v4339 = vpop.permute.xlu0 %4338
    %v4340 = vlaneseq
    %v4341 = vshrl.u32 %v4340, 7
    %v4342 = vsub.s32 5, %v4341
    %v4343 = vrot.slane %v3377, %v4342
    %4345 = vbcast.lane.b32.xlu0 %v4343, 256
    %v4346 = vpop.permute.xlu0 %4345
    %v4349 = vadd.f32 %v4284, %v4339
    %v4350 = vadd.f32 %v4287, %v4346
    %4353 = vset.pattern.permute.xlu0 0
    %4354 = vperm.xlu0 %4353, %v4349
    %v4355 = vpop.permute.xlu0 %4354
    %4356 = vset.pattern.permute.xlu0 0
    %4357 = vperm.xlu0 %4356, %v4350
    %v4358 = vpop.permute.xlu0 %4357
    %v4359 = vlaneseq
    %v4360 = vshrl.u32 %v4359, 7
    %v4361 = vsub.s32 %v3394, %v4360
    %v4362 = vrot.slane %v4355, %v4361
    %v4363 = vlaneseq
    %v4364 = vshrl.u32 %v4363, 7
    %v4365 = vsub.s32 %v3394, %v4364
    %v4366 = vrot.slane %v4358, %v4365
    %v4367 = vsel %vm3526, %v4362, %v4362
    %v4368 = vsel %vm3528, %v4362, %v4367
    %v4369 = vsel %vm3526, %v4366, %v4366
    %v4370 = vsel %vm3528, %v4366, %v4369
    %v4373 = vadd.f32 %v3391, %v4368
    %v4374 = vadd.f32 %v3391, %v4370
    %v4375 = vsel %vm3437, %v4373, -inf
    %4376 = vmax.xlane.f32.xlu0 %v4375
    %v4377 = vpop.xlane.xlu0 %4376
    %v4378 = vsel %vm3437, %v4374, -inf
    %4379 = vmax.xlane.f32.xlu0 %v4378
    %v4380 = vpop.xlane.xlu0 %4379
    %vm4381 = vcmp.eq.f32.partialorder %v4373, %v4377
    %vm4382 = vcmp.eq.f32.partialorder %v4374, %v4380
    %v4383 = vsel %vm4381, %v3394, 4
    %v4384 = vsel %vm4382, %v3394, 4
    %v4385 = vsel %vm3437, %v4383, 2147483647
    %v4386 = vand.u32 %v4385, 65535
    %v4387 = vshra.s32 %v4385, 16
    %v4388 = vcvt.s32.f32 %v4386
    %v4389 = vcvt.s32.f32 %v4387
    %4390 = vmin.xlane.f32.xlu0 %v4389
    %v4391 = vpop.xlane.xlu0 %4390
    %vm4392 = vcmp.eq.f32.partialorder %v4389, %v4391
    %v4393 = vsel %vm4392, %v4388, inf
    %4394 = vmin.xlane.f32.xlu0 %v4393
    %v4395 = vpop.xlane.xlu0 %4394
    %v4396 = vcvt.f32.s32 %v4395
    %v4397 = vcvt.f32.s32 %v4391
    %v4398 = vshll.u32 %v4397, 16
    %v4399 = vadd.s32 %v4398, %v4396
    %v4400 = vsel %vm3437, %v4384, 2147483647
    %v4401 = vand.u32 %v4400, 65535
    %v4402 = vshra.s32 %v4400, 16
    %v4403 = vcvt.s32.f32 %v4401
    %v4404 = vcvt.s32.f32 %v4402
    %4405 = vmin.xlane.f32.xlu0 %v4404
    %v4406 = vpop.xlane.xlu0 %4405
    %vm4407 = vcmp.eq.f32.partialorder %v4404, %v4406
    %v4408 = vsel %vm4407, %v4403, inf
    %4409 = vmin.xlane.f32.xlu0 %v4408
    %v4410 = vpop.xlane.xlu0 %4409
    %v4411 = vcvt.f32.s32 %v4410
    %v4412 = vcvt.f32.s32 %v4406
    %v4413 = vshll.u32 %v4412, 16
    %v4414 = vadd.s32 %v4413, %v4411
    %v4415 = vlaneseq
    %v4416 = vshrl.u32 %v4415, 7
    %v4417 = vsub.s32 %v3394, %v4416
    %v4418 = vrot.slane %v4399, %v4417
    %v4419 = vlaneseq
    %v4420 = vshrl.u32 %v4419, 7
    %v4421 = vsub.s32 %v3394, %v4420
    %v4422 = vrot.slane %v4414, %v4421
    %v4423 = vsel %vm3486, %v4422, %v4418
    %s4424 = scalar_lea.vmem [#allocation5], 22
    %4425 = vst.msk [vmem:[%s4424] sm:$0x3] %vm3489, %v4423
    %v4426 = vlaneseq
    %v4427 = vshrl.u32 %v4426, 7
    %v4428 = vsub.s32 6, %v4427
    %v4429 = vrot.slane %v3377, %v4428
    %4431 = vbcast.lane.b32.xlu0 %v4429, 256
    %v4432 = vpop.permute.xlu0 %4431
    %v4433 = vlaneseq
    %v4434 = vshrl.u32 %v4433, 7
    %v4435 = vsub.s32 7, %v4434
    %v4436 = vrot.slane %v3377, %v4435
    %4438 = vbcast.lane.b32.xlu0 %v4436, 256
    %v4439 = vpop.permute.xlu0 %4438
    %v4442 = vadd.f32 %v4377, %v4432
    %v4443 = vadd.f32 %v4380, %v4439
    %4446 = vset.pattern.permute.xlu0 0
    %4447 = vperm.xlu0 %4446, %v4442
    %v4448 = vpop.permute.xlu0 %4447
    %4449 = vset.pattern.permute.xlu0 0
    %4450 = vperm.xlu0 %4449, %v4443
    %v4451 = vpop.permute.xlu0 %4450
    %v4452 = vlaneseq
    %v4453 = vshrl.u32 %v4452, 7
    %v4454 = vsub.s32 %v3394, %v4453
    %v4455 = vrot.slane %v4448, %v4454
    %v4456 = vlaneseq
    %v4457 = vshrl.u32 %v4456, 7
    %v4458 = vsub.s32 %v3394, %v4457
    %v4459 = vrot.slane %v4451, %v4458
    %v4460 = vsel %vm3526, %v4455, %v4455
    %v4461 = vsel %vm3528, %v4455, %v4460
    %v4462 = vsel %vm3526, %v4459, %v4459
    %v4463 = vsel %vm3528, %v4459, %v4462
    %v4466 = vadd.f32 %v3391, %v4461
    %v4467 = vadd.f32 %v3391, %v4463
    %v4468 = vsel %vm3437, %v4466, -inf
    %4469 = vmax.xlane.f32.xlu0 %v4468
    %v4470 = vpop.xlane.xlu0 %4469
    %v4471 = vsel %vm3437, %v4467, -inf
    %4472 = vmax.xlane.f32.xlu0 %v4471
    %v4473 = vpop.xlane.xlu0 %4472
    %vm4474 = vcmp.eq.f32.partialorder %v4466, %v4470
    %vm4475 = vcmp.eq.f32.partialorder %v4467, %v4473
    %v4476 = vsel %vm4474, %v3394, 4
    %v4477 = vsel %vm4475, %v3394, 4
    %v4478 = vsel %vm3437, %v4476, 2147483647
    %v4479 = vand.u32 %v4478, 65535
    %v4480 = vshra.s32 %v4478, 16
    %v4481 = vcvt.s32.f32 %v4479
    %v4482 = vcvt.s32.f32 %v4480
    %4483 = vmin.xlane.f32.xlu0 %v4482
    %v4484 = vpop.xlane.xlu0 %4483
    %vm4485 = vcmp.eq.f32.partialorder %v4482, %v4484
    %v4486 = vsel %vm4485, %v4481, inf
    %4487 = vmin.xlane.f32.xlu0 %v4486
    %v4488 = vpop.xlane.xlu0 %4487
    %v4489 = vcvt.f32.s32 %v4488
    %v4490 = vcvt.f32.s32 %v4484
    %v4491 = vshll.u32 %v4490, 16
    %v4492 = vadd.s32 %v4491, %v4489
    %v4493 = vsel %vm3437, %v4477, 2147483647
    %v4494 = vand.u32 %v4493, 65535
    %v4495 = vshra.s32 %v4493, 16
    %v4496 = vcvt.s32.f32 %v4494
    %v4497 = vcvt.s32.f32 %v4495
    %4498 = vmin.xlane.f32.xlu0 %v4497
    %v4499 = vpop.xlane.xlu0 %4498
    %vm4500 = vcmp.eq.f32.partialorder %v4497, %v4499
    %v4501 = vsel %vm4500, %v4496, inf
    %4502 = vmin.xlane.f32.xlu0 %v4501
    %v4503 = vpop.xlane.xlu0 %4502
    %v4504 = vcvt.f32.s32 %v4503
    %v4505 = vcvt.f32.s32 %v4499
    %v4506 = vshll.u32 %v4505, 16
    %v4507 = vadd.s32 %v4506, %v4504
    %v4508 = vlaneseq
    %v4509 = vshrl.u32 %v4508, 7
    %v4510 = vsub.s32 %v3394, %v4509
    %v4511 = vrot.slane %v4492, %v4510
    %v4512 = vlaneseq
    %v4513 = vshrl.u32 %v4512, 7
    %v4514 = vsub.s32 %v3394, %v4513
    %v4515 = vrot.slane %v4507, %v4514
    %v4516 = vsel %vm3486, %v4515, %v4511
    %s4517 = scalar_lea.vmem [#allocation5], 24
    %4518 = vst.msk [vmem:[%s4517] sm:$0x3] %vm3489, %v4516
    %v4520 = vlaneseq
    %v4521 = vshrl.u32 %v4520, 7
    %v4522 = vsub.s32 0, %v4521
    %v4523 = vrot.slane %v3382, %v4522
    %4525 = vbcast.lane.b32.xlu0 %v4523, 256
    %v4526 = vpop.permute.xlu0 %4525
    %v4527 = vlaneseq
    %v4528 = vshrl.u32 %v4527, 7
    %v4529 = vsub.s32 1, %v4528
    %v4530 = vrot.slane %v3382, %v4529
    %4532 = vbcast.lane.b32.xlu0 %v4530, 256
    %v4533 = vpop.permute.xlu0 %4532
    %v4536 = vadd.f32 %v4470, %v4526
    %v4537 = vadd.f32 %v4473, %v4533
    %4540 = vset.pattern.permute.xlu0 0
    %4541 = vperm.xlu0 %4540, %v4536
    %v4542 = vpop.permute.xlu0 %4541
    %4543 = vset.pattern.permute.xlu0 0
    %4544 = vperm.xlu0 %4543, %v4537
    %v4545 = vpop.permute.xlu0 %4544
    %v4546 = vlaneseq
    %v4547 = vshrl.u32 %v4546, 7
    %v4548 = vsub.s32 %v3394, %v4547
    %v4549 = vrot.slane %v4542, %v4548
    %v4550 = vlaneseq
    %v4551 = vshrl.u32 %v4550, 7
    %v4552 = vsub.s32 %v3394, %v4551
    %v4553 = vrot.slane %v4545, %v4552
    %v4554 = vsel %vm3526, %v4549, %v4549
    %v4555 = vsel %vm3528, %v4549, %v4554
    %v4556 = vsel %vm3526, %v4553, %v4553
    %v4557 = vsel %vm3528, %v4553, %v4556
    %v4560 = vadd.f32 %v3391, %v4555
    %v4561 = vadd.f32 %v3391, %v4557
    %v4562 = vsel %vm3437, %v4560, -inf
    %4563 = vmax.xlane.f32.xlu0 %v4562
    %v4564 = vpop.xlane.xlu0 %4563
    %v4565 = vsel %vm3437, %v4561, -inf
    %4566 = vmax.xlane.f32.xlu0 %v4565
    %v4567 = vpop.xlane.xlu0 %4566
    %vm4568 = vcmp.eq.f32.partialorder %v4560, %v4564
    %vm4569 = vcmp.eq.f32.partialorder %v4561, %v4567
    %v4570 = vsel %vm4568, %v3394, 4
    %v4571 = vsel %vm4569, %v3394, 4
    %v4572 = vsel %vm3437, %v4570, 2147483647
    %v4573 = vand.u32 %v4572, 65535
    %v4574 = vshra.s32 %v4572, 16
    %v4575 = vcvt.s32.f32 %v4573
    %v4576 = vcvt.s32.f32 %v4574
    %4577 = vmin.xlane.f32.xlu0 %v4576
    %v4578 = vpop.xlane.xlu0 %4577
    %vm4579 = vcmp.eq.f32.partialorder %v4576, %v4578
    %v4580 = vsel %vm4579, %v4575, inf
    %4581 = vmin.xlane.f32.xlu0 %v4580
    %v4582 = vpop.xlane.xlu0 %4581
    %v4583 = vcvt.f32.s32 %v4582
    %v4584 = vcvt.f32.s32 %v4578
    %v4585 = vshll.u32 %v4584, 16
    %v4586 = vadd.s32 %v4585, %v4583
    %v4587 = vsel %vm3437, %v4571, 2147483647
    %v4588 = vand.u32 %v4587, 65535
    %v4589 = vshra.s32 %v4587, 16
    %v4590 = vcvt.s32.f32 %v4588
    %v4591 = vcvt.s32.f32 %v4589
    %4592 = vmin.xlane.f32.xlu0 %v4591
    %v4593 = vpop.xlane.xlu0 %4592
    %vm4594 = vcmp.eq.f32.partialorder %v4591, %v4593
    %v4595 = vsel %vm4594, %v4590, inf
    %4596 = vmin.xlane.f32.xlu0 %v4595
    %v4597 = vpop.xlane.xlu0 %4596
    %v4598 = vcvt.f32.s32 %v4597
    %v4599 = vcvt.f32.s32 %v4593
    %v4600 = vshll.u32 %v4599, 16
    %v4601 = vadd.s32 %v4600, %v4598
    %v4602 = vlaneseq
    %v4603 = vshrl.u32 %v4602, 7
    %v4604 = vsub.s32 %v3394, %v4603
    %v4605 = vrot.slane %v4586, %v4604
    %v4606 = vlaneseq
    %v4607 = vshrl.u32 %v4606, 7
    %v4608 = vsub.s32 %v3394, %v4607
    %v4609 = vrot.slane %v4601, %v4608
    %v4610 = vsel %vm3486, %v4609, %v4605
    %s4611 = scalar_lea.vmem [#allocation5], 26
    %4612 = vst.msk [vmem:[%s4611] sm:$0x3] %vm3489, %v4610
    %v4613 = vlaneseq
    %v4614 = vshrl.u32 %v4613, 7
    %v4615 = vsub.s32 2, %v4614
    %v4616 = vrot.slane %v3382, %v4615
    %4618 = vbcast.lane.b32.xlu0 %v4616, 256
    %v4619 = vpop.permute.xlu0 %4618
    %v4620 = vlaneseq
    %v4621 = vshrl.u32 %v4620, 7
    %v4622 = vsub.s32 3, %v4621
    %v4623 = vrot.slane %v3382, %v4622
    %4625 = vbcast.lane.b32.xlu0 %v4623, 256
    %v4626 = vpop.permute.xlu0 %4625
    %v4629 = vadd.f32 %v4564, %v4619
    %v4630 = vadd.f32 %v4567, %v4626
    %4633 = vset.pattern.permute.xlu0 0
    %4634 = vperm.xlu0 %4633, %v4629
    %v4635 = vpop.permute.xlu0 %4634
    %4636 = vset.pattern.permute.xlu0 0
    %4637 = vperm.xlu0 %4636, %v4630
    %v4638 = vpop.permute.xlu0 %4637
    %v4639 = vlaneseq
    %v4640 = vshrl.u32 %v4639, 7
    %v4641 = vsub.s32 %v3394, %v4640
    %v4642 = vrot.slane %v4635, %v4641
    %v4643 = vlaneseq
    %v4644 = vshrl.u32 %v4643, 7
    %v4645 = vsub.s32 %v3394, %v4644
    %v4646 = vrot.slane %v4638, %v4645
    %v4647 = vsel %vm3526, %v4642, %v4642
    %v4648 = vsel %vm3528, %v4642, %v4647
    %v4649 = vsel %vm3526, %v4646, %v4646
    %v4650 = vsel %vm3528, %v4646, %v4649
    %v4653 = vadd.f32 %v3391, %v4648
    %v4654 = vadd.f32 %v3391, %v4650
    %v4655 = vsel %vm3437, %v4653, -inf
    %4656 = vmax.xlane.f32.xlu0 %v4655
    %v4657 = vpop.xlane.xlu0 %4656
    %v4658 = vsel %vm3437, %v4654, -inf
    %4659 = vmax.xlane.f32.xlu0 %v4658
    %v4660 = vpop.xlane.xlu0 %4659
    %vm4661 = vcmp.eq.f32.partialorder %v4653, %v4657
    %vm4662 = vcmp.eq.f32.partialorder %v4654, %v4660
    %v4663 = vsel %vm4661, %v3394, 4
    %v4664 = vsel %vm4662, %v3394, 4
    %v4665 = vsel %vm3437, %v4663, 2147483647
    %v4666 = vand.u32 %v4665, 65535
    %v4667 = vshra.s32 %v4665, 16
    %v4668 = vcvt.s32.f32 %v4666
    %v4669 = vcvt.s32.f32 %v4667
    %4670 = vmin.xlane.f32.xlu0 %v4669
    %v4671 = vpop.xlane.xlu0 %4670
    %vm4672 = vcmp.eq.f32.partialorder %v4669, %v4671
    %v4673 = vsel %vm4672, %v4668, inf
    %4674 = vmin.xlane.f32.xlu0 %v4673
    %v4675 = vpop.xlane.xlu0 %4674
    %v4676 = vcvt.f32.s32 %v4675
    %v4677 = vcvt.f32.s32 %v4671
    %v4678 = vshll.u32 %v4677, 16
    %v4679 = vadd.s32 %v4678, %v4676
    %v4680 = vsel %vm3437, %v4664, 2147483647
    %v4681 = vand.u32 %v4680, 65535
    %v4682 = vshra.s32 %v4680, 16
    %v4683 = vcvt.s32.f32 %v4681
    %v4684 = vcvt.s32.f32 %v4682
    %4685 = vmin.xlane.f32.xlu0 %v4684
    %v4686 = vpop.xlane.xlu0 %4685
    %vm4687 = vcmp.eq.f32.partialorder %v4684, %v4686
    %v4688 = vsel %vm4687, %v4683, inf
    %4689 = vmin.xlane.f32.xlu0 %v4688
    %v4690 = vpop.xlane.xlu0 %4689
    %v4691 = vcvt.f32.s32 %v4690
    %v4692 = vcvt.f32.s32 %v4686
    %v4693 = vshll.u32 %v4692, 16
    %v4694 = vadd.s32 %v4693, %v4691
    %v4695 = vlaneseq
    %v4696 = vshrl.u32 %v4695, 7
    %v4697 = vsub.s32 %v3394, %v4696
    %v4698 = vrot.slane %v4679, %v4697
    %v4699 = vlaneseq
    %v4700 = vshrl.u32 %v4699, 7
    %v4701 = vsub.s32 %v3394, %v4700
    %v4702 = vrot.slane %v4694, %v4701
    %v4703 = vsel %vm3486, %v4702, %v4698
    %s4704 = scalar_lea.vmem [#allocation5], 28
    %4705 = vst.msk [vmem:[%s4704] sm:$0x3] %vm3489, %v4703
    %v4706 = vlaneseq
    %v4707 = vshrl.u32 %v4706, 7
    %v4708 = vsub.s32 4, %v4707
    %v4709 = vrot.slane %v3382, %v4708
    %4711 = vbcast.lane.b32.xlu0 %v4709, 256
    %v4712 = vpop.permute.xlu0 %4711
    %v4713 = vlaneseq
    %v4714 = vshrl.u32 %v4713, 7
    %v4715 = vsub.s32 5, %v4714
    %v4716 = vrot.slane %v3382, %v4715
    %4718 = vbcast.lane.b32.xlu0 %v4716, 256
    %v4719 = vpop.permute.xlu0 %4718
    %v4722 = vadd.f32 %v4657, %v4712
    %v4723 = vadd.f32 %v4660, %v4719
    %4726 = vset.pattern.permute.xlu0 0
    %4727 = vperm.xlu0 %4726, %v4722
    %v4728 = vpop.permute.xlu0 %4727
    %4729 = vset.pattern.permute.xlu0 0
    %4730 = vperm.xlu0 %4729, %v4723
    %v4731 = vpop.permute.xlu0 %4730
    %v4732 = vlaneseq
    %v4733 = vshrl.u32 %v4732, 7
    %v4734 = vsub.s32 %v3394, %v4733
    %v4735 = vrot.slane %v4728, %v4734
    %v4736 = vlaneseq
    %v4737 = vshrl.u32 %v4736, 7
    %v4738 = vsub.s32 %v3394, %v4737
    %v4739 = vrot.slane %v4731, %v4738
    %v4740 = vsel %vm3526, %v4735, %v4735
    %v4741 = vsel %vm3528, %v4735, %v4740
    %v4742 = vsel %vm3526, %v4739, %v4739
    %v4743 = vsel %vm3528, %v4739, %v4742
    %v4746 = vadd.f32 %v3391, %v4741
    %v4747 = vadd.f32 %v3391, %v4743
    %v4748 = vsel %vm3437, %v4746, -inf
    %4749 = vmax.xlane.f32.xlu0 %v4748
    %v4750 = vpop.xlane.xlu0 %4749
    %v4751 = vsel %vm3437, %v4747, -inf
    %4752 = vmax.xlane.f32.xlu0 %v4751
    %v4753 = vpop.xlane.xlu0 %4752
    %vm4754 = vcmp.eq.f32.partialorder %v4746, %v4750
    %vm4755 = vcmp.eq.f32.partialorder %v4747, %v4753
    %v4756 = vsel %vm4754, %v3394, 4
    %v4757 = vsel %vm4755, %v3394, 4
    %v4758 = vsel %vm3437, %v4756, 2147483647
    %v4759 = vand.u32 %v4758, 65535
    %v4760 = vshra.s32 %v4758, 16
    %v4761 = vcvt.s32.f32 %v4759
    %v4762 = vcvt.s32.f32 %v4760
    %4763 = vmin.xlane.f32.xlu0 %v4762
    %v4764 = vpop.xlane.xlu0 %4763
    %vm4765 = vcmp.eq.f32.partialorder %v4762, %v4764
    %v4766 = vsel %vm4765, %v4761, inf
    %4767 = vmin.xlane.f32.xlu0 %v4766
    %v4768 = vpop.xlane.xlu0 %4767
    %v4769 = vcvt.f32.s32 %v4768
    %v4770 = vcvt.f32.s32 %v4764
    %v4771 = vshll.u32 %v4770, 16
    %v4772 = vadd.s32 %v4771, %v4769
    %v4773 = vsel %vm3437, %v4757, 2147483647
    %v4774 = vand.u32 %v4773, 65535
    %v4775 = vshra.s32 %v4773, 16
    %v4776 = vcvt.s32.f32 %v4774
    %v4777 = vcvt.s32.f32 %v4775
    %4778 = vmin.xlane.f32.xlu0 %v4777
    %v4779 = vpop.xlane.xlu0 %4778
    %vm4780 = vcmp.eq.f32.partialorder %v4777, %v4779
    %v4781 = vsel %vm4780, %v4776, inf
    %4782 = vmin.xlane.f32.xlu0 %v4781
    %v4783 = vpop.xlane.xlu0 %4782
    %v4784 = vcvt.f32.s32 %v4783
    %v4785 = vcvt.f32.s32 %v4779
    %v4786 = vshll.u32 %v4785, 16
    %v4787 = vadd.s32 %v4786, %v4784
    %v4788 = vlaneseq
    %v4789 = vshrl.u32 %v4788, 7
    %v4790 = vsub.s32 %v3394, %v4789
    %v4791 = vrot.slane %v4772, %v4790
    %v4792 = vlaneseq
    %v4793 = vshrl.u32 %v4792, 7
    %v4794 = vsub.s32 %v3394, %v4793
    %v4795 = vrot.slane %v4787, %v4794
    %v4796 = vsel %vm3486, %v4795, %v4791
    %s4797 = scalar_lea.vmem [#allocation5], 30
    %4798 = vst.msk [vmem:[%s4797] sm:$0x3] %vm3489, %v4796
    %v4799 = vlaneseq
    %v4800 = vshrl.u32 %v4799, 7
    %v4801 = vsub.s32 6, %v4800
    %v4802 = vrot.slane %v3382, %v4801
    %4804 = vbcast.lane.b32.xlu0 %v4802, 256
    %v4805 = vpop.permute.xlu0 %4804
    %v4806 = vlaneseq
    %v4807 = vshrl.u32 %v4806, 7
    %v4808 = vsub.s32 7, %v4807
    %v4809 = vrot.slane %v3382, %v4808
    %4811 = vbcast.lane.b32.xlu0 %v4809, 256
    %v4812 = vpop.permute.xlu0 %4811
    %v4815 = vadd.f32 %v4750, %v4805
    %v4816 = vadd.f32 %v4753, %v4812
    %v4818 = vlaneseq
    %v4819 = vshrl.u32 %v4818, 7
    %v4820 = vsub.s32 0, %v4819
    %v4821 = vrot.slane %v3392, %v4820
    %4823 = vbcast.lane.b32.xlu0 %v4821, 256
    %v4824 = vpop.permute.xlu0 %4823
    %v4826 = vadd.f32 %v4815, %v4824
    %v4827 = vadd.f32 %v4816, %v4824
    %4830 = vset.pattern.permute.xlu0 0
    %4831 = vperm.xlu0 %4830, %v4826
    %v4832 = vpop.permute.xlu0 %4831
    %4833 = vset.pattern.permute.xlu0 0
    %4834 = vperm.xlu0 %4833, %v4827
    %v4835 = vpop.permute.xlu0 %4834
    %v4836 = vlaneseq
    %v4837 = vshrl.u32 %v4836, 7
    %v4838 = vsub.s32 %v3394, %v4837
    %v4839 = vrot.slane %v4832, %v4838
    %v4840 = vlaneseq
    %v4841 = vshrl.u32 %v4840, 7
    %v4842 = vsub.s32 %v3394, %v4841
    %v4843 = vrot.slane %v4835, %v4842
    %v4844 = vsel %vm3486, %v4843, %v4839
    %v4846 = vsel %vm3489, %v4844, -inf
    %4847 = vmax.xlane.f32.xlu0 %v4846
    %v4848 = vpop.xlane.xlu0 %4847
    %v4850 = vlaneseq
    %v4851 = vshrl.u32 %v4850, 7
    %v4852 = vsub.s32 0, %v4851
    %v4853 = vrot.slane %v4848, %v4852
    %v4854 = vlaneseq
    %v4855 = vshrl.u32 %v4854, 7
    %v4856 = vsub.s32 1, %v4855
    %v4857 = vrot.slane %v4848, %v4856
    %vm4860 = vcmp.eq.f32.partialorder %v4826, %v4853
    %vm4861 = vcmp.eq.f32.partialorder %v4827, %v4857
    %4863 = vbcast.lane.b32.xlu0 %v3394, 256
    %v4864 = vpop.permute.xlu0 %4863
    %v4865 = vsel %vm4860, %v4864, 4
    %v4866 = vsel %vm4861, %v4864, 4
    %4867 = vset.pattern.permute.xlu0 0
    %4868 = vperm.xlu0 %4867, %v4865
    %v4869 = vpop.permute.xlu0 %4868
    %4870 = vset.pattern.permute.xlu0 0
    %4871 = vperm.xlu0 %4870, %v4866
    %v4872 = vpop.permute.xlu0 %4871
    %v4873 = vlaneseq
    %v4874 = vshrl.u32 %v4873, 7
    %v4875 = vsub.s32 %v3394, %v4874
    %v4876 = vrot.slane %v4869, %v4875
    %v4877 = vlaneseq
    %v4878 = vshrl.u32 %v4877, 7
    %v4879 = vsub.s32 %v3394, %v4878
    %v4880 = vrot.slane %v4872, %v4879
    %v4881 = vsel %vm3486, %v4880, %v4876
    %v4882 = vsel %vm3489, %v4881, 2147483647
    %v4883 = vand.u32 %v4882, 65535
    %v4884 = vshra.s32 %v4882, 16
    %v4885 = vcvt.s32.f32 %v4883
    %v4886 = vcvt.s32.f32 %v4884
    %4887 = vmin.xlane.f32.xlu0 %v4886
    %v4888 = vpop.xlane.xlu0 %4887
    %vm4889 = vcmp.eq.f32.partialorder %v4886, %v4888
    %v4890 = vsel %vm4889, %v4885, inf
    %4891 = vmin.xlane.f32.xlu0 %v4890
    %v4892 = vpop.xlane.xlu0 %4891
    %v4893 = vcvt.f32.s32 %v4892
    %v4894 = vcvt.f32.s32 %v4888
    %v4895 = vshll.u32 %v4894, 16
    %v4896 = vadd.s32 %v4895, %v4893
    %vm4897 = vcmp.eq.s32.totalorder %v3394, %v4896
    %v4898 = vsel %vm4897, 1, 0
    %v4899 = vcvt.s32.f32 %v4898
    %v4900 = vld [vmem:[%s4797] sm:$0x3]
    %v4901 = vsel %vm4897, %v4900, 0
    %v4902 = vsel %vm3489, %v4901, 0
    %v4903 = vand.u32 %v4902, 65535
    %v4904 = vshrl.u32 %v4902, 16
    %v4905 = vcvt.s32.f32 %v4903
    %v4906 = vcvt.s32.f32 %v4904
    %4907 = vadd.xlane.f32.xlu0 %v4905
    %v4908 = vpop.xlane.xlu0 %4907
    %4909 = vadd.xlane.f32.xlu0 %v4906
    %v4910 = vpop.xlane.xlu0 %4909
    %v4911 = vcvt.f32.s32 %v4908
    %v4912 = vcvt.f32.s32 %v4910
    %v4913 = vshll.u32 %v4912, 16
    %v4914 = vadd.s32 %v4913, %v4911
    %vm4915 = vcmp.eq.s32.totalorder %v3394, %v4914
    %v4916 = vsel %vm4915, 1, 0
    %v4917 = vcvt.s32.f32 %v4916
    %v4918 = vadd.f32 %v4899, %v4917
    %v4919 = vld [vmem:[%s4704] sm:$0x3]
    %v4920 = vsel %vm4915, %v4919, 0
    %v4921 = vsel %vm3489, %v4920, 0
    %v4922 = vand.u32 %v4921, 65535
    %v4923 = vshrl.u32 %v4921, 16
    %v4924 = vcvt.s32.f32 %v4922
    %v4925 = vcvt.s32.f32 %v4923
    %4926 = vadd.xlane.f32.xlu0 %v4924
    %v4927 = vpop.xlane.xlu0 %4926
    %4928 = vadd.xlane.f32.xlu0 %v4925
    %v4929 = vpop.xlane.xlu0 %4928
    %v4930 = vcvt.f32.s32 %v4927
    %v4931 = vcvt.f32.s32 %v4929
    %v4932 = vshll.u32 %v4931, 16
    %v4933 = vadd.s32 %v4932, %v4930
    %vm4934 = vcmp.eq.s32.totalorder %v3394, %v4933
    %v4935 = vsel %vm4934, 1, 0
    %v4936 = vcvt.s32.f32 %v4935
    %v4937 = vadd.f32 %v4918, %v4936
    %v4938 = vld [vmem:[%s4611] sm:$0x3]
    %v4939 = vsel %vm4934, %v4938, 0
    %v4940 = vsel %vm3489, %v4939, 0
    %v4941 = vand.u32 %v4940, 65535
    %v4942 = vshrl.u32 %v4940, 16
    %v4943 = vcvt.s32.f32 %v4941
    %v4944 = vcvt.s32.f32 %v4942
    %4945 = vadd.xlane.f32.xlu0 %v4943
    %v4946 = vpop.xlane.xlu0 %4945
    %4947 = vadd.xlane.f32.xlu0 %v4944
    %v4948 = vpop.xlane.xlu0 %4947
    %v4949 = vcvt.f32.s32 %v4946
    %v4950 = vcvt.f32.s32 %v4948
    %v4951 = vshll.u32 %v4950, 16
    %v4952 = vadd.s32 %v4951, %v4949
    %vm4953 = vcmp.eq.s32.totalorder %v3394, %v4952
    %v4954 = vsel %vm4953, 1, 0
    %v4955 = vcvt.s32.f32 %v4954
    %v4956 = vadd.f32 %v4937, %v4955
    %v4957 = vld [vmem:[%s4517] sm:$0x3]
    %v4958 = vsel %vm4953, %v4957, 0
    %v4959 = vsel %vm3489, %v4958, 0
    %v4960 = vand.u32 %v4959, 65535
    %v4961 = vshrl.u32 %v4959, 16
    %v4962 = vcvt.s32.f32 %v4960
    %v4963 = vcvt.s32.f32 %v4961
    %4964 = vadd.xlane.f32.xlu0 %v4962
    %v4965 = vpop.xlane.xlu0 %4964
    %4966 = vadd.xlane.f32.xlu0 %v4963
    %v4967 = vpop.xlane.xlu0 %4966
    %v4968 = vcvt.f32.s32 %v4965
    %v4969 = vcvt.f32.s32 %v4967
    %v4970 = vshll.u32 %v4969, 16
    %v4971 = vadd.s32 %v4970, %v4968
    %vm4972 = vcmp.eq.s32.totalorder %v3394, %v4971
    %v4973 = vsel %vm4972, 1, 0
    %v4974 = vcvt.s32.f32 %v4973
    %v4975 = vadd.f32 %v4956, %v4974
    %v4976 = vld [vmem:[%s4424] sm:$0x3]
    %v4977 = vsel %vm4972, %v4976, 0
    %v4978 = vsel %vm3489, %v4977, 0
    %v4979 = vand.u32 %v4978, 65535
    %v4980 = vshrl.u32 %v4978, 16
    %v4981 = vcvt.s32.f32 %v4979
    %v4982 = vcvt.s32.f32 %v4980
    %4983 = vadd.xlane.f32.xlu0 %v4981
    %v4984 = vpop.xlane.xlu0 %4983
    %4985 = vadd.xlane.f32.xlu0 %v4982
    %v4986 = vpop.xlane.xlu0 %4985
    %v4987 = vcvt.f32.s32 %v4984
    %v4988 = vcvt.f32.s32 %v4986
    %v4989 = vshll.u32 %v4988, 16
    %v4990 = vadd.s32 %v4989, %v4987
    %vm4991 = vcmp.eq.s32.totalorder %v3394, %v4990
    %v4992 = vsel %vm4991, 1, 0
    %v4993 = vcvt.s32.f32 %v4992
    %v4994 = vadd.f32 %v4975, %v4993
    %v4995 = vld [vmem:[%s4331] sm:$0x3]
    %v4996 = vsel %vm4991, %v4995, 0
    %v4997 = vsel %vm3489, %v4996, 0
    %v4998 = vand.u32 %v4997, 65535
    %v4999 = vshrl.u32 %v4997, 16
    %v5000 = vcvt.s32.f32 %v4998
    %v5001 = vcvt.s32.f32 %v4999
    %5002 = vadd.xlane.f32.xlu0 %v5000
    %v5003 = vpop.xlane.xlu0 %5002
    %5004 = vadd.xlane.f32.xlu0 %v5001
    %v5005 = vpop.xlane.xlu0 %5004
    %v5006 = vcvt.f32.s32 %v5003
    %v5007 = vcvt.f32.s32 %v5005
    %v5008 = vshll.u32 %v5007, 16
    %v5009 = vadd.s32 %v5008, %v5006
    %vm5010 = vcmp.eq.s32.totalorder %v3394, %v5009
    %v5011 = vsel %vm5010, 1, 0
    %v5012 = vcvt.s32.f32 %v5011
    %v5013 = vadd.f32 %v4994, %v5012
    %v5014 = vld [vmem:[%s4238] sm:$0x3]
    %v5015 = vsel %vm5010, %v5014, 0
    %v5016 = vsel %vm3489, %v5015, 0
    %v5017 = vand.u32 %v5016, 65535
    %v5018 = vshrl.u32 %v5016, 16
    %v5019 = vcvt.s32.f32 %v5017
    %v5020 = vcvt.s32.f32 %v5018
    %5021 = vadd.xlane.f32.xlu0 %v5019
    %v5022 = vpop.xlane.xlu0 %5021
    %5023 = vadd.xlane.f32.xlu0 %v5020
    %v5024 = vpop.xlane.xlu0 %5023
    %v5025 = vcvt.f32.s32 %v5022
    %v5026 = vcvt.f32.s32 %v5024
    %v5027 = vshll.u32 %v5026, 16
    %v5028 = vadd.s32 %v5027, %v5025
    %vm5029 = vcmp.eq.s32.totalorder %v3394, %v5028
    %v5030 = vsel %vm5029, 1, 0
    %v5031 = vcvt.s32.f32 %v5030
    %v5032 = vadd.f32 %v5013, %v5031
    %v5033 = vld [vmem:[%s4144] sm:$0x3]
    %v5034 = vsel %vm5029, %v5033, 0
    %v5035 = vsel %vm3489, %v5034, 0
    %v5036 = vand.u32 %v5035, 65535
    %v5037 = vshrl.u32 %v5035, 16
    %v5038 = vcvt.s32.f32 %v5036
    %v5039 = vcvt.s32.f32 %v5037
    %5040 = vadd.xlane.f32.xlu0 %v5038
    %v5041 = vpop.xlane.xlu0 %5040
    %5042 = vadd.xlane.f32.xlu0 %v5039
    %v5043 = vpop.xlane.xlu0 %5042
    %v5044 = vcvt.f32.s32 %v5041
    %v5045 = vcvt.f32.s32 %v5043
    %v5046 = vshll.u32 %v5045, 16
    %v5047 = vadd.s32 %v5046, %v5044
    %vm5048 = vcmp.eq.s32.totalorder %v3394, %v5047
    %v5049 = vsel %vm5048, 1, 0
    %v5050 = vcvt.s32.f32 %v5049
    %v5051 = vadd.f32 %v5032, %v5050
    %v5052 = vld [vmem:[%s4051] sm:$0x3]
    %v5053 = vsel %vm5048, %v5052, 0
    %v5054 = vsel %vm3489, %v5053, 0
    %v5055 = vand.u32 %v5054, 65535
    %v5056 = vshrl.u32 %v5054, 16
    %v5057 = vcvt.s32.f32 %v5055
    %v5058 = vcvt.s32.f32 %v5056
    %5059 = vadd.xlane.f32.xlu0 %v5057
    %v5060 = vpop.xlane.xlu0 %5059
    %5061 = vadd.xlane.f32.xlu0 %v5058
    %v5062 = vpop.xlane.xlu0 %5061
    %v5063 = vcvt.f32.s32 %v5060
    %v5064 = vcvt.f32.s32 %v5062
    %v5065 = vshll.u32 %v5064, 16
    %v5066 = vadd.s32 %v5065, %v5063
    %vm5067 = vcmp.eq.s32.totalorder %v3394, %v5066
    %v5068 = vsel %vm5067, 1, 0
    %v5069 = vcvt.s32.f32 %v5068
    %v5070 = vadd.f32 %v5051, %v5069
    %v5071 = vld [vmem:[%s3958] sm:$0x3]
    %v5072 = vsel %vm5067, %v5071, 0
    %v5073 = vsel %vm3489, %v5072, 0
    %v5074 = vand.u32 %v5073, 65535
    %v5075 = vshrl.u32 %v5073, 16
    %v5076 = vcvt.s32.f32 %v5074
    %v5077 = vcvt.s32.f32 %v5075
    %5078 = vadd.xlane.f32.xlu0 %v5076
    %v5079 = vpop.xlane.xlu0 %5078
    %5080 = vadd.xlane.f32.xlu0 %v5077
    %v5081 = vpop.xlane.xlu0 %5080
    %v5082 = vcvt.f32.s32 %v5079
    %v5083 = vcvt.f32.s32 %v5081
    %v5084 = vshll.u32 %v5083, 16
    %v5085 = vadd.s32 %v5084, %v5082
    %vm5086 = vcmp.eq.s32.totalorder %v3394, %v5085
    %v5087 = vsel %vm5086, 1, 0
    %v5088 = vcvt.s32.f32 %v5087
    %v5089 = vadd.f32 %v5070, %v5088
    %v5090 = vld [vmem:[%s3865] sm:$0x3]
    %v5091 = vsel %vm5086, %v5090, 0
    %v5092 = vsel %vm3489, %v5091, 0
    %v5093 = vand.u32 %v5092, 65535
    %v5094 = vshrl.u32 %v5092, 16
    %v5095 = vcvt.s32.f32 %v5093
    %v5096 = vcvt.s32.f32 %v5094
    %5097 = vadd.xlane.f32.xlu0 %v5095
    %v5098 = vpop.xlane.xlu0 %5097
    %5099 = vadd.xlane.f32.xlu0 %v5096
    %v5100 = vpop.xlane.xlu0 %5099
    %v5101 = vcvt.f32.s32 %v5098
    %v5102 = vcvt.f32.s32 %v5100
    %v5103 = vshll.u32 %v5102, 16
    %v5104 = vadd.s32 %v5103, %v5101
    %vm5105 = vcmp.eq.s32.totalorder %v3394, %v5104
    %v5106 = vsel %vm5105, 1, 0
    %v5107 = vcvt.s32.f32 %v5106
    %v5108 = vadd.f32 %v5089, %v5107
    %v5109 = vld [vmem:[%s3771] sm:$0x3]
    %v5110 = vsel %vm5105, %v5109, 0
    %v5111 = vsel %vm3489, %v5110, 0
    %v5112 = vand.u32 %v5111, 65535
    %v5113 = vshrl.u32 %v5111, 16
    %v5114 = vcvt.s32.f32 %v5112
    %v5115 = vcvt.s32.f32 %v5113
    %5116 = vadd.xlane.f32.xlu0 %v5114
    %v5117 = vpop.xlane.xlu0 %5116
    %5118 = vadd.xlane.f32.xlu0 %v5115
    %v5119 = vpop.xlane.xlu0 %5118
    %v5120 = vcvt.f32.s32 %v5117
    %v5121 = vcvt.f32.s32 %v5119
    %v5122 = vshll.u32 %v5121, 16
    %v5123 = vadd.s32 %v5122, %v5120
    %vm5124 = vcmp.eq.s32.totalorder %v3394, %v5123
    %v5125 = vsel %vm5124, 1, 0
    %v5126 = vcvt.s32.f32 %v5125
    %v5127 = vadd.f32 %v5108, %v5126
    %v5128 = vld [vmem:[%s3678] sm:$0x3]
    %v5129 = vsel %vm5124, %v5128, 0
    %v5130 = vsel %vm3489, %v5129, 0
    %v5131 = vand.u32 %v5130, 65535
    %v5132 = vshrl.u32 %v5130, 16
    %v5133 = vcvt.s32.f32 %v5131
    %v5134 = vcvt.s32.f32 %v5132
    %5135 = vadd.xlane.f32.xlu0 %v5133
    %v5136 = vpop.xlane.xlu0 %5135
    %5137 = vadd.xlane.f32.xlu0 %v5134
    %v5138 = vpop.xlane.xlu0 %5137
    %v5139 = vcvt.f32.s32 %v5136
    %v5140 = vcvt.f32.s32 %v5138
    %v5141 = vshll.u32 %v5140, 16
    %v5142 = vadd.s32 %v5141, %v5139
    %vm5143 = vcmp.eq.s32.totalorder %v3394, %v5142
    %v5144 = vsel %vm5143, 1, 0
    %v5145 = vcvt.s32.f32 %v5144
    %v5146 = vadd.f32 %v5127, %v5145
    %v5147 = vld [vmem:[%s3585] sm:$0x3]
    %v5148 = vsel %vm5143, %v5147, 0
    %v5149 = vsel %vm3489, %v5148, 0
    %v5150 = vand.u32 %v5149, 65535
    %v5151 = vshrl.u32 %v5149, 16
    %v5152 = vcvt.s32.f32 %v5150
    %v5153 = vcvt.s32.f32 %v5151
    %5154 = vadd.xlane.f32.xlu0 %v5152
    %v5155 = vpop.xlane.xlu0 %5154
    %5156 = vadd.xlane.f32.xlu0 %v5153
    %v5157 = vpop.xlane.xlu0 %5156
    %v5158 = vcvt.f32.s32 %v5155
    %v5159 = vcvt.f32.s32 %v5157
    %v5160 = vshll.u32 %v5159, 16
    %v5161 = vadd.s32 %v5160, %v5158
    %vm5162 = vcmp.eq.s32.totalorder %v3394, %v5161
    %v5163 = vsel %vm5162, 1, 0
    %v5164 = vcvt.s32.f32 %v5163
    %v5165 = vadd.f32 %v5146, %v5164
    %v5166 = vld [vmem:[%s3488] sm:$0x3]
    %v5167 = vsel %vm5162, %v5166, 0
    %v5168 = vsel %vm3489, %v5167, 0
    %v5169 = vand.u32 %v5168, 65535
    %v5170 = vshrl.u32 %v5168, 16
    %v5171 = vcvt.s32.f32 %v5169
    %v5172 = vcvt.s32.f32 %v5170
    %5173 = vadd.xlane.f32.xlu0 %v5171
    %v5174 = vpop.xlane.xlu0 %5173
    %5175 = vadd.xlane.f32.xlu0 %v5172
    %v5176 = vpop.xlane.xlu0 %5175
    %v5177 = vcvt.f32.s32 %v5174
    %v5178 = vcvt.f32.s32 %v5176
    %v5179 = vshll.u32 %v5178, 16
    %v5180 = vadd.s32 %v5179, %v5177
    %vm5181 = vcmp.eq.s32.totalorder %v3394, %v5180
    %v5182 = vsel %vm5181, 1, 0
    %v5183 = vcvt.s32.f32 %v5182
    %v5184 = vadd.f32 %v5165, %v5183
    %v5185 = vmul.f32 %v5184, 0.0625
    %v5186 = vld [vmem:[%s12] sm:$0xf]
    %v5187 = vld [vmem:[%s13] sm:$0x1]
    %v5189 = vlaneseq
    %v5190 = vshrl.u32 %v5189, 7
    %v5191 = vsub.s32 0, %v5190
    %v5192 = vrot.slane %v5187, %v5191
    %v5195 = vsel %vm3385, %v5185, 0
    %vm5197 = vcmask 1043456
    %v5199 = vsel %vm5197, %v5186, 0
    %5201 = vmatprep.subr.mxu0 0.0
    %5202 = vmatpush1.msra.mxu0 0.0
    %5203 = vmatprep.subr.mxu0 0.0
    %5204 = vmatpush1.msra.mxu0 0.0
    %5205 = vmatprep.subr.mxu0 0.0
    %5206 = vmatpush1.msra.mxu0 0.0
    %5207 = vmatprep.subr.mxu0 0.0
    %5208 = vmatpush1.msra.mxu0 0.0
    %5209 = vmatprep.subr.mxu0 0.0
    %5210 = vmatpush1.msra.mxu0 0.0
    %5211 = vmatprep.subr.mxu0 0.0
    %5212 = vmatpush1.msra.mxu0 0.0
    %5213 = vmatprep.subr.mxu0 0.0
    %5214 = vmatpush1.msra.mxu0 0.0
    %5215 = vmatprep.subr.mxu0 0.0
    %5216 = vmatpush1.msra.mxu0 0.0
    %5217 = vmatprep.subr.mxu0 0.0
    %5218 = vmatpush1.msra.mxu0 0.0
    %5219 = vmatprep.subr.mxu0 0.0
    %5220 = vmatpush1.msra.mxu0 0.0
    %5221 = vmatprep.subr.mxu0 0.0
    %5222 = vmatpush1.msra.mxu0 0.0
    %5223 = vmatprep.subr.mxu0 0.0
    %5224 = vmatpush1.msra.mxu0 0.0
    %5225 = vmatprep.subr.mxu0 0.0
    %5226 = vmatpush1.msra.mxu0 0.0
    %5227 = vmatprep.subr.mxu0 0.0
    %5228 = vmatpush1.msra.mxu0 0.0
    %5229 = vmatprep.subr.mxu0 0.0
    %5230 = vmatpush1.msra.mxu0 0.0
    %5231 = vmatprep.subr.mxu0 0.0
    %5232 = vmatpush1.msra.mxu0 %v5199
    %5233 = vmatprep.subr.mxu0 0.0
    %5234 = vmatpush2.msra.mxu0 0.0
    %5235 = vmatprep.subr.mxu0 0.0
    %5236 = vmatpush2.msra.mxu0 0.0
    %5237 = vmatprep.subr.mxu0 0.0
    %5238 = vmatpush2.msra.mxu0 0.0
    %5239 = vmatprep.subr.mxu0 0.0
    %5240 = vmatpush2.msra.mxu0 0.0
    %5241 = vmatprep.subr.mxu0 0.0
    %5242 = vmatpush2.msra.mxu0 0.0
    %5243 = vmatprep.subr.mxu0 0.0
    %5244 = vmatpush2.msra.mxu0 0.0
    %5245 = vmatprep.subr.mxu0 0.0
    %5246 = vmatpush2.msra.mxu0 0.0
    %5247 = vmatprep.subr.mxu0 0.0
    %5248 = vmatpush2.msra.mxu0 0.0
    %5249 = vmatprep.subr.mxu0 0.0
    %5250 = vmatpush2.msra.mxu0 0.0
    %5251 = vmatprep.subr.mxu0 0.0
    %5252 = vmatpush2.msra.mxu0 0.0
    %5253 = vmatprep.subr.mxu0 0.0
    %5254 = vmatpush2.msra.mxu0 0.0
    %5255 = vmatprep.subr.mxu0 0.0
    %5256 = vmatpush2.msra.mxu0 0.0
    %5257 = vmatprep.subr.mxu0 0.0
    %5258 = vmatpush2.msra.mxu0 0.0
    %5259 = vmatprep.subr.mxu0 0.0
    %5260 = vmatpush2.msra.mxu0 0.0
    %5261 = vmatprep.subr.mxu0 0.0
    %5262 = vmatpush2.msra.mxu0 0.0
    %5263 = vmatprep.subr.mxu0 0.0
    %5264 = vmatpush2.msra.mxu0 0.0
    %5265 = vmatprep.mubr.f32.mxu0 0.0
    %5266 = vmatmul.mubr.f32.gmra.mxu0 %v5195
    %v5267 = vpop.f32.mrf.mxu0
    %v5268 = vadd.f32 %v5192, %v5267
    %v5269 = vpop.f32.mrf.mxu0
    %5270 = vdwg.mxu0
    %5271 = vst.msk [vmem:[#allocation6] sm:$0x3] %vm3489, %v5268
    // Predicated region
    $region66: #{crf_model_forward.1} parent=1 // pred_check
      _
    $region67: #{crf_model_forward.1} parent=1 // pred_check_branch
      %5273 = sbr.rel (0) target = $region69
    $region68: #{crf_model_forward.1} parent=1 // pred_region
      %s5275 = ssub.s32 32, 32
      %5276 = vsyncadd [#allocation7], %s5275
      %s5278 = sshll.u32 [#allocation6], 4
      %s5279 = int_to_ptr.vmem [resolvable:$true] %s5278
      %5281 = dma.vmem_to_hbm [thread:$0]  %s5279, 32, %s16, [#allocation7]
    $region69: #{crf_model_forward.1} parent=1 // pred_fallthru
      _
    // Predicated region
    $region70: #{crf_model_forward.1} parent=1 // pred_check
      _
    $region71: #{crf_model_forward.1} parent=1 // pred_check_branch
      %5283 = sbr.rel (0) target = $region73
    $region72: #{crf_model_forward.1} parent=1 // pred_region
      _
    $region73: #{crf_model_forward.1} parent=1 // pred_fallthru
      _
    // Predicated region
    $region74: #{crf_model_forward.1} parent=1 // pred_check
      _
    $region75: #{crf_model_forward.1} parent=1 // pred_check_branch
      %5285 = sbr.rel (0) target = $region77
    $region76: #{crf_model_forward.1} parent=1 // pred_region
      %5286 = dma.done [#allocation7], 32
    $region77: #{crf_model_forward.1} parent=1 // pred_fallthru
      _
    // Predicated region
    $region78: #{crf_model_forward.1} parent=1 // pred_check
      _
    $region79: #{crf_model_forward.1} parent=1 // pred_check_branch
      %5288 = sbr.rel (0) target = $region81
    $region80: #{crf_model_forward.1} parent=1 // pred_region
      _
    $region81: #{crf_model_forward.1} parent=1 // pred_fallthru
      _
    %5289 = vsyncpa [#allocation7], 1

</llo_original>
